<compile_context>
chip_gen: v5e
topology: v5e:2x2
jax: 0.10.0
libtpu: 0.0.40
codegen_flags: <defaults>
</compile_context>

<pallas_src>
import functools

import numpy as np

import jax
import jax.numpy as jnp
from jax.experimental import pallas as pl
from jax.experimental.pallas import tpu as pltpu

EPS = 1e-5   # torch.nn.LayerNorm default eps
LANE = 128
VMEM_LIMIT = 48 * 1024 * 1024   # safe on v5e/v6e (128 MiB phys) and v7x (64 MiB phys)


def _round_up(x, m):
    return (x + m - 1) // m * m


# ----------------------------- in-kernel math helpers -----------------------------
def _silu(x):
    # exp lowers to the EUP slot; epilogue kept in f32.
    return x * (1.0 / (1.0 + jnp.exp(-x)))


def _masked_layernorm(y, gamma, beta, f_real):
    # Statistics over the first f_real lanes only; y is masked before the mean so the
    # result does not rely on padded lanes being exactly zero.  gamma/beta are zero on
    # padded lanes, so padded output lanes stay exactly zero.
    lane = jax.lax.broadcasted_iota(jnp.int32, y.shape, 1)
    mask = (lane < f_real).astype(y.dtype)
    y = y * mask
    mean = jnp.sum(y, axis=-1, keepdims=True) * (1.0 / f_real)
    d = (y - mean) * mask
    var = jnp.sum(d * d, axis=-1, keepdims=True) * (1.0 / f_real)
    return d * jax.lax.rsqrt(var + EPS) * gamma + beta


# ----------------------------------- kernels --------------------------------------
def _edge_agg_dst_kernel(
        # scalar prefetch (SMEM)
        t2b_ref, tfirst_ref, tlast_ref,
        # streamed per edge tile / per dst block
        xin_ref, dl_lane_ref, dl_col_ref, m2m_ref, invdeg_ref,
        # resident edge-MLP weights
        e_w1_ref, e_wd_ref, e_b1_ref, e_w2_ref, e_b2_ref, e_g_ref, e_be_ref,
        # resident dst-node-MLP weights
        d_w1a_ref, d_w1n_ref, d_b1_ref, d_w2_ref, d_b2_ref, d_g_ref, d_be_ref,
        # output: encoded m2m nodes (one block per dst block)
        out_ref,
        # scratch
        agg_ref, dsth_ref,
        *, fe_out, fd_out, tn):
    i = pl.program_id(0)

    m2m_blk = m2m_ref[...]                                    # (TN, Fdp) f32 (residual path)
    m2m_bf = m2m_blk.astype(jnp.bfloat16)

    # --- first tile of this dst block: zero the accumulator, cache m2m_block @ W_d ---
    @pl.when(tfirst_ref[i] == 1)
    def _():
        agg_ref[...] = jnp.zeros_like(agg_ref)
        dsth_ref[...] = jnp.dot(m2m_bf, e_wd_ref[...],
                                preferred_element_type=jnp.float32).astype(jnp.bfloat16)

    dl = dl_lane_ref[...][0]                                  # (1, TE) int32, -1 for pad edges
    dlc = dl_col_ref[...][0]                                  # (TE, 1) int32
    te = dl.shape[-1]

    # one-hot matrices (padded edges have local dst == -1 -> all-zero rows/cols)
    n_row = jax.lax.broadcasted_iota(jnp.int32, (tn, te), 0)
    scatter = (n_row == dl).astype(jnp.bfloat16)              # (TN, TE): aggregation
    n_col = jax.lax.broadcasted_iota(jnp.int32, (te, tn), 1)
    select = (n_col == dlc).astype(jnp.bfloat16)              # (TE, TN): dst-feature gather

    # --- fused MeshGraphEdgeMLPSum: [e|src] @ W_es + gather(m2m_block @ W_d) ---
    h = jnp.dot(xin_ref[...], e_w1_ref[...], preferred_element_type=jnp.float32)
    h = h + jnp.dot(select, dsth_ref[...], preferred_element_type=jnp.float32)
    h = h + e_b1_ref[...]
    h = _silu(h)
    y = jnp.dot(h.astype(jnp.bfloat16), e_w2_ref[...],
                preferred_element_type=jnp.float32) + e_b2_ref[...]
    ef = _masked_layernorm(y, e_g_ref[...], e_be_ref[...], fe_out)      # (TE, Fep) f32

    # --- block-local segment-sum on the MXU ---
    agg_ref[...] += jnp.dot(scatter, ef.astype(jnp.bfloat16),
                            preferred_element_type=jnp.float32)        # (TN, Fep)

    # --- last tile of this dst block: dst-node MLP + residual, write encoded m2m block ---
    @pl.when(tlast_ref[i] == 1)
    def _():
        a = agg_ref[...] * invdeg_ref[...]                    # (TN,1) f32 degree scale (mean)
        hd = (jnp.dot(a.astype(jnp.bfloat16), d_w1a_ref[...],
                      preferred_element_type=jnp.float32)
              + jnp.dot(m2m_bf, d_w1n_ref[...], preferred_element_type=jnp.float32)
              + d_b1_ref[...])
        hd = _silu(hd)
        yd = jnp.dot(hd.astype(jnp.bfloat16), d_w2_ref[...],
                     preferred_element_type=jnp.float32) + d_b2_ref[...]
        out_ref[...] = m2m_blk + _masked_layernorm(yd, d_g_ref[...], d_be_ref[...], fd_out)


def _src_node_kernel(x_ref, w1_ref, b1_ref, w2_ref, b2_ref, g_ref, be_ref, out_ref,
                     *, f_real):
    x = x_ref[...]                                            # f32 (residual path)
    h = jnp.dot(x.astype(jnp.bfloat16), w1_ref[...],
                preferred_element_type=jnp.float32) + b1_ref[...]
    h = _silu(h)
    y = jnp.dot(h.astype(jnp.bfloat16), w2_ref[...],
                preferred_element_type=jnp.float32) + b2_ref[...]
    out_ref[...] = x + _masked_layernorm(y, g_ref[...], be_ref[...], f_real)


# --------------------------------- padding helpers ---------------------------------
def _pad_w(w, rows, cols, dtype=jnp.bfloat16):
    return jnp.pad(w, ((0, rows - w.shape[0]), (0, cols - w.shape[1]))).astype(dtype)


def _pad_row(v, cols, dtype=jnp.float32):
    return jnp.pad(v, ((0, 0), (0, cols - v.shape[1]))).astype(dtype)


# ------------------------------ static-graph "plan" ---------------------------------
def build_g2m_plan(src_idx, dst_idx, n_dst, aggregation_op="sum",
                   edge_tile=256, dst_block=256):
    """Host-side CSR-style bucketing of edges by destination-node block.

    Built ONCE per static graph (hoisted out of the forward pass)."""
    TE, TN = edge_tile, dst_block
    dst_np = np.asarray(dst_idx, dtype=np.int64)
    src_np = np.asarray(src_idx, dtype=np.int64)
    Ndp = _round_up(max(n_dst, TN), TN)
    n_blocks = Ndp // TN

    order = np.argsort(dst_np, kind="stable")
    blk_of_edge = dst_np[order] // TN

    slot_chunks, ldst_chunks, t2b, tfirst, tlast = [], [], [], [], []
    for b in range(n_blocks):
        sel = order[blk_of_edge == b]
        cnt = int(sel.shape[0])
        ntiles = max(1, -(-cnt // TE))
        padn = ntiles * TE - cnt
        slot_chunks.append(np.concatenate([sel, np.full((padn,), -1, np.int64)]))
        ldst_chunks.append(np.concatenate([dst_np[sel] - b * TN,
                                           np.full((padn,), -1, np.int64)]))
        t2b += [b] * ntiles
        tfirst += [1] + [0] * (ntiles - 1)
        tlast += [0] * (ntiles - 1) + [1]

    slots = np.concatenate(slot_chunks)                       # [E_pad] edge id or -1
    local_dst = np.concatenate(ldst_chunks).astype(np.int32)  # [E_pad] local dst or -1
    num_tiles = slots.shape[0] // TE
    safe = np.maximum(slots, 0)                               # padded slots read edge 0

    if aggregation_op == "sum":
        inv_deg = np.ones((Ndp, 1), np.float32)
    elif aggregation_op == "mean":
        deg = np.maximum(np.bincount(dst_np, minlength=n_dst).astype(np.float32), 1.0)
        inv_deg = np.ones((Ndp, 1), np.float32)
        inv_deg[:n_dst, 0] = 1.0 / deg
    else:
        raise ValueError(f"unsupported aggregation_op: {aggregation_op}")

    return dict(
        TE=TE, TN=TN, Ndp=Ndp, n_blocks=n_blocks, num_tiles=num_tiles, n_dst=n_dst,
        t2b=jnp.asarray(t2b, jnp.int32),
        tfirst=jnp.asarray(tfirst, jnp.int32),
        tlast=jnp.asarray(tlast, jnp.int32),
        edge_slot=jnp.asarray(safe, jnp.int32),
        src_sel=jnp.asarray(src_np[safe], jnp.int32),
        dl_lane=jnp.asarray(local_dst.reshape(num_tiles, 1, TE), jnp.int32),
        dl_col=jnp.asarray(local_dst.reshape(num_tiles, TE, 1), jnp.int32),
        inv_deg=jnp.asarray(inv_deg, jnp.float32),
    )


# ----------------------------------- forward ---------------------------------------
def mesh_graph_encoder_forward(params, plan, grid_embedded, m2m_node_embedded,
                               g2m_edge_embedded, node_tile=256):
    p = params
    f32 = jnp.float32
    Ng, Fs = grid_embedded.shape
    Nd, Fd = m2m_node_embedded.shape
    E, Fe = g2m_edge_embedded.shape
    H = p["e_b1"].shape[1]
    fe_out = p["e_w2"].shape[1]
    fs_out = p["s_w2"].shape[1]
    fd_out = p["d_w2"].shape[1]
    assert fs_out == Fs and fd_out == Fd, "residual connections require output dim == input dim"
    assert plan["n_dst"] == Nd

    # lane-aligned padded dims
    Ksp = _round_up(Fe + Fs, LANE)          # packed [edge | src] contraction dim
    Hp = _round_up(H, LANE)
    Fep = _round_up(fe_out, LANE)
    Fsp = _round_up(Fs, LANE)
    Fdp = _round_up(Fd, LANE)

    TE, TN = plan["TE"], plan["TN"]
    Ndp, num_tiles = plan["Ndp"], plan["num_tiles"]
    TR = node_tile
    Ngp = _round_up(max(Ng, TR), TR)

    # ---- pack [edge | src] features per edge slot (dst features handled in-kernel) ----
    packed = jnp.concatenate(
        [g2m_edge_embedded[plan["edge_slot"]], grid_embedded[plan["src_sel"]]], axis=-1)
    packed = jnp.pad(packed, ((0, 0), (0, Ksp - packed.shape[1]))).astype(jnp.bfloat16)

    m2m_p = jnp.pad(m2m_node_embedded.astype(f32), ((0, Ndp - Nd), (0, Fdp - Fd)))

    # ---- padded / bf16 parameters (weights bf16 on the MXU, biases/LN params f32) ----
    e_w1 = jnp.concatenate([p["e_we"], p["e_ws"]], axis=0)                # [Fe+Fs, H]
    e_w1p, e_wdp = _pad_w(e_w1, Ksp, Hp), _pad_w(p["e_wd"], Fdp, Hp)
    e_b1p = _pad_row(p["e_b1"], Hp)
    e_w2p, e_b2p = _pad_w(p["e_w2"], Hp, Fep), _pad_row(p["e_b2"], Fep)
    e_gp, e_bep = _pad_row(p["e_g"], Fep), _pad_row(p["e_be"], Fep)

    d_w1ap, d_w1np = _pad_w(p["d_w1a"], Fep, Hp), _pad_w(p["d_w1n"], Fdp, Hp)
    d_b1p = _pad_row(p["d_b1"], Hp)
    d_w2p, d_b2p = _pad_w(p["d_w2"], Hp, Fdp), _pad_row(p["d_b2"], Fdp)
    d_gp, d_bep = _pad_row(p["d_g"], Fdp), _pad_row(p["d_be"], Fdp)

    s_w1p, s_b1p = _pad_w(p["s_w1"], Fsp, Hp), _pad_row(p["s_b1"], Hp)
    s_w2p, s_b2p = _pad_w(p["s_w2"], Hp, Fsp), _pad_row(p["s_b2"], Fsp)
    s_gp, s_bep = _pad_row(p["s_g"], Fsp), _pad_row(p["s_be"], Fsp)

    # ---- fused edge MLP + per-block segment-sum + dst-node MLP epilogue ----
    cmap = lambda i, t2b, tf, tl: (0, 0)
    bmap = lambda i, t2b, tf, tl: (t2b[i], 0)
    edge_grid = pltpu.PrefetchScalarGridSpec(
        num_scalar_prefetch=3,
        grid=(num_tiles,),
        in_specs=[
            pl.BlockSpec((TE, Ksp), lambda i, t2b, tf, tl: (i, 0)),       # packed [edge|src]
            pl.BlockSpec((1, 1, TE), lambda i, t2b, tf, tl: (i, 0, 0)),   # local dst (lane)
            pl.BlockSpec((1, TE, 1), lambda i, t2b, tf, tl: (i, 0, 0)),   # local dst (sublane)
            pl.BlockSpec((TN, Fdp), bmap),                                # m2m block (dst)
            pl.BlockSpec((TN, 1), bmap),                                  # 1/deg per dst node
            pl.BlockSpec((Ksp, Hp), cmap),
            pl.BlockSpec((Fdp, Hp), cmap),
            pl.BlockSpec((1, Hp), cmap),
            pl.BlockSpec((Hp, Fep), cmap),
            pl.BlockSpec((1, Fep), cmap),
            pl.BlockSpec((1, Fep), cmap),
            pl.BlockSpec((1, Fep), cmap),
            pl.BlockSpec((Fep, Hp), cmap),
            pl.BlockSpec((Fdp, Hp), cmap),
            pl.BlockSpec((1, Hp), cmap),
            pl.BlockSpec((Hp, Fdp), cmap),
            pl.BlockSpec((1, Fdp), cmap),
            pl.BlockSpec((1, Fdp), cmap),
            pl.BlockSpec((1, Fdp), cmap),
        ],
        out_specs=pl.BlockSpec((TN, Fdp), bmap),
        scratch_shapes=[pltpu.VMEM((TN, Fep), jnp.float32),      # per-block aggregation
                        pltpu.VMEM((TN, Hp), jnp.bfloat16)],     # cached m2m_block @ W_d
    )
    m2m_enc_p = pl.pallas_call(
        functools.partial(_edge_agg_dst_kernel, fe_out=fe_out, fd_out=fd_out, tn=TN),
        grid_spec=edge_grid,
        out_shape=jax.ShapeDtypeStruct((Ndp, Fdp), f32),
        compiler_params=pltpu.CompilerParams(
            dimension_semantics=("arbitrary",), vmem_limit_bytes=VMEM_LIMIT),
    )(plan["t2b"], plan["tfirst"], plan["tlast"],
      packed, plan["dl_lane"], plan["dl_col"], m2m_p, plan["inv_deg"],
      e_w1p, e_wdp, e_b1p, e_w2p, e_b2p, e_gp, e_bep,
      d_w1ap, d_w1np, d_b1p, d_w2p, d_b2p, d_gp, d_bep)

    # ---- src node MLP + residual (row-tiled, weights resident) ----
    c2 = lambda i: (0, 0)
    grid_p = jnp.pad(grid_embedded.astype(f32), ((0, Ngp - Ng), (0, Fsp - Fs)))
    grid_enc_p = pl.pallas_call(
        functools.partial(_src_node_kernel, f_real=fs_out),
        grid=(Ngp // TR,),
        in_specs=[pl.BlockSpec((TR, Fsp), lambda i: (i, 0)),
                  pl.BlockSpec((Fsp, Hp), c2),
                  pl.BlockSpec((1, Hp), c2),
                  pl.BlockSpec((Hp, Fsp), c2),
                  pl.BlockSpec((1, Fsp), c2),
                  pl.BlockSpec((1, Fsp), c2),
                  pl.BlockSpec((1, Fsp), c2)],
        out_specs=pl.BlockSpec((TR, Fsp), lambda i: (i, 0)),
        out_shape=jax.ShapeDtypeStruct((Ngp, Fsp), f32),
        compiler_params=pltpu.CompilerParams(
            dimension_semantics=("parallel",), vmem_limit_bytes=VMEM_LIMIT),
    )(grid_p, s_w1p, s_b1p, s_w2p, s_b2p, s_gp, s_bep)

    return grid_enc_p[:Ng, :Fs], m2m_enc_p[:Nd, :Fd]


# ------------------------------- parameter creation --------------------------------
def _linear(key, fan_in, fan_out):
    kw, kb = jax.random.split(key)
    bound = 1.0 / float(fan_in) ** 0.5
    w = jax.random.uniform(kw, (fan_in, fan_out), jnp.float32, -bound, bound)
    b = jax.random.uniform(kb, (1, fan_out), jnp.float32, -bound, bound)
    return w, b


def make_params(key, fs, fd, fe, fe_out, fs_out, fd_out, hidden):
    ks = jax.random.split(key, 6)
    # edge MLP: first layer over concat(edge, src, dst) -> split into 3 weights
    w1_full, e_b1 = _linear(ks[0], fe + fs + fd, hidden)
    e_we, e_ws, e_wd = w1_full[:fe], w1_full[fe:fe + fs], w1_full[fe + fs:]
    e_w2, e_b2 = _linear(ks[1], hidden, fe_out)
    # src node MLP
    s_w1, s_b1 = _linear(ks[2], fs, hidden)
    s_w2, s_b2 = _linear(ks[3], hidden, fs_out)
    # dst node MLP: input = concat(agg[fe_out], nfeat[fd])
    d_w1, d_b1 = _linear(ks[4], fe_out + fd, hidden)
    d_w1a, d_w1n = d_w1[:fe_out], d_w1[fe_out:]
    d_w2, d_b2 = _linear(ks[5], hidden, fd_out)
    ones = lambda n: jnp.ones((1, n), jnp.float32)
    zeros = lambda n: jnp.zeros((1, n), jnp.float32)
    return dict(
        e_we=e_we, e_ws=e_ws, e_wd=e_wd, e_b1=e_b1, e_w2=e_w2, e_b2=e_b2,
        e_g=ones(fe_out), e_be=zeros(fe_out),
        s_w1=s_w1, s_b1=s_b1, s_w2=s_w2, s_b2=s_b2, s_g=ones(fs_out), s_be=zeros(fs_out),
        d_w1a=d_w1a, d_w1n=d_w1n, d_b1=d_b1, d_w2=d_w2, d_b2=d_b2,
        d_g=ones(fd_out), d_be=zeros(fd_out),
    )


# --------------------------------- pure-JAX reference -------------------------------
def _reference(params, src_idx, dst_idx, n_dst, grid, m2m, efeat, aggregation_op="sum"):
    p = params
    ln = lambda y, g, b: (y - y.mean(-1, keepdims=True)) / jnp.sqrt(
        ((y - y.mean(-1, keepdims=True)) ** 2).mean(-1, keepdims=True) + EPS) * g + b
    silu = lambda x: x * jax.nn.sigmoid(x)
    h = efeat @ p["e_we"] + grid[src_idx] @ p["e_ws"] + m2m[dst_idx] @ p["e_wd"] + p["e_b1"]
    ef = ln(silu(h) @ p["e_w2"] + p["e_b2"], p["e_g"], p["e_be"])
    agg = jax.ops.segment_sum(ef, dst_idx, num_segments=n_dst)
    if aggregation_op == "mean":
        deg = jnp.maximum(jax.ops.segment_sum(jnp.ones_like(dst_idx, jnp.float32),
                                              dst_idx, num_segments=n_dst), 1.0)
        agg = agg / deg[:, None]
    x = jnp.concatenate([agg, m2m], axis=-1)
    d_w1 = jnp.concatenate([p["d_w1a"], p["d_w1n"]], axis=0)
    m2m_enc = m2m + ln(silu(x @ d_w1 + p["d_b1"]) @ p["d_w2"] + p["d_b2"], p["d_g"], p["d_be"])
    grid_enc = grid + ln(silu(grid @ p["s_w1"] + p["s_b1"]) @ p["s_w2"] + p["s_b2"],
                         p["s_g"], p["s_be"])
    return grid_enc, m2m_enc


# -------------------------------------- main ----------------------------------------
if __name__ == "__main__":
    key = jax.random.PRNGKey(0)
    Ng, Nd, E = 32, 16, 96         # grid nodes, mesh nodes, g2m edges (small, synthetic)
    F, H = 32, 32                  # feature dims / hidden dim

    k = jax.random.split(key, 8)
    grid_embedded = jax.random.normal(k[0], (Ng, F), jnp.float32)
    m2m_node_embedded = jax.random.normal(k[1], (Nd, F), jnp.float32)
    g2m_edge_embedded = jax.random.normal(k[2], (E, F), jnp.float32)
    src_idx = jax.random.randint(k[3], (E,), 0, Ng)
    dst_idx = jax.random.randint(k[4], (E,), 0, Nd)

    params = make_params(k[5], fs=F, fd=F, fe=F, fe_out=F, fs_out=F, fd_out=F, hidden=H)

    # static-graph preprocessing (built once, reused across forward calls)
    plan = build_g2m_plan(src_idx, dst_idx, Nd, aggregation_op="sum",
                          edge_tile=256, dst_block=256)

    grid_enc, m2m_enc = mesh_graph_encoder_forward(
        params, plan, grid_embedded, m2m_node_embedded, g2m_edge_embedded, node_tile=256)
    grid_enc = jax.block_until_ready(grid_enc)
    m2m_enc = jax.block_until_ready(m2m_enc)

    ref_grid, ref_m2m = _reference(params, src_idx, dst_idx, Nd,
                                   grid_embedded, m2m_node_embedded, g2m_edge_embedded)
    # bf16 MXU inputs (f32 accumulation / LayerNorm / residual) -> bf16-level tolerance
    assert jnp.allclose(grid_enc, ref_grid, atol=5e-2, rtol=5e-2)
    assert jnp.allclose(m2m_enc, ref_m2m, atol=5e-2, rtol=5e-2)

    print("KERNEL_OK")
</pallas_src>

<mosaic_0001>
module attributes {stable_mosaic.version = 11 : i64} {
  func.func @_edge_agg_dst_kernel(%arg0: i32, %arg1: memref<1xi32, #tpu.memory_space<smem>>, %arg2: memref<1xi32, #tpu.memory_space<smem>>, %arg3: memref<1xi32, #tpu.memory_space<smem>>, %arg4: memref<256x128xbf16, #tpu.memory_space<vmem>>, %arg5: memref<1x1x256xi32, #tpu.memory_space<vmem>>, %arg6: memref<1x256x1xi32, #tpu.memory_space<vmem>>, %arg7: memref<256x128xf32, #tpu.memory_space<vmem>>, %arg8: memref<256x1xf32, #tpu.memory_space<vmem>>, %arg9: memref<128x128xbf16, #tpu.memory_space<vmem>>, %arg10: memref<128x128xbf16, #tpu.memory_space<vmem>>, %arg11: memref<1x128xf32, #tpu.memory_space<vmem>>, %arg12: memref<128x128xbf16, #tpu.memory_space<vmem>>, %arg13: memref<1x128xf32, #tpu.memory_space<vmem>>, %arg14: memref<1x128xf32, #tpu.memory_space<vmem>>, %arg15: memref<1x128xf32, #tpu.memory_space<vmem>>, %arg16: memref<128x128xbf16, #tpu.memory_space<vmem>>, %arg17: memref<128x128xbf16, #tpu.memory_space<vmem>>, %arg18: memref<1x128xf32, #tpu.memory_space<vmem>>, %arg19: memref<128x128xbf16, #tpu.memory_space<vmem>>, %arg20: memref<1x128xf32, #tpu.memory_space<vmem>>, %arg21: memref<1x128xf32, #tpu.memory_space<vmem>>, %arg22: memref<1x128xf32, #tpu.memory_space<vmem>>, %arg23: memref<256x128xf32, #tpu.memory_space<vmem>>, %arg24: memref<256x128xf32, #tpu.memory_space<vmem>>, %arg25: memref<256x128xbf16, #tpu.memory_space<vmem>>) attributes {dimension_semantics = [#tpu.dimension_semantics<arbitrary>], iteration_bounds = array<i64: 1>, scalar_prefetch = 3 : i64, scratch_operands = 2 : i64, tpu.core_type = #tpu.core_type<tc>, window_params = [{transform_indices = @transform_0, window_bounds = array<i64: 256, 128>}, {transform_indices = @transform_1, window_bounds = array<i64: 1, 1, 256>}, {transform_indices = @transform_2, window_bounds = array<i64: 1, 256, 1>}, {transform_indices = @transform_3, window_bounds = array<i64: 256, 128>}, {transform_indices = @transform_4, window_bounds = array<i64: 256, 1>}, {pipeline_mode = #tpu.pipeline_mode<synchronous>, transform_indices = @transform_5, window_bounds = array<i64: 128, 128>}, {pipeline_mode = #tpu.pipeline_mode<synchronous>, transform_indices = @transform_6, window_bounds = array<i64: 128, 128>}, {pipeline_mode = #tpu.pipeline_mode<synchronous>, transform_indices = @transform_7, window_bounds = array<i64: 1, 128>}, {pipeline_mode = #tpu.pipeline_mode<synchronous>, transform_indices = @transform_8, window_bounds = array<i64: 128, 128>}, {pipeline_mode = #tpu.pipeline_mode<synchronous>, transform_indices = @transform_9, window_bounds = array<i64: 1, 128>}, {pipeline_mode = #tpu.pipeline_mode<synchronous>, transform_indices = @transform_10, window_bounds = array<i64: 1, 128>}, {pipeline_mode = #tpu.pipeline_mode<synchronous>, transform_indices = @transform_11, window_bounds = array<i64: 1, 128>}, {pipeline_mode = #tpu.pipeline_mode<synchronous>, transform_indices = @transform_12, window_bounds = array<i64: 128, 128>}, {pipeline_mode = #tpu.pipeline_mode<synchronous>, transform_indices = @transform_13, window_bounds = array<i64: 128, 128>}, {pipeline_mode = #tpu.pipeline_mode<synchronous>, transform_indices = @transform_14, window_bounds = array<i64: 1, 128>}, {pipeline_mode = #tpu.pipeline_mode<synchronous>, transform_indices = @transform_15, window_bounds = array<i64: 128, 128>}, {pipeline_mode = #tpu.pipeline_mode<synchronous>, transform_indices = @transform_16, window_bounds = array<i64: 1, 128>}, {pipeline_mode = #tpu.pipeline_mode<synchronous>, transform_indices = @transform_17, window_bounds = array<i64: 1, 128>}, {pipeline_mode = #tpu.pipeline_mode<synchronous>, transform_indices = @transform_18, window_bounds = array<i64: 1, 128>}, {transform_indices = @transform_19, window_bounds = array<i64: 256, 128>}]} {
    %c0 = arith.constant 0 : index
    %c0_0 = arith.constant 0 : index
    %0 = vector.load %arg7[%c0, %c0_0] : memref<256x128xf32, #tpu.memory_space<vmem>>, vector<256x128xf32>
    %1 = arith.truncf %0 : vector<256x128xf32> to vector<256x128xbf16>
    %2 = arith.index_cast %arg0 : i32 to index
    %3 = memref.load %arg2[%2] : memref<1xi32, #tpu.memory_space<smem>>
    %c1_i32 = arith.constant 1 : i32
    %4 = arith.cmpi eq, %3, %c1_i32 : i32
    %5 = arith.extui %4 : i1 to i32
    %c0_i32 = arith.constant 0 : i32
    %6 = arith.cmpi ne, %5, %c0_i32 : i32
    scf.if %6 {
      %cst_40 = arith.constant 0.000000e+00 : f32
      %85 = vector.broadcast %cst_40 : f32 to vector<256x128xf32>
      %c0_41 = arith.constant 0 : index
      %c0_42 = arith.constant 0 : index
      %86 = vector.load %arg24[%c0_41, %c0_42] : memref<256x128xf32, #tpu.memory_space<vmem>>, vector<256x128xf32>
      tpu.vector_store %arg24[%c0_41, %c0_42], %85 {strides = array<i32>} : memref<256x128xf32, #tpu.memory_space<vmem>>, vector<256x128xf32>,
      %c0_43 = arith.constant 0 : index
      %c0_44 = arith.constant 0 : index
      %87 = vector.load %arg10[%c0_43, %c0_44] : memref<128x128xbf16, #tpu.memory_space<vmem>>, vector<128x128xbf16>
      %cst_45 = arith.constant dense<0.000000e+00> : vector<256x128xf32>
      %88 = tpu.matmul %1, %87, %cst_45 {dimension_numbers = #tpu.dot_dimension_numbers<[1], [0], [0], [1], [0, 0, 1, 1], [], []>} : vector<256x128xbf16>, vector<128x128xbf16>, vector<256x128xf32> -> vector<256x128xf32>
      %89 = arith.truncf %88 : vector<256x128xf32> to vector<256x128xbf16>
      %c0_46 = arith.constant 0 : index
      %c0_47 = arith.constant 0 : index
      %90 = vector.load %arg25[%c0_46, %c0_47] : memref<256x128xbf16, #tpu.memory_space<vmem>>, vector<256x128xbf16>
      tpu.vector_store %arg25[%c0_46, %c0_47], %89 {strides = array<i32>} : memref<256x128xbf16, #tpu.memory_space<vmem>>, vector<256x128xbf16>,
    } else {
    }
    %c0_1 = arith.constant 0 : index
    %c0_2 = arith.constant 0 : index
    %c0_3 = arith.constant 0 : index
    %7 = vector.load %arg5[%c0_1, %c0_2, %c0_3] : memref<1x1x256xi32, #tpu.memory_space<vmem>>, vector<1x1x256xi32>
    %8 = vector.shape_cast %7 : vector<1x1x256xi32> to vector<1x256xi32>
    %c0_4 = arith.constant 0 : index
    %c0_5 = arith.constant 0 : index
    %c0_6 = arith.constant 0 : index
    %9 = vector.load %arg6[%c0_4, %c0_5, %c0_6] : memref<1x256x1xi32, #tpu.memory_space<vmem>>, vector<1x256x1xi32>
    %10 = vector.shape_cast %9 : vector<1x256x1xi32> to vector<256x1xi32>
    %11 = tpu.iota {dimensions = array<i32: 0>} : vector<256x256xi32>
    %12 = vector.broadcast %8 : vector<1x256xi32> to vector<256x256xi32>
    %13 = arith.cmpi eq, %11, %12 : vector<256x256xi32>
    %14 = arith.extui %13 : vector<256x256xi1> to vector<256x256xi32>
    %15 = arith.sitofp %14 : vector<256x256xi32> to vector<256x256xf32>
    %16 = arith.truncf %15 : vector<256x256xf32> to vector<256x256xbf16>
    %17 = tpu.iota {dimensions = array<i32: 1>} : vector<256x256xi32>
    %18 = vector.broadcast %10 : vector<256x1xi32> to vector<256x256xi32>
    %19 = arith.cmpi eq, %17, %18 : vector<256x256xi32>
    %20 = arith.extui %19 : vector<256x256xi1> to vector<256x256xi32>
    %21 = arith.sitofp %20 : vector<256x256xi32> to vector<256x256xf32>
    %22 = arith.truncf %21 : vector<256x256xf32> to vector<256x256xbf16>
    %c0_7 = arith.constant 0 : index
    %c0_8 = arith.constant 0 : index
    %23 = vector.load %arg4[%c0_7, %c0_8] : memref<256x128xbf16, #tpu.memory_space<vmem>>, vector<256x128xbf16>
    %c0_9 = arith.constant 0 : index
    %c0_10 = arith.constant 0 : index
    %24 = vector.load %arg9[%c0_9, %c0_10] : memref<128x128xbf16, #tpu.memory_space<vmem>>, vector<128x128xbf16>
    %cst = arith.constant dense<0.000000e+00> : vector<256x128xf32>
    %25 = tpu.matmul %23, %24, %cst {dimension_numbers = #tpu.dot_dimension_numbers<[1], [0], [0], [1], [0, 0, 1, 1], [], []>} : vector<256x128xbf16>, vector<128x128xbf16>, vector<256x128xf32> -> vector<256x128xf32>
    %c0_11 = arith.constant 0 : index
    %c0_12 = arith.constant 0 : index
    %26 = vector.load %arg25[%c0_11, %c0_12] : memref<256x128xbf16, #tpu.memory_space<vmem>>, vector<256x128xbf16>
    %cst_13 = arith.constant dense<0.000000e+00> : vector<256x128xf32>
    %27 = tpu.matmul %22, %26, %cst_13 {dimension_numbers = #tpu.dot_dimension_numbers<[1], [0], [0], [1], [0, 0, 1, 1], [], []>} : vector<256x256xbf16>, vector<256x128xbf16>, vector<256x128xf32> -> vector<256x128xf32>
    %28 = arith.addf %25, %27 : vector<256x128xf32>
    %c0_14 = arith.constant 0 : index
    %c0_15 = arith.constant 0 : index
    %29 = vector.load %arg11[%c0_14, %c0_15] : memref<1x128xf32, #tpu.memory_space<vmem>>, vector<1x128xf32>
    %30 = vector.broadcast %29 : vector<1x128xf32> to vector<256x128xf32>
    %31 = arith.addf %28, %30 : vector<256x128xf32>
    %cst_16 = arith.constant 0.000000e+00 : f32
    %32 = vector.broadcast %cst_16 : f32 to vector<256x128xf32>
    %33 = arith.subf %32, %31 : vector<256x128xf32>
    %34 = math.exp %33 : vector<256x128xf32>
    %cst_17 = arith.constant 1.000000e+00 : f32
    %35 = vector.broadcast %cst_17 : f32 to vector<256x128xf32>
    %36 = arith.addf %35, %34 : vector<256x128xf32>
    %cst_18 = arith.constant 1.000000e+00 : f32
    %37 = vector.broadcast %cst_18 : f32 to vector<256x128xf32>
    %38 = arith.divf %37, %36 : vector<256x128xf32>
    %39 = arith.mulf %31, %38 : vector<256x128xf32>
    %40 = arith.truncf %39 : vector<256x128xf32> to vector<256x128xbf16>
    %c0_19 = arith.constant 0 : index
    %c0_20 = arith.constant 0 : index
    %41 = vector.load %arg12[%c0_19, %c0_20] : memref<128x128xbf16, #tpu.memory_space<vmem>>, vector<128x128xbf16>
    %cst_21 = arith.constant dense<0.000000e+00> : vector<256x128xf32>
    %42 = tpu.matmul %40, %41, %cst_21 {dimension_numbers = #tpu.dot_dimension_numbers<[1], [0], [0], [1], [0, 0, 1, 1], [], []>} : vector<256x128xbf16>, vector<128x128xbf16>, vector<256x128xf32> -> vector<256x128xf32>
    %c0_22 = arith.constant 0 : index
    %c0_23 = arith.constant 0 : index
    %43 = vector.load %arg13[%c0_22, %c0_23] : memref<1x128xf32, #tpu.memory_space<vmem>>, vector<1x128xf32>
    %44 = vector.broadcast %43 : vector<1x128xf32> to vector<256x128xf32>
    %45 = arith.addf %42, %44 : vector<256x128xf32>
    %c0_24 = arith.constant 0 : index
    %c0_25 = arith.constant 0 : index
    %46 = vector.load %arg14[%c0_24, %c0_25] : memref<1x128xf32, #tpu.memory_space<vmem>>, vector<1x128xf32>
    %c0_26 = arith.constant 0 : index
    %c0_27 = arith.constant 0 : index
    %47 = vector.load %arg15[%c0_26, %c0_27] : memref<1x128xf32, #tpu.memory_space<vmem>>, vector<1x128xf32>
    %48 = tpu.iota {dimensions = array<i32: 1>} : vector<256x128xi32>
    %c32_i32 = arith.constant 32 : i32
    %49 = vector.broadcast %c32_i32 : i32 to vector<256x128xi32>
    %50 = arith.cmpi slt, %48, %49 : vector<256x128xi32>
    %51 = arith.extui %50 : vector<256x128xi1> to vector<256x128xi32>
    %52 = arith.sitofp %51 : vector<256x128xi32> to vector<256x128xf32>
    %53 = arith.mulf %45, %52 : vector<256x128xf32>
    %cst_28 = arith.constant dense<0.000000e+00> : vector<256xf32>
    %54 = vector.multi_reduction <add>, %53, %cst_28 [1] : vector<256x128xf32> to vector<256xf32>
    %55 = vector.shape_cast %54 : vector<256xf32> to vector<256x1xf32>
    %cst_29 = arith.constant 3.125000e-02 : f32
    %56 = vector.broadcast %cst_29 : f32 to vector<256x1xf32>
    %57 = arith.mulf %55, %56 : vector<256x1xf32>
    %58 = vector.broadcast %57 : vector<256x1xf32> to vector<256x128xf32>
    %59 = arith.subf %53, %58 : vector<256x128xf32>
    %60 = arith.mulf %59, %52 : vector<256x128xf32>
    %61 = arith.mulf %60, %60 : vector<256x128xf32>
    %cst_30 = arith.constant dense<0.000000e+00> : vector<256xf32>
    %62 = vector.multi_reduction <add>, %61, %cst_30 [1] : vector<256x128xf32> to vector<256xf32>
    %63 = vector.shape_cast %62 : vector<256xf32> to vector<256x1xf32>
    %cst_31 = arith.constant 3.125000e-02 : f32
    %64 = vector.broadcast %cst_31 : f32 to vector<256x1xf32>
    %65 = arith.mulf %63, %64 : vector<256x1xf32>
    %cst_32 = arith.constant 9.99999974E-6 : f32
    %66 = vector.broadcast %cst_32 : f32 to vector<256x1xf32>
    %67 = arith.addf %65, %66 : vector<256x1xf32>
    %68 = math.rsqrt %67 : vector<256x1xf32>
    %69 = vector.broadcast %68 : vector<256x1xf32> to vector<256x128xf32>
    %70 = arith.mulf %60, %69 : vector<256x128xf32>
    %71 = vector.broadcast %46 : vector<1x128xf32> to vector<256x128xf32>
    %72 = arith.mulf %70, %71 : vector<256x128xf32>
    %73 = vector.broadcast %47 : vector<1x128xf32> to vector<256x128xf32>
    %74 = arith.addf %72, %73 : vector<256x128xf32>
    %c0_33 = arith.constant 0 : index
    %c0_34 = arith.constant 0 : index
    %75 = vector.load %arg24[%c0_33, %c0_34] : memref<256x128xf32, #tpu.memory_space<vmem>>, vector<256x128xf32>
    %76 = arith.truncf %74 : vector<256x128xf32> to vector<256x128xbf16>
    %cst_35 = arith.constant dense<0.000000e+00> : vector<256x128xf32>
    %77 = tpu.matmul %16, %76, %cst_35 {dimension_numbers = #tpu.dot_dimension_numbers<[1], [0], [0], [1], [0, 0, 1, 1], [], []>} : vector<256x256xbf16>, vector<256x128xbf16>, vector<256x128xf32> -> vector<256x128xf32>
    %78 = arith.addf %75, %77 : vector<256x128xf32>
    %c0_36 = arith.constant 0 : index
    %c0_37 = arith.constant 0 : index
    %79 = vector.load %arg24[%c0_36, %c0_37] : memref<256x128xf32, #tpu.memory_space<vmem>>, vector<256x128xf32>
    tpu.vector_store %arg24[%c0_36, %c0_37], %78 {strides = array<i32>} : memref<256x128xf32, #tpu.memory_space<vmem>>, vector<256x128xf32>,
    %80 = arith.index_cast %arg0 : i32 to index
    %81 = memref.load %arg3[%80] : memref<1xi32, #tpu.memory_space<smem>>
    %c1_i32_38 = arith.constant 1 : i32
    %82 = arith.cmpi eq, %81, %c1_i32_38 : i32
    %83 = arith.extui %82 : i1 to i32
    %c0_i32_39 = arith.constant 0 : i32
    %84 = arith.cmpi ne, %83, %c0_i32_39 : i32
    scf.if %84 {
      %c0_40 = arith.constant 0 : index
      %c0_41 = arith.constant 0 : index
      %85 = vector.load %arg24[%c0_40, %c0_41] : memref<256x128xf32, #tpu.memory_space<vmem>>, vector<256x128xf32>
      %c0_42 = arith.constant 0 : index
      %c0_43 = arith.constant 0 : index
      %86 = vector.load %arg8[%c0_42, %c0_43] : memref<256x1xf32, #tpu.memory_space<vmem>>, vector<256x1xf32>
      %87 = vector.broadcast %86 : vector<256x1xf32> to vector<256x128xf32>
      %88 = arith.mulf %85, %87 : vector<256x128xf32>
      %89 = arith.truncf %88 : vector<256x128xf32> to vector<256x128xbf16>
      %c0_44 = arith.constant 0 : index
      %c0_45 = arith.constant 0 : index
      %90 = vector.load %arg16[%c0_44, %c0_45] : memref<128x128xbf16, #tpu.memory_space<vmem>>, vector<128x128xbf16>
      %cst_46 = arith.constant dense<0.000000e+00> : vector<256x128xf32>
      %91 = tpu.matmul %89, %90, %cst_46 {dimension_numbers = #tpu.dot_dimension_numbers<[1], [0], [0], [1], [0, 0, 1, 1], [], []>} : vector<256x128xbf16>, vector<128x128xbf16>, vector<256x128xf32> -> vector<256x128xf32>
      %c0_47 = arith.constant 0 : index
      %c0_48 = arith.constant 0 : index
      %92 = vector.load %arg17[%c0_47, %c0_48] : memref<128x128xbf16, #tpu.memory_space<vmem>>, vector<128x128xbf16>
      %cst_49 = arith.constant dense<0.000000e+00> : vector<256x128xf32>
      %93 = tpu.matmul %1, %92, %cst_49 {dimension_numbers = #tpu.dot_dimension_numbers<[1], [0], [0], [1], [0, 0, 1, 1], [], []>} : vector<256x128xbf16>, vector<128x128xbf16>, vector<256x128xf32> -> vector<256x128xf32>
      %94 = arith.addf %91, %93 : vector<256x128xf32>
      %c0_50 = arith.constant 0 : index
      %c0_51 = arith.constant 0 : index
      %95 = vector.load %arg18[%c0_50, %c0_51] : memref<1x128xf32, #tpu.memory_space<vmem>>, vector<1x128xf32>
      %96 = vector.broadcast %95 : vector<1x128xf32> to vector<256x128xf32>
      %97 = arith.addf %94, %96 : vector<256x128xf32>
      %cst_52 = arith.constant 0.000000e+00 : f32
      %98 = vector.broadcast %cst_52 : f32 to vector<256x128xf32>
      %99 = arith.subf %98, %97 : vector<256x128xf32>
      %100 = math.exp %99 : vector<256x128xf32>
      %cst_53 = arith.constant 1.000000e+00 : f32
      %101 = vector.broadcast %cst_53 : f32 to vector<256x128xf32>
      %102 = arith.addf %101, %100 : vector<256x128xf32>
      %cst_54 = arith.constant 1.000000e+00 : f32
      %103 = vector.broadcast %cst_54 : f32 to vector<256x128xf32>
      %104 = arith.divf %103, %102 : vector<256x128xf32>
      %105 = arith.mulf %97, %104 : vector<256x128xf32>
      %106 = arith.truncf %105 : vector<256x128xf32> to vector<256x128xbf16>
      %c0_55 = arith.constant 0 : index
      %c0_56 = arith.constant 0 : index
      %107 = vector.load %arg19[%c0_55, %c0_56] : memref<128x128xbf16, #tpu.memory_space<vmem>>, vector<128x128xbf16>
      %cst_57 = arith.constant dense<0.000000e+00> : vector<256x128xf32>
      %108 = tpu.matmul %106, %107, %cst_57 {dimension_numbers = #tpu.dot_dimension_numbers<[1], [0], [0], [1], [0, 0, 1, 1], [], []>} : vector<256x128xbf16>, vector<128x128xbf16>, vector<256x128xf32> -> vector<256x128xf32>
      %c0_58 = arith.constant 0 : index
      %c0_59 = arith.constant 0 : index
      %109 = vector.load %arg20[%c0_58, %c0_59] : memref<1x128xf32, #tpu.memory_space<vmem>>, vector<1x128xf32>
      %110 = vector.broadcast %109 : vector<1x128xf32> to vector<256x128xf32>
      %111 = arith.addf %108, %110 : vector<256x128xf32>
      %c0_60 = arith.constant 0 : index
      %c0_61 = arith.constant 0 : index
      %112 = vector.load %arg21[%c0_60, %c0_61] : memref<1x128xf32, #tpu.memory_space<vmem>>, vector<1x128xf32>
      %c0_62 = arith.constant 0 : index
      %c0_63 = arith.constant 0 : index
      %113 = vector.load %arg22[%c0_62, %c0_63] : memref<1x128xf32, #tpu.memory_space<vmem>>, vector<1x128xf32>
      %114 = tpu.iota {dimensions = array<i32: 1>} : vector<256x128xi32>
      %c32_i32_64 = arith.constant 32 : i32
      %115 = vector.broadcast %c32_i32_64 : i32 to vector<256x128xi32>
      %116 = arith.cmpi slt, %114, %115 : vector<256x128xi32>
      %117 = arith.extui %116 : vector<256x128xi1> to vector<256x128xi32>
      %118 = arith.sitofp %117 : vector<256x128xi32> to vector<256x128xf32>
      %119 = arith.mulf %111, %118 : vector<256x128xf32>
      %cst_65 = arith.constant dense<0.000000e+00> : vector<256xf32>
      %120 = vector.multi_reduction <add>, %119, %cst_65 [1] : vector<256x128xf32> to vector<256xf32>
      %121 = vector.shape_cast %120 : vector<256xf32> to vector<256x1xf32>
      %cst_66 = arith.constant 3.125000e-02 : f32
      %122 = vector.broadcast %cst_66 : f32 to vector<256x1xf32>
      %123 = arith.mulf %121, %122 : vector<256x1xf32>
      %124 = vector.broadcast %123 : vector<256x1xf32> to vector<256x128xf32>
      %125 = arith.subf %119, %124 : vector<256x128xf32>
      %126 = arith.mulf %125, %118 : vector<256x128xf32>
      %127 = arith.mulf %126, %126 : vector<256x128xf32>
      %cst_67 = arith.constant dense<0.000000e+00> : vector<256xf32>
      %128 = vector.multi_reduction <add>, %127, %cst_67 [1] : vector<256x128xf32> to vector<256xf32>
      %129 = vector.shape_cast %128 : vector<256xf32> to vector<256x1xf32>
      %cst_68 = arith.constant 3.125000e-02 : f32
      %130 = vector.broadcast %cst_68 : f32 to vector<256x1xf32>
      %131 = arith.mulf %129, %130 : vector<256x1xf32>
      %cst_69 = arith.constant 9.99999974E-6 : f32
      %132 = vector.broadcast %cst_69 : f32 to vector<256x1xf32>
      %133 = arith.addf %131, %132 : vector<256x1xf32>
      %134 = math.rsqrt %133 : vector<256x1xf32>
      %135 = vector.broadcast %134 : vector<256x1xf32> to vector<256x128xf32>
      %136 = arith.mulf %126, %135 : vector<256x128xf32>
      %137 = vector.broadcast %112 : vector<1x128xf32> to vector<256x128xf32>
      %138 = arith.mulf %136, %137 : vector<256x128xf32>
      %139 = vector.broadcast %113 : vector<1x128xf32> to vector<256x128xf32>
      %140 = arith.addf %138, %139 : vector<256x128xf32>
      %141 = arith.addf %0, %140 : vector<256x128xf32>
      %c0_70 = arith.constant 0 : index
      %c0_71 = arith.constant 0 : index
      %142 = vector.load %arg23[%c0_70, %c0_71] : memref<256x128xf32, #tpu.memory_space<vmem>>, vector<256x128xf32>
      tpu.vector_store %arg23[%c0_70, %c0_71], %141 {strides = array<i32>} : memref<256x128xf32, #tpu.memory_space<vmem>>, vector<256x128xf32>,
    } else {
    }
    return
  }
  func.func @transform_0(%arg0: i32, %arg1: memref<1xi32, #tpu.memory_space<smem>>, %arg2: memref<1xi32, #tpu.memory_space<smem>>, %arg3: memref<1xi32, #tpu.memory_space<smem>>) -> (i32, i32) {
    %c0_i32 = arith.constant 0 : i32
    %c0_i32_0 = arith.constant 0 : i32
    return %arg0, %c0_i32 : i32, i32
  }
  func.func @transform_1(%arg0: i32, %arg1: memref<1xi32, #tpu.memory_space<smem>>, %arg2: memref<1xi32, #tpu.memory_space<smem>>, %arg3: memref<1xi32, #tpu.memory_space<smem>>) -> (i32, i32, i32) {
    %c0_i32 = arith.constant 0 : i32
    %c0_i32_0 = arith.constant 0 : i32
    %c0_i32_1 = arith.constant 0 : i32
    return %arg0, %c0_i32, %c0_i32_0 : i32, i32, i32
  }
  func.func @transform_2(%arg0: i32, %arg1: memref<1xi32, #tpu.memory_space<smem>>, %arg2: memref<1xi32, #tpu.memory_space<smem>>, %arg3: memref<1xi32, #tpu.memory_space<smem>>) -> (i32, i32, i32) {
    %c0_i32 = arith.constant 0 : i32
    %c0_i32_0 = arith.constant 0 : i32
    %c0_i32_1 = arith.constant 0 : i32
    return %arg0, %c0_i32, %c0_i32_0 : i32, i32, i32
  }
  func.func @transform_3(%arg0: i32, %arg1: memref<1xi32, #tpu.memory_space<smem>>, %arg2: memref<1xi32, #tpu.memory_space<smem>>, %arg3: memref<1xi32, #tpu.memory_space<smem>>) -> (i32, i32) {
    %0 = arith.index_cast %arg0 : i32 to index
    %1 = memref.load %arg1[%0] : memref<1xi32, #tpu.memory_space<smem>>
    %c0_i32 = arith.constant 0 : i32
    %c0_i32_0 = arith.constant 0 : i32
    return %1, %c0_i32 : i32, i32
  }
  func.func @transform_4(%arg0: i32, %arg1: memref<1xi32, #tpu.memory_space<smem>>, %arg2: memref<1xi32, #tpu.memory_space<smem>>, %arg3: memref<1xi32, #tpu.memory_space<smem>>) -> (i32, i32) {
    %0 = arith.index_cast %arg0 : i32 to index
    %1 = memref.load %arg1[%0] : memref<1xi32, #tpu.memory_space<smem>>
    %c0_i32 = arith.constant 0 : i32
    %c0_i32_0 = arith.constant 0 : i32
    return %1, %c0_i32 : i32, i32
  }
  func.func @transform_5(%arg0: i32, %arg1: memref<1xi32, #tpu.memory_space<smem>>, %arg2: memref<1xi32, #tpu.memory_space<smem>>, %arg3: memref<1xi32, #tpu.memory_space<smem>>) -> (i32, i32) {
    %c0_i32 = arith.constant 0 : i32
    %c0_i32_0 = arith.constant 0 : i32
    %c0_i32_1 = arith.constant 0 : i32
    return %c0_i32, %c0_i32_0 : i32, i32
  }
  func.func @transform_6(%arg0: i32, %arg1: memref<1xi32, #tpu.memory_space<smem>>, %arg2: memref<1xi32, #tpu.memory_space<smem>>, %arg3: memref<1xi32, #tpu.memory_space<smem>>) -> (i32, i32) {
    %c0_i32 = arith.constant 0 : i32
    %c0_i32_0 = arith.constant 0 : i32
    %c0_i32_1 = arith.constant 0 : i32
    return %c0_i32, %c0_i32_0 : i32, i32
  }
  func.func @transform_7(%arg0: i32, %arg1: memref<1xi32, #tpu.memory_space<smem>>, %arg2: memref<1xi32, #tpu.memory_space<smem>>, %arg3: memref<1xi32, #tpu.memory_space<smem>>) -> (i32, i32) {
    %c0_i32 = arith.constant 0 : i32
    %c0_i32_0 = arith.constant 0 : i32
    %c0_i32_1 = arith.constant 0 : i32
    return %c0_i32, %c0_i32_0 : i32, i32
  }
  func.func @transform_8(%arg0: i32, %arg1: memref<1xi32, #tpu.memory_space<smem>>, %arg2: memref<1xi32, #tpu.memory_space<smem>>, %arg3: memref<1xi32, #tpu.memory_space<smem>>) -> (i32, i32) {
    %c0_i32 = arith.constant 0 : i32
    %c0_i32_0 = arith.constant 0 : i32
    %c0_i32_1 = arith.constant 0 : i32
    return %c0_i32, %c0_i32_0 : i32, i32
  }
  func.func @transform_9(%arg0: i32, %arg1: memref<1xi32, #tpu.memory_space<smem>>, %arg2: memref<1xi32, #tpu.memory_space<smem>>, %arg3: memref<1xi32, #tpu.memory_space<smem>>) -> (i32, i32) {
    %c0_i32 = arith.constant 0 : i32
    %c0_i32_0 = arith.constant 0 : i32
    %c0_i32_1 = arith.constant 0 : i32
    return %c0_i32, %c0_i32_0 : i32, i32
  }
  func.func @transform_10(%arg0: i32, %arg1: memref<1xi32, #tpu.memory_space<smem>>, %arg2: memref<1xi32, #tpu.memory_space<smem>>, %arg3: memref<1xi32, #tpu.memory_space<smem>>) -> (i32, i32) {
    %c0_i32 = arith.constant 0 : i32
    %c0_i32_0 = arith.constant 0 : i32
    %c0_i32_1 = arith.constant 0 : i32
    return %c0_i32, %c0_i32_0 : i32, i32
  }
  func.func @transform_11(%arg0: i32, %arg1: memref<1xi32, #tpu.memory_space<smem>>, %arg2: memref<1xi32, #tpu.memory_space<smem>>, %arg3: memref<1xi32, #tpu.memory_space<smem>>) -> (i32, i32) {
    %c0_i32 = arith.constant 0 : i32
    %c0_i32_0 = arith.constant 0 : i32
    %c0_i32_1 = arith.constant 0 : i32
    return %c0_i32, %c0_i32_0 : i32, i32
  }
  func.func @transform_12(%arg0: i32, %arg1: memref<1xi32, #tpu.memory_space<smem>>, %arg2: memref<1xi32, #tpu.memory_space<smem>>, %arg3: memref<1xi32, #tpu.memory_space<smem>>) -> (i32, i32) {
    %c0_i32 = arith.constant 0 : i32
    %c0_i32_0 = arith.constant 0 : i32
    %c0_i32_1 = arith.constant 0 : i32
    return %c0_i32, %c0_i32_0 : i32, i32
  }
  func.func @transform_13(%arg0: i32, %arg1: memref<1xi32, #tpu.memory_space<smem>>, %arg2: memref<1xi32, #tpu.memory_space<smem>>, %arg3: memref<1xi32, #tpu.memory_space<smem>>) -> (i32, i32) {
    %c0_i32 = arith.constant 0 : i32
    %c0_i32_0 = arith.constant 0 : i32
    %c0_i32_1 = arith.constant 0 : i32
    return %c0_i32, %c0_i32_0 : i32, i32
  }
  func.func @transform_14(%arg0: i32, %arg1: memref<1xi32, #tpu.memory_space<smem>>, %arg2: memref<1xi32, #tpu.memory_space<smem>>, %arg3: memref<1xi32, #tpu.memory_space<smem>>) -> (i32, i32) {
    %c0_i32 = arith.constant 0 : i32
    %c0_i32_0 = arith.constant 0 : i32
    %c0_i32_1 = arith.constant 0 : i32
    return %c0_i32, %c0_i32_0 : i32, i32
  }
  func.func @transform_15(%arg0: i32, %arg1: memref<1xi32, #tpu.memory_space<smem>>, %arg2: memref<1xi32, #tpu.memory_space<smem>>, %arg3: memref<1xi32, #tpu.memory_space<smem>>) -> (i32, i32) {
    %c0_i32 = arith.constant 0 : i32
    %c0_i32_0 = arith.constant 0 : i32
    %c0_i32_1 = arith.constant 0 : i32
    return %c0_i32, %c0_i32_0 : i32, i32
  }
  func.func @transform_16(%arg0: i32, %arg1: memref<1xi32, #tpu.memory_space<smem>>, %arg2: memref<1xi32, #tpu.memory_space<smem>>, %arg3: memref<1xi32, #tpu.memory_space<smem>>) -> (i32, i32) {
    %c0_i32 = arith.constant 0 : i32
    %c0_i32_0 = arith.constant 0 : i32
    %c0_i32_1 = arith.constant 0 : i32
    return %c0_i32, %c0_i32_0 : i32, i32
  }
  func.func @transform_17(%arg0: i32, %arg1: memref<1xi32, #tpu.memory_space<smem>>, %arg2: memref<1xi32, #tpu.memory_space<smem>>, %arg3: memref<1xi32, #tpu.memory_space<smem>>) -> (i32, i32) {
    %c0_i32 = arith.constant 0 : i32
    %c0_i32_0 = arith.constant 0 : i32
    %c0_i32_1 = arith.constant 0 : i32
    return %c0_i32, %c0_i32_0 : i32, i32
  }
  func.func @transform_18(%arg0: i32, %arg1: memref<1xi32, #tpu.memory_space<smem>>, %arg2: memref<1xi32, #tpu.memory_space<smem>>, %arg3: memref<1xi32, #tpu.memory_space<smem>>) -> (i32, i32) {
    %c0_i32 = arith.constant 0 : i32
    %c0_i32_0 = arith.constant 0 : i32
    %c0_i32_1 = arith.constant 0 : i32
    return %c0_i32, %c0_i32_0 : i32, i32
  }
  func.func @transform_19(%arg0: i32, %arg1: memref<1xi32, #tpu.memory_space<smem>>, %arg2: memref<1xi32, #tpu.memory_space<smem>>, %arg3: memref<1xi32, #tpu.memory_space<smem>>) -> (i32, i32) {
    %0 = arith.index_cast %arg0 : i32 to index
    %1 = memref.load %arg1[%0] : memref<1xi32, #tpu.memory_space<smem>>
    %c0_i32 = arith.constant 0 : i32
    %c0_i32_0 = arith.constant 0 : i32
    return %1, %c0_i32 : i32, i32
  }
}

</mosaic_0001>

<llo_original>
// kernel: tpu_custom_call.1
$region0: #{tpu_custom_call.1}
  #allocation0 [shape = 'u32[]', space=smem, size = 0x4, offset = 0x4, fixed_abs, tag = 'smem constant byte address 0x4 - core index']
  #allocation1 [shape = 'u32[72,128]{1,0:T(1,128)}', space=vmem, size = 0x9000, scoped, tag = 'internal scratch']
  #allocation2 [shape = 'f32[256,128]{1,0:T(8,128)}', space=vmem, size = 0x20000, scoped, tag = 'scratch operand']
  #allocation3 [shape = 'bf16[256,128]{1,0:T(8,128)(2,1)}', space=vmem, size = 0x10000, scoped, tag = 'scratch operand']
  #allocation4 [shape = 's32[1]{0}', space=sflag, size = 0x4, scoped, tag = 'scoped memory for tpu_custom_call.1']
  #allocation5 [shape = 's32[1]{0:T(128)S(6)}', space=smem, size = 0x200, scoped, tag = 'prefetched SMEM operand 0']
  #allocation6 [shape = 's32[1]{0:T(128)S(6)}', space=smem, size = 0x200, scoped, tag = 'prefetched SMEM operand 1']
  #allocation7 [shape = 's32[1]{0:T(128)S(6)}', space=smem, size = 0x200, scoped, tag = 'prefetched SMEM operand 2']
  %s0 = inlined_call_operand.<no memory space> [shape: s32[1], index: 0, kind: input, shape index: {}]
  %s1 = inlined_call_operand.<no memory space> [shape: s32[1], index: 1, kind: input, shape index: {}]
  %s2 = inlined_call_operand.<no memory space> [shape: s32[1], index: 2, kind: input, shape index: {}]
  %s3 = inlined_call_operand.vmem [shape: bf16[256,128], index: 3, kind: input, shape index: {}]
  %s4 = inlined_call_operand.vmem [shape: s32[1,1,256], index: 4, kind: input, shape index: {}]
  %s5 = inlined_call_operand.vmem [shape: s32[1,256,1], index: 5, kind: input, shape index: {}]
  %s6 = inlined_call_operand.vmem [shape: f32[256,128], index: 6, kind: input, shape index: {}]
  %s7 = inlined_call_operand.vmem [shape: f32[256,1], index: 7, kind: input, shape index: {}]
  %s8 = inlined_call_operand.vmem [shape: bf16[128,128], index: 8, kind: input, shape index: {}]
  %s9 = inlined_call_operand.vmem [shape: bf16[128,128], index: 9, kind: input, shape index: {}]
  %s10 = inlined_call_operand.vmem [shape: f32[1,128], index: 10, kind: input, shape index: {}]
  %s11 = inlined_call_operand.hbm [shape: bf16[128,128], index: 11, kind: input, shape index: {}]
  %s12 = inlined_call_operand.vmem [shape: f32[1,128], index: 12, kind: input, shape index: {}]
  %s13 = inlined_call_operand.vmem [shape: f32[1,128], index: 13, kind: input, shape index: {}]
  %s14 = inlined_call_operand.vmem [shape: f32[1,128], index: 14, kind: input, shape index: {}]
  %s15 = inlined_call_operand.hbm [shape: bf16[128,128], index: 15, kind: input, shape index: {}]
  %s16 = inlined_call_operand.hbm [shape: bf16[128,128], index: 16, kind: input, shape index: {}]
  %s17 = inlined_call_operand.vmem [shape: f32[1,128], index: 17, kind: input, shape index: {}]
  %s18 = inlined_call_operand.hbm [shape: bf16[128,128], index: 18, kind: input, shape index: {}]
  %s19 = inlined_call_operand.vmem [shape: f32[1,128], index: 19, kind: input, shape index: {}]
  %s20 = inlined_call_operand.vmem [shape: f32[1,128], index: 20, kind: input, shape index: {}]
  %s21 = inlined_call_operand.vmem [shape: f32[1,128], index: 21, kind: input, shape index: {}]
  %s22 = inlined_call_operand.hbm [shape: f32[256,128], index: 22, kind: output, shape index: {}]
  %s23 = sld [smem:[#allocation0]]
  $region110: #{tpu_custom_call.1} parent=0
    _
  %s25 = ssub.s32 1, %s23
  %s26 = scalar_select 0, %s25, %s23
  %27 = sst [smem:[#allocation5]] %s0
  %28 = sst [smem:[#allocation6]] %s1
  %29 = sst [smem:[#allocation7]] %s2
  $region1: #{tpu_custom_call.1} parent=0
    #allocation8 [shape = 'u8[32768]{0}', space=vmem, size = 0x8000, scoped, tag = 'input window, operand 11, single buffered']
    #allocation9 [shape = 's32[1]{0}', space=sflag, size = 0x4, scoped, tag = 'scoped memory for tpu_custom_call.1']
    #allocation10 [shape = 's32[1]{0}', space=sflag, size = 0x4, scoped, tag = 'scoped memory for tpu_custom_call.1']
    #allocation11 [shape = 'u8[32768]{0}', space=vmem, size = 0x8000, scoped, tag = 'input window, operand 15, single buffered']
    #allocation12 [shape = 's32[1]{0}', space=sflag, size = 0x4, scoped, tag = 'scoped memory for tpu_custom_call.1']
    #allocation13 [shape = 'u8[32768]{0}', space=vmem, size = 0x8000, scoped, tag = 'input window, operand 16, single buffered']
    #allocation14 [shape = 'u8[32768]{0}', space=vmem, size = 0x8000, scoped, tag = 'input window, operand 18, single buffered']
    #allocation15 [shape = 's32[1]{0}', space=sflag, size = 0x4, scoped, tag = 'scoped memory for tpu_custom_call.1']
    #allocation16 [shape = 'u8[131072]{0}', space=vmem, size = 0x20000, scoped, tag = 'output window, operand 0, single buffered']
    %30 = vsyncpa [#allocation9], 0
    %31 = vsyncpa [#allocation12], 0
    %32 = vsyncpa [#allocation15], 0
    %33 = vsyncpa [#allocation10], 0
    // Predicated region
    $region2: #{tpu_custom_call.1} parent=1 // pred_check
      _
    $region3: #{tpu_custom_call.1} parent=1 // pred_check_branch
      %35 = sbr.rel (0) target = $region5
    $region4: #{tpu_custom_call.1} parent=1 // pred_region
      _
    $region5: #{tpu_custom_call.1} parent=1 // pred_fallthru
      _
    // Predicated region
    $region6: #{tpu_custom_call.1} parent=1 // pred_check
      _
    $region7: #{tpu_custom_call.1} parent=1 // pred_check_branch
      %37 = sbr.rel (0) target = $region9
    $region8: #{tpu_custom_call.1} parent=1 // pred_region
      _
    $region9: #{tpu_custom_call.1} parent=1 // pred_fallthru
      _
    // Predicated region
    $region10: #{tpu_custom_call.1} parent=1 // pred_check
      _
    $region11: #{tpu_custom_call.1} parent=1 // pred_check_branch
      %39 = sbr.rel (0) target = $region13
    $region12: #{tpu_custom_call.1} parent=1 // pred_region
      _
    $region13: #{tpu_custom_call.1} parent=1 // pred_fallthru
      _
    // Predicated region
    $region14: #{tpu_custom_call.1} parent=1 // pred_check
      _
    $region15: #{tpu_custom_call.1} parent=1 // pred_check_branch
      %41 = sbr.rel (0) target = $region17
    $region16: #{tpu_custom_call.1} parent=1 // pred_region
      %s42 = sld [smem:[#allocation5]]
      %s43 = smul.u32 32, %s42
      %p44 = scmp.lt.s32.totalorder %s43, 31
      %s45 = scalar_select %p44, %s43, 31
      %s46 = smul.addr %s45, 8
      %s47 = scalar_lea.vmem %s6, %s46
      %s48 = sld [smem:[#allocation5]]
      %s49 = smul.u32 32, %s48
    $region17: #{tpu_custom_call.1} parent=1 // pred_fallthru
      _
    // Predicated region
    $region18: #{tpu_custom_call.1} parent=1 // pred_check
      _
    $region19: #{tpu_custom_call.1} parent=1 // pred_check_branch
      %51 = sbr.rel (0) target = $region21
    $region20: #{tpu_custom_call.1} parent=1 // pred_region
      %s52 = sld [smem:[#allocation5]]
      %s53 = smul.u32 32, %s52
      %p54 = scmp.lt.s32.totalorder %s53, 31
      %s55 = scalar_select %p54, %s53, 31
      %s56 = smul.addr %s55, 8
      %s57 = scalar_lea.vmem %s7, %s56
      %s58 = sld [smem:[#allocation5]]
      %s59 = smul.u32 32, %s58
    $region21: #{tpu_custom_call.1} parent=1 // pred_fallthru
      _
    // Predicated region
    $region22: #{tpu_custom_call.1} parent=1 // pred_check
      _
    $region23: #{tpu_custom_call.1} parent=1 // pred_check_branch
      %61 = sbr.rel (0) target = $region25
    $region24: #{tpu_custom_call.1} parent=1 // pred_region
      _
    $region25: #{tpu_custom_call.1} parent=1 // pred_fallthru
      _
    // Predicated region
    $region26: #{tpu_custom_call.1} parent=1 // pred_check
      _
    $region27: #{tpu_custom_call.1} parent=1 // pred_check_branch
      %63 = sbr.rel (0) target = $region29
    $region28: #{tpu_custom_call.1} parent=1 // pred_region
      _
    $region29: #{tpu_custom_call.1} parent=1 // pred_fallthru
      _
    // Predicated region
    $region30: #{tpu_custom_call.1} parent=1 // pred_check
      _
    $region31: #{tpu_custom_call.1} parent=1 // pred_check_branch
      %65 = sbr.rel (0) target = $region33
    $region32: #{tpu_custom_call.1} parent=1 // pred_region
      _
    $region33: #{tpu_custom_call.1} parent=1 // pred_fallthru
      _
    // Predicated region
    $region34: #{tpu_custom_call.1} parent=1 // pred_check
      _
    $region35: #{tpu_custom_call.1} parent=1 // pred_check_branch
      %67 = sbr.rel (0) target = $region37
    $region36: #{tpu_custom_call.1} parent=1 // pred_region
      %69 = vsyncadd [#allocation9], 0
      %s70 = sshll.u32 %s11, 4
      %s71 = int_to_ptr.hbm [resolvable:$true] %s70
      %s72 = sshll.u32 [#allocation8], 4
      %s73 = int_to_ptr.vmem [resolvable:$true] %s72
      %78 = dma.hbm_to_vmem [thread:$0]  %s71, 1024, %s73, [#allocation9], 64, 64, 4
    $region37: #{tpu_custom_call.1} parent=1 // pred_fallthru
      _
    // Predicated region
    $region38: #{tpu_custom_call.1} parent=1 // pred_check
      _
    $region39: #{tpu_custom_call.1} parent=1 // pred_check_branch
      %80 = sbr.rel (0) target = $region41
    $region40: #{tpu_custom_call.1} parent=1 // pred_region
      _
    $region41: #{tpu_custom_call.1} parent=1 // pred_fallthru
      _
    // Predicated region
    $region42: #{tpu_custom_call.1} parent=1 // pred_check
      _
    $region43: #{tpu_custom_call.1} parent=1 // pred_check_branch
      %82 = sbr.rel (0) target = $region45
    $region44: #{tpu_custom_call.1} parent=1 // pred_region
      _
    $region45: #{tpu_custom_call.1} parent=1 // pred_fallthru
      _
    // Predicated region
    $region46: #{tpu_custom_call.1} parent=1 // pred_check
      _
    $region47: #{tpu_custom_call.1} parent=1 // pred_check_branch
      %84 = sbr.rel (0) target = $region49
    $region48: #{tpu_custom_call.1} parent=1 // pred_region
      _
    $region49: #{tpu_custom_call.1} parent=1 // pred_fallthru
      _
    // Predicated region
    $region50: #{tpu_custom_call.1} parent=1 // pred_check
      _
    $region51: #{tpu_custom_call.1} parent=1 // pred_check_branch
      %86 = sbr.rel (0) target = $region53
    $region52: #{tpu_custom_call.1} parent=1 // pred_region
      %88 = vsyncadd [#allocation12], 0
      %s89 = sshll.u32 %s15, 4
      %s90 = int_to_ptr.hbm [resolvable:$true] %s89
      %s91 = sshll.u32 [#allocation11], 4
      %s92 = int_to_ptr.vmem [resolvable:$true] %s91
      %97 = dma.hbm_to_vmem [thread:$0]  %s90, 1024, %s92, [#allocation12], 64, 64, 4
    $region53: #{tpu_custom_call.1} parent=1 // pred_fallthru
      _
    // Predicated region
    $region54: #{tpu_custom_call.1} parent=1 // pred_check
      _
    $region55: #{tpu_custom_call.1} parent=1 // pred_check_branch
      %99 = sbr.rel (0) target = $region57
    $region56: #{tpu_custom_call.1} parent=1 // pred_region
      %101 = vsyncadd [#allocation12], 0
      %s102 = sshll.u32 %s16, 4
      %s103 = int_to_ptr.hbm [resolvable:$true] %s102
      %s104 = sshll.u32 [#allocation13], 4
      %s105 = int_to_ptr.vmem [resolvable:$true] %s104
      %110 = dma.hbm_to_vmem [thread:$0]  %s103, 1024, %s105, [#allocation12], 64, 64, 4
    $region57: #{tpu_custom_call.1} parent=1 // pred_fallthru
      _
    // Predicated region
    $region58: #{tpu_custom_call.1} parent=1 // pred_check
      _
    $region59: #{tpu_custom_call.1} parent=1 // pred_check_branch
      %112 = sbr.rel (0) target = $region61
    $region60: #{tpu_custom_call.1} parent=1 // pred_region
      _
    $region61: #{tpu_custom_call.1} parent=1 // pred_fallthru
      _
    // Predicated region
    $region62: #{tpu_custom_call.1} parent=1 // pred_check
      _
    $region63: #{tpu_custom_call.1} parent=1 // pred_check_branch
      %114 = sbr.rel (0) target = $region65
    $region64: #{tpu_custom_call.1} parent=1 // pred_region
      %116 = vsyncadd [#allocation15], 0
      %s117 = sshll.u32 %s18, 4
      %s118 = int_to_ptr.hbm [resolvable:$true] %s117
      %s119 = sshll.u32 [#allocation14], 4
      %s120 = int_to_ptr.vmem [resolvable:$true] %s119
      %125 = dma.hbm_to_vmem [thread:$0]  %s118, 1024, %s120, [#allocation15], 64, 64, 4
    $region65: #{tpu_custom_call.1} parent=1 // pred_fallthru
      _
    // Predicated region
    $region66: #{tpu_custom_call.1} parent=1 // pred_check
      _
    $region67: #{tpu_custom_call.1} parent=1 // pred_check_branch
      %127 = sbr.rel (0) target = $region69
    $region68: #{tpu_custom_call.1} parent=1 // pred_region
      _
    $region69: #{tpu_custom_call.1} parent=1 // pred_fallthru
      _
    // Predicated region
    $region70: #{tpu_custom_call.1} parent=1 // pred_check
      _
    $region71: #{tpu_custom_call.1} parent=1 // pred_check_branch
      %129 = sbr.rel (0) target = $region73
    $region72: #{tpu_custom_call.1} parent=1 // pred_region
      _
    $region73: #{tpu_custom_call.1} parent=1 // pred_fallthru
      _
    // Predicated region
    $region74: #{tpu_custom_call.1} parent=1 // pred_check
      _
    $region75: #{tpu_custom_call.1} parent=1 // pred_check_branch
      %131 = sbr.rel (0) target = $region77
    $region76: #{tpu_custom_call.1} parent=1 // pred_region
      _
    $region77: #{tpu_custom_call.1} parent=1 // pred_fallthru
      _
    // Predicated region
    $region78: #{tpu_custom_call.1} parent=1 // pred_check
      _
    $region79: #{tpu_custom_call.1} parent=1 // pred_check_branch
      %133 = sbr.rel (0) target = $region81
    $region80: #{tpu_custom_call.1} parent=1 // pred_region
      %135 = dma.done [#allocation9], 1024
    $region81: #{tpu_custom_call.1} parent=1 // pred_fallthru
      _
    // Predicated region
    $region82: #{tpu_custom_call.1} parent=1 // pred_check
      _
    $region83: #{tpu_custom_call.1} parent=1 // pred_check_branch
      %137 = sbr.rel (0) target = $region85
    $region84: #{tpu_custom_call.1} parent=1 // pred_region
      %139 = dma.done [#allocation12], 1024
    $region85: #{tpu_custom_call.1} parent=1 // pred_fallthru
      _
    // Predicated region
    $region86: #{tpu_custom_call.1} parent=1 // pred_check
      _
    $region87: #{tpu_custom_call.1} parent=1 // pred_check_branch
      %141 = sbr.rel (0) target = $region89
    $region88: #{tpu_custom_call.1} parent=1 // pred_region
      %143 = dma.done [#allocation12], 1024
    $region89: #{tpu_custom_call.1} parent=1 // pred_fallthru
      _
    // Predicated region
    $region90: #{tpu_custom_call.1} parent=1 // pred_check
      _
    $region91: #{tpu_custom_call.1} parent=1 // pred_check_branch
      %145 = sbr.rel (0) target = $region93
    $region92: #{tpu_custom_call.1} parent=1 // pred_region
      %147 = dma.done [#allocation15], 1024
    $region93: #{tpu_custom_call.1} parent=1 // pred_fallthru
      _
    %s148 = sld [smem:[#allocation5]]
    %s149 = smul.u32 32, %s148
    %p150 = scmp.lt.s32.totalorder %s149, 31
    %s151 = scalar_select %p150, %s149, 31
    %s152 = smul.addr %s151, 8
    %s153 = scalar_lea.vmem %s6, %s152
    %s154 = sld [smem:[#allocation5]]
    %s155 = smul.u32 32, %s154
    %p156 = scmp.lt.s32.totalorder %s155, 31
    %s157 = scalar_select %p156, %s155, 31
    %s158 = smul.addr %s157, 8
    %s159 = scalar_lea.vmem %s7, %s158
    %s160 = sld [smem:[#allocation5]]
    %s161 = smul.u32 32, %s160
    %p162 = scmp.lt.s32.totalorder %s161, 31
    %s163 = scalar_select %p162, %s161, 31
    %s164 = smul.addr %s163, 8
    %s165 = scalar_lea.vmem %s6, %s164
    %s166 = sld [smem:[#allocation5]]
    %s167 = smul.u32 32, %s166
    %s168 = sld [smem:[#allocation5]]
    %s169 = smul.u32 32, %s168
    %p170 = scmp.lt.s32.totalorder %s169, 31
    %s171 = scalar_select %p170, %s169, 31
    %s172 = smul.addr %s171, 8
    %s173 = scalar_lea.vmem %s7, %s172
    %s174 = sld [smem:[#allocation5]]
    %s175 = smul.u32 32, %s174
    %s176 = sld [smem:[#allocation5]]
    %s177 = smul.u32 32, %s176
    %v178 = vld [vmem:[%s165] sm:$0xff]
    %v179 = vld [vmem:[%s165 + $0x8] sm:$0xff]
    %v180 = vld [vmem:[%s165 + $0x10] sm:$0xff]
    %v181 = vld [vmem:[%s165 + $0x18] sm:$0xff]
    %v182 = vld [vmem:[%s165 + $0x20] sm:$0xff]
    %v183 = vld [vmem:[%s165 + $0x28] sm:$0xff]
    %v184 = vld [vmem:[%s165 + $0x30] sm:$0xff]
    %v185 = vld [vmem:[%s165 + $0x38] sm:$0xff]
    %v186 = vld [vmem:[%s165 + $0x40] sm:$0xff]
    %v187 = vld [vmem:[%s165 + $0x48] sm:$0xff]
    %v188 = vld [vmem:[%s165 + $0x50] sm:$0xff]
    %v189 = vld [vmem:[%s165 + $0x58] sm:$0xff]
    %v190 = vld [vmem:[%s165 + $0x60] sm:$0xff]
    %v191 = vld [vmem:[%s165 + $0x68] sm:$0xff]
    %v192 = vld [vmem:[%s165 + $0x70] sm:$0xff]
    %v193 = vld [vmem:[%s165 + $0x78] sm:$0xff]
    %v194 = vld [vmem:[%s165 + $0x80] sm:$0xff]
    %v195 = vld [vmem:[%s165 + $0x88] sm:$0xff]
    %v196 = vld [vmem:[%s165 + $0x90] sm:$0xff]
    %v197 = vld [vmem:[%s165 + $0x98] sm:$0xff]
    %v198 = vld [vmem:[%s165 + $0xa0] sm:$0xff]
    %v199 = vld [vmem:[%s165 + $0xa8] sm:$0xff]
    %v200 = vld [vmem:[%s165 + $0xb0] sm:$0xff]
    %v201 = vld [vmem:[%s165 + $0xb8] sm:$0xff]
    %v202 = vld [vmem:[%s165 + $0xc0] sm:$0xff]
    %v203 = vld [vmem:[%s165 + $0xc8] sm:$0xff]
    %v204 = vld [vmem:[%s165 + $0xd0] sm:$0xff]
    %v205 = vld [vmem:[%s165 + $0xd8] sm:$0xff]
    %v206 = vld [vmem:[%s165 + $0xe0] sm:$0xff]
    %v207 = vld [vmem:[%s165 + $0xe8] sm:$0xff]
    %v208 = vld [vmem:[%s165 + $0xf0] sm:$0xff]
    %v209 = vld [vmem:[%s165 + $0xf8] sm:$0xff]
    %v210 = vpack.c.bf16 %v179, %v178
    %v211 = vpack.c.bf16 %v181, %v180
    %v212 = vpack.c.bf16 %v183, %v182
    %v213 = vpack.c.bf16 %v185, %v184
    %v214 = vpack.c.bf16 %v187, %v186
    %v215 = vpack.c.bf16 %v189, %v188
    %v216 = vpack.c.bf16 %v191, %v190
    %v217 = vpack.c.bf16 %v193, %v192
    %v218 = vpack.c.bf16 %v195, %v194
    %v219 = vpack.c.bf16 %v197, %v196
    %v220 = vpack.c.bf16 %v199, %v198
    %v221 = vpack.c.bf16 %v201, %v200
    %v222 = vpack.c.bf16 %v203, %v202
    %v223 = vpack.c.bf16 %v205, %v204
    %v224 = vpack.c.bf16 %v207, %v206
    %v225 = vpack.c.bf16 %v209, %v208
    %s226 = sld [smem:[#allocation6]]
    %p227 = scmp.eq.s32.totalorder %s226, 1
    // Predicated region
    $region94: #{tpu_custom_call.1} parent=1 // pred_check
      %p228 = pneg %p227
    $region95: #{tpu_custom_call.1} parent=1 // pred_check_branch
      %230 = sbr.rel (%p228) target = $region97
    $region96: #{tpu_custom_call.1} parent=1 // pred_region
      %231 = vst [vmem:[#allocation2] sm:$0xff] 0.0
      %232 = vst [vmem:[#allocation2 + $0x8] sm:$0xff] 0.0
      %233 = vst [vmem:[#allocation2 + $0x10] sm:$0xff] 0.0
      %234 = vst [vmem:[#allocation2 + $0x18] sm:$0xff] 0.0
      %235 = vst [vmem:[#allocation2 + $0x20] sm:$0xff] 0.0
      %236 = vst [vmem:[#allocation2 + $0x28] sm:$0xff] 0.0
      %237 = vst [vmem:[#allocation2 + $0x30] sm:$0xff] 0.0
      %238 = vst [vmem:[#allocation2 + $0x38] sm:$0xff] 0.0
      %239 = vst [vmem:[#allocation2 + $0x40] sm:$0xff] 0.0
      %240 = vst [vmem:[#allocation2 + $0x48] sm:$0xff] 0.0
      %241 = vst [vmem:[#allocation2 + $0x50] sm:$0xff] 0.0
      %242 = vst [vmem:[#allocation2 + $0x58] sm:$0xff] 0.0
      %243 = vst [vmem:[#allocation2 + $0x60] sm:$0xff] 0.0
      %244 = vst [vmem:[#allocation2 + $0x68] sm:$0xff] 0.0
      %245 = vst [vmem:[#allocation2 + $0x70] sm:$0xff] 0.0
      %246 = vst [vmem:[#allocation2 + $0x78] sm:$0xff] 0.0
      %247 = vst [vmem:[#allocation2 + $0x80] sm:$0xff] 0.0
      %248 = vst [vmem:[#allocation2 + $0x88] sm:$0xff] 0.0
      %249 = vst [vmem:[#allocation2 + $0x90] sm:$0xff] 0.0
      %250 = vst [vmem:[#allocation2 + $0x98] sm:$0xff] 0.0
      %251 = vst [vmem:[#allocation2 + $0xa0] sm:$0xff] 0.0
      %252 = vst [vmem:[#allocation2 + $0xa8] sm:$0xff] 0.0
      %253 = vst [vmem:[#allocation2 + $0xb0] sm:$0xff] 0.0
      %254 = vst [vmem:[#allocation2 + $0xb8] sm:$0xff] 0.0
      %255 = vst [vmem:[#allocation2 + $0xc0] sm:$0xff] 0.0
      %256 = vst [vmem:[#allocation2 + $0xc8] sm:$0xff] 0.0
      %257 = vst [vmem:[#allocation2 + $0xd0] sm:$0xff] 0.0
      %258 = vst [vmem:[#allocation2 + $0xd8] sm:$0xff] 0.0
      %259 = vst [vmem:[#allocation2 + $0xe0] sm:$0xff] 0.0
      %260 = vst [vmem:[#allocation2 + $0xe8] sm:$0xff] 0.0
      %261 = vst [vmem:[#allocation2 + $0xf0] sm:$0xff] 0.0
      %262 = vst [vmem:[#allocation2 + $0xf8] sm:$0xff] 0.0
      %v263 = vld [vmem:[%s9] sm:$0xf]
      %v264 = vld [vmem:[%s9 + $0x4] sm:$0xf]
      %v265 = vld [vmem:[%s9 + $0x8] sm:$0xf]
      %v266 = vld [vmem:[%s9 + $0xc] sm:$0xf]
      %v267 = vld [vmem:[%s9 + $0x10] sm:$0xf]
      %v268 = vld [vmem:[%s9 + $0x14] sm:$0xf]
      %v269 = vld [vmem:[%s9 + $0x18] sm:$0xf]
      %v270 = vld [vmem:[%s9 + $0x1c] sm:$0xf]
      %v271 = vld [vmem:[%s9 + $0x20] sm:$0xf]
      %v272 = vld [vmem:[%s9 + $0x24] sm:$0xf]
      %v273 = vld [vmem:[%s9 + $0x28] sm:$0xf]
      %v274 = vld [vmem:[%s9 + $0x2c] sm:$0xf]
      %v275 = vld [vmem:[%s9 + $0x30] sm:$0xf]
      %v276 = vld [vmem:[%s9 + $0x34] sm:$0xf]
      %v277 = vld [vmem:[%s9 + $0x38] sm:$0xf]
      %v278 = vld [vmem:[%s9 + $0x3c] sm:$0xf]
      %v295 = vunpack.c.l.b16 %v263
      %v296 = vunpack.c.l.b16 %v264
      %v297 = vunpack.c.l.b16 %v265
      %v298 = vunpack.c.l.b16 %v266
      %v299 = vunpack.c.l.b16 %v267
      %v300 = vunpack.c.l.b16 %v268
      %v301 = vunpack.c.l.b16 %v269
      %v302 = vunpack.c.l.b16 %v270
      %v303 = vunpack.c.l.b16 %v271
      %v304 = vunpack.c.l.b16 %v272
      %v305 = vunpack.c.l.b16 %v273
      %v306 = vunpack.c.l.b16 %v274
      %v307 = vunpack.c.l.b16 %v275
      %v308 = vunpack.c.l.b16 %v276
      %v309 = vunpack.c.l.b16 %v277
      %v310 = vunpack.c.l.b16 %v278
      %v311 = vpack.c.b16 %v296, %v295
      %v312 = vpack.c.b16 %v298, %v297
      %v313 = vpack.c.b16 %v300, %v299
      %v314 = vpack.c.b16 %v302, %v301
      %v315 = vpack.c.b16 %v304, %v303
      %v316 = vpack.c.b16 %v306, %v305
      %v317 = vpack.c.b16 %v308, %v307
      %v318 = vpack.c.b16 %v310, %v309
      %327 = vmatpush.bf16.msra.mxu0 %v318
      %328 = vmatpush.bf16.msra.mxu0 %v317
      %329 = vmatpush.bf16.msra.mxu0 %v316
      %330 = vmatpush.bf16.msra.mxu0 %v315
      %331 = vmatpush.bf16.msra.mxu0 %v314
      %332 = vmatpush.bf16.msra.mxu0 %v313
      %333 = vmatpush.bf16.msra.mxu0 %v312
      %334 = vmatpush.bf16.msra.mxu0 %v311
      %335 = vmatmul.bf16.gmra.mxu0 %v210
      %v336 = vpop.f32.mrf.mxu0
      %v337 = vadd.f32 0.0, %v336
      %v338 = vpop.f32.mrf.mxu0
      %v339 = vadd.f32 0.0, %v338
      %340 = vmatmul.bf16.gmra.mxu0 %v211
      %v341 = vpop.f32.mrf.mxu0
      %v342 = vadd.f32 0.0, %v341
      %v343 = vpop.f32.mrf.mxu0
      %v344 = vadd.f32 0.0, %v343
      %345 = vmatmul.bf16.gmra.mxu0 %v212
      %v346 = vpop.f32.mrf.mxu0
      %v347 = vadd.f32 0.0, %v346
      %v348 = vpop.f32.mrf.mxu0
      %v349 = vadd.f32 0.0, %v348
      %350 = vmatmul.bf16.gmra.mxu0 %v213
      %v351 = vpop.f32.mrf.mxu0
      %v352 = vadd.f32 0.0, %v351
      %v353 = vpop.f32.mrf.mxu0
      %v354 = vadd.f32 0.0, %v353
      %355 = vmatmul.bf16.gmra.mxu0 %v214
      %v356 = vpop.f32.mrf.mxu0
      %v357 = vadd.f32 0.0, %v356
      %v358 = vpop.f32.mrf.mxu0
      %v359 = vadd.f32 0.0, %v358
      %360 = vmatmul.bf16.gmra.mxu0 %v215
      %v361 = vpop.f32.mrf.mxu0
      %v362 = vadd.f32 0.0, %v361
      %v363 = vpop.f32.mrf.mxu0
      %v364 = vadd.f32 0.0, %v363
      %365 = vmatmul.bf16.gmra.mxu0 %v216
      %v366 = vpop.f32.mrf.mxu0
      %v367 = vadd.f32 0.0, %v366
      %v368 = vpop.f32.mrf.mxu0
      %v369 = vadd.f32 0.0, %v368
      %370 = vmatmul.bf16.gmra.mxu0 %v217
      %v371 = vpop.f32.mrf.mxu0
      %v372 = vadd.f32 0.0, %v371
      %v373 = vpop.f32.mrf.mxu0
      %v374 = vadd.f32 0.0, %v373
      %375 = vmatmul.bf16.gmra.mxu0 %v218
      %v376 = vpop.f32.mrf.mxu0
      %v377 = vadd.f32 0.0, %v376
      %v378 = vpop.f32.mrf.mxu0
      %v379 = vadd.f32 0.0, %v378
      %380 = vmatmul.bf16.gmra.mxu0 %v219
      %v381 = vpop.f32.mrf.mxu0
      %v382 = vadd.f32 0.0, %v381
      %v383 = vpop.f32.mrf.mxu0
      %v384 = vadd.f32 0.0, %v383
      %385 = vmatmul.bf16.gmra.mxu0 %v220
      %v386 = vpop.f32.mrf.mxu0
      %v387 = vadd.f32 0.0, %v386
      %v388 = vpop.f32.mrf.mxu0
      %v389 = vadd.f32 0.0, %v388
      %390 = vmatmul.bf16.gmra.mxu0 %v221
      %v391 = vpop.f32.mrf.mxu0
      %v392 = vadd.f32 0.0, %v391
      %v393 = vpop.f32.mrf.mxu0
      %v394 = vadd.f32 0.0, %v393
      %395 = vmatmul.bf16.gmra.mxu0 %v222
      %v396 = vpop.f32.mrf.mxu0
      %v397 = vadd.f32 0.0, %v396
      %v398 = vpop.f32.mrf.mxu0
      %v399 = vadd.f32 0.0, %v398
      %400 = vmatmul.bf16.gmra.mxu0 %v223
      %v401 = vpop.f32.mrf.mxu0
      %v402 = vadd.f32 0.0, %v401
      %v403 = vpop.f32.mrf.mxu0
      %v404 = vadd.f32 0.0, %v403
      %405 = vmatmul.bf16.gmra.mxu0 %v224
      %v406 = vpop.f32.mrf.mxu0
      %v407 = vadd.f32 0.0, %v406
      %v408 = vpop.f32.mrf.mxu0
      %v409 = vadd.f32 0.0, %v408
      %410 = vmatmul.bf16.gmra.mxu0 %v225
      %v411 = vpop.f32.mrf.mxu0
      %v412 = vadd.f32 0.0, %v411
      %v413 = vpop.f32.mrf.mxu0
      %v414 = vadd.f32 0.0, %v413
      %415 = vdwg.mxu0
      %v416 = vpack.c.bf16 %v337, %v337
      %v417 = vpack.c.bf16 %v339, %v339
      %v418 = vpack.c.bf16 %v342, %v342
      %v419 = vpack.c.bf16 %v344, %v344
      %v420 = vpack.c.bf16 %v347, %v347
      %v421 = vpack.c.bf16 %v349, %v349
      %v422 = vpack.c.bf16 %v352, %v352
      %v423 = vpack.c.bf16 %v354, %v354
      %v424 = vpack.c.bf16 %v357, %v357
      %v425 = vpack.c.bf16 %v359, %v359
      %v426 = vpack.c.bf16 %v362, %v362
      %v427 = vpack.c.bf16 %v364, %v364
      %v428 = vpack.c.bf16 %v367, %v367
      %v429 = vpack.c.bf16 %v369, %v369
      %v430 = vpack.c.bf16 %v372, %v372
      %v431 = vpack.c.bf16 %v374, %v374
      %v432 = vpack.c.bf16 %v377, %v377
      %v433 = vpack.c.bf16 %v379, %v379
      %v434 = vpack.c.bf16 %v382, %v382
      %v435 = vpack.c.bf16 %v384, %v384
      %v436 = vpack.c.bf16 %v387, %v387
      %v437 = vpack.c.bf16 %v389, %v389
      %v438 = vpack.c.bf16 %v392, %v392
      %v439 = vpack.c.bf16 %v394, %v394
      %v440 = vpack.c.bf16 %v397, %v397
      %v441 = vpack.c.bf16 %v399, %v399
      %v442 = vpack.c.bf16 %v402, %v402
      %v443 = vpack.c.bf16 %v404, %v404
      %v444 = vpack.c.bf16 %v407, %v407
      %v445 = vpack.c.bf16 %v409, %v409
      %v446 = vpack.c.bf16 %v412, %v412
      %v447 = vpack.c.bf16 %v414, %v414
      %448 = vst [vmem:[#allocation3] sm:$0xf] %v416
      %449 = vst [vmem:[#allocation3 + $0x4] sm:$0xf] %v417
      %450 = vst [vmem:[#allocation3 + $0x8] sm:$0xf] %v418
      %451 = vst [vmem:[#allocation3 + $0xc] sm:$0xf] %v419
      %452 = vst [vmem:[#allocation3 + $0x10] sm:$0xf] %v420
      %453 = vst [vmem:[#allocation3 + $0x14] sm:$0xf] %v421
      %454 = vst [vmem:[#allocation3 + $0x18] sm:$0xf] %v422
      %455 = vst [vmem:[#allocation3 + $0x1c] sm:$0xf] %v423
      %456 = vst [vmem:[#allocation3 + $0x20] sm:$0xf] %v424
      %457 = vst [vmem:[#allocation3 + $0x24] sm:$0xf] %v425
      %458 = vst [vmem:[#allocation3 + $0x28] sm:$0xf] %v426
      %459 = vst [vmem:[#allocation3 + $0x2c] sm:$0xf] %v427
      %460 = vst [vmem:[#allocation3 + $0x30] sm:$0xf] %v428
      %461 = vst [vmem:[#allocation3 + $0x34] sm:$0xf] %v429
      %462 = vst [vmem:[#allocation3 + $0x38] sm:$0xf] %v430
      %463 = vst [vmem:[#allocation3 + $0x3c] sm:$0xf] %v431
      %464 = vst [vmem:[#allocation3 + $0x40] sm:$0xf] %v432
      %465 = vst [vmem:[#allocation3 + $0x44] sm:$0xf] %v433
      %466 = vst [vmem:[#allocation3 + $0x48] sm:$0xf] %v434
      %467 = vst [vmem:[#allocation3 + $0x4c] sm:$0xf] %v435
      %468 = vst [vmem:[#allocation3 + $0x50] sm:$0xf] %v436
      %469 = vst [vmem:[#allocation3 + $0x54] sm:$0xf] %v437
      %470 = vst [vmem:[#allocation3 + $0x58] sm:$0xf] %v438
      %471 = vst [vmem:[#allocation3 + $0x5c] sm:$0xf] %v439
      %472 = vst [vmem:[#allocation3 + $0x60] sm:$0xf] %v440
      %473 = vst [vmem:[#allocation3 + $0x64] sm:$0xf] %v441
      %474 = vst [vmem:[#allocation3 + $0x68] sm:$0xf] %v442
      %475 = vst [vmem:[#allocation3 + $0x6c] sm:$0xf] %v443
      %476 = vst [vmem:[#allocation3 + $0x70] sm:$0xf] %v444
      %477 = vst [vmem:[#allocation3 + $0x74] sm:$0xf] %v445
      %478 = vst [vmem:[#allocation3 + $0x78] sm:$0xf] %v446
      %479 = vst [vmem:[#allocation3 + $0x7c] sm:$0xf] %v447
    $region97: #{tpu_custom_call.1} parent=1 // pred_fallthru
      _
    %v480 = vld [vmem:[%s4] sm:$0x3]
    %v481 = vld [vmem:[%s5] sm:$0xff]
    %v482 = vld [vmem:[%s5 + $0x8] sm:$0xff]
    %v483 = vld [vmem:[%s5 + $0x10] sm:$0xff]
    %v484 = vld [vmem:[%s5 + $0x18] sm:$0xff]
    %v485 = vld [vmem:[%s5 + $0x20] sm:$0xff]
    %v486 = vld [vmem:[%s5 + $0x28] sm:$0xff]
    %v487 = vld [vmem:[%s5 + $0x30] sm:$0xff]
    %v488 = vld [vmem:[%s5 + $0x38] sm:$0xff]
    %v489 = vld [vmem:[%s5 + $0x40] sm:$0xff]
    %v490 = vld [vmem:[%s5 + $0x48] sm:$0xff]
    %v491 = vld [vmem:[%s5 + $0x50] sm:$0xff]
    %v492 = vld [vmem:[%s5 + $0x58] sm:$0xff]
    %v493 = vld [vmem:[%s5 + $0x60] sm:$0xff]
    %v494 = vld [vmem:[%s5 + $0x68] sm:$0xff]
    %v495 = vld [vmem:[%s5 + $0x70] sm:$0xff]
    %v496 = vld [vmem:[%s5 + $0x78] sm:$0xff]
    %v497 = vld [vmem:[%s5 + $0x80] sm:$0xff]
    %v498 = vld [vmem:[%s5 + $0x88] sm:$0xff]
    %v499 = vld [vmem:[%s5 + $0x90] sm:$0xff]
    %v500 = vld [vmem:[%s5 + $0x98] sm:$0xff]
    %v501 = vld [vmem:[%s5 + $0xa0] sm:$0xff]
    %v502 = vld [vmem:[%s5 + $0xa8] sm:$0xff]
    %v503 = vld [vmem:[%s5 + $0xb0] sm:$0xff]
    %v504 = vld [vmem:[%s5 + $0xb8] sm:$0xff]
    %v505 = vld [vmem:[%s5 + $0xc0] sm:$0xff]
    %v506 = vld [vmem:[%s5 + $0xc8] sm:$0xff]
    %v507 = vld [vmem:[%s5 + $0xd0] sm:$0xff]
    %v508 = vld [vmem:[%s5 + $0xd8] sm:$0xff]
    %v509 = vld [vmem:[%s5 + $0xe0] sm:$0xff]
    %v510 = vld [vmem:[%s5 + $0xe8] sm:$0xff]
    %v511 = vld [vmem:[%s5 + $0xf0] sm:$0xff]
    %v512 = vld [vmem:[%s5 + $0xf8] sm:$0xff]
    %v513 = vlaneseq
    %v514 = vshrl.u32 %v513, 7
    %v515 = vadd.s32 %v514, 8
    %v516 = vadd.s32 %v514, 16
    %v517 = vadd.s32 %v514, 24
    %v518 = vadd.s32 %v514, 32
    %v519 = vadd.s32 %v514, 40
    %v520 = vadd.s32 %v514, 48
    %v521 = vadd.s32 %v514, 56
    %v522 = vadd.s32 %v514, 64
    %v523 = vadd.s32 %v514, 72
    %v524 = vadd.s32 %v514, 80
    %v525 = vadd.s32 %v514, 88
    %v526 = vadd.s32 %v514, 96
    %v527 = vadd.s32 %v514, 104
    %v528 = vadd.s32 %v514, 112
    %v529 = vadd.s32 %v514, 120
    %v530 = vadd.s32 %v514, 128
    %v531 = vadd.s32 %v514, 136
    %v532 = vadd.s32 %v514, 144
    %v533 = vadd.s32 %v514, 152
    %v534 = vadd.s32 %v514, 160
    %v535 = vadd.s32 %v514, 168
    %v536 = vadd.s32 %v514, 176
    %v537 = vadd.s32 %v514, 184
    %v538 = vadd.s32 %v514, 192
    %v539 = vadd.s32 %v514, 200
    %v540 = vadd.s32 %v514, 208
    %v541 = vadd.s32 %v514, 216
    %v542 = vadd.s32 %v514, 224
    %v543 = vadd.s32 %v514, 232
    %v544 = vadd.s32 %v514, 240
    %v545 = vadd.s32 %v514, 248
    %v546 = vperm.slane %v480, 0
    %v547 = vperm.slane %v480, 1
    %vm548 = vcmp.eq.s32.totalorder %v514, %v546
    %vm549 = vcmp.eq.s32.totalorder %v514, %v547
    %vm550 = vcmp.eq.s32.totalorder %v515, %v546
    %vm551 = vcmp.eq.s32.totalorder %v515, %v547
    %vm552 = vcmp.eq.s32.totalorder %v516, %v546
    %vm553 = vcmp.eq.s32.totalorder %v516, %v547
    %vm554 = vcmp.eq.s32.totalorder %v517, %v546
    %vm555 = vcmp.eq.s32.totalorder %v517, %v547
    %vm556 = vcmp.eq.s32.totalorder %v518, %v546
    %vm557 = vcmp.eq.s32.totalorder %v518, %v547
    %vm558 = vcmp.eq.s32.totalorder %v519, %v546
    %vm559 = vcmp.eq.s32.totalorder %v519, %v547
    %vm560 = vcmp.eq.s32.totalorder %v520, %v546
    %vm561 = vcmp.eq.s32.totalorder %v520, %v547
    %vm562 = vcmp.eq.s32.totalorder %v521, %v546
    %vm563 = vcmp.eq.s32.totalorder %v521, %v547
    %vm564 = vcmp.eq.s32.totalorder %v522, %v546
    %vm565 = vcmp.eq.s32.totalorder %v522, %v547
    %vm566 = vcmp.eq.s32.totalorder %v523, %v546
    %vm567 = vcmp.eq.s32.totalorder %v523, %v547
    %vm568 = vcmp.eq.s32.totalorder %v524, %v546
    %vm569 = vcmp.eq.s32.totalorder %v524, %v547
    %vm570 = vcmp.eq.s32.totalorder %v525, %v546
    %vm571 = vcmp.eq.s32.totalorder %v525, %v547
    %vm572 = vcmp.eq.s32.totalorder %v526, %v546
    %vm573 = vcmp.eq.s32.totalorder %v526, %v547
    %vm574 = vcmp.eq.s32.totalorder %v527, %v546
    %vm575 = vcmp.eq.s32.totalorder %v527, %v547
    %vm576 = vcmp.eq.s32.totalorder %v528, %v546
    %vm577 = vcmp.eq.s32.totalorder %v528, %v547
    %vm578 = vcmp.eq.s32.totalorder %v529, %v546
    %vm579 = vcmp.eq.s32.totalorder %v529, %v547
    %vm580 = vcmp.eq.s32.totalorder %v530, %v546
    %vm581 = vcmp.eq.s32.totalorder %v530, %v547
    %vm582 = vcmp.eq.s32.totalorder %v531, %v546
    %vm583 = vcmp.eq.s32.totalorder %v531, %v547
    %vm584 = vcmp.eq.s32.totalorder %v532, %v546
    %vm585 = vcmp.eq.s32.totalorder %v532, %v547
    %vm586 = vcmp.eq.s32.totalorder %v533, %v546
    %vm587 = vcmp.eq.s32.totalorder %v533, %v547
    %vm588 = vcmp.eq.s32.totalorder %v534, %v546
    %vm589 = vcmp.eq.s32.totalorder %v534, %v547
    %vm590 = vcmp.eq.s32.totalorder %v535, %v546
    %vm591 = vcmp.eq.s32.totalorder %v535, %v547
    %vm592 = vcmp.eq.s32.totalorder %v536, %v546
    %vm593 = vcmp.eq.s32.totalorder %v536, %v547
    %vm594 = vcmp.eq.s32.totalorder %v537, %v546
    %vm595 = vcmp.eq.s32.totalorder %v537, %v547
    %vm596 = vcmp.eq.s32.totalorder %v538, %v546
    %vm597 = vcmp.eq.s32.totalorder %v538, %v547
    %vm598 = vcmp.eq.s32.totalorder %v539, %v546
    %vm599 = vcmp.eq.s32.totalorder %v539, %v547
    %vm600 = vcmp.eq.s32.totalorder %v540, %v546
    %vm601 = vcmp.eq.s32.totalorder %v540, %v547
    %vm602 = vcmp.eq.s32.totalorder %v541, %v546
    %vm603 = vcmp.eq.s32.totalorder %v541, %v547
    %vm604 = vcmp.eq.s32.totalorder %v542, %v546
    %vm605 = vcmp.eq.s32.totalorder %v542, %v547
    %vm606 = vcmp.eq.s32.totalorder %v543, %v546
    %vm607 = vcmp.eq.s32.totalorder %v543, %v547
    %vm608 = vcmp.eq.s32.totalorder %v544, %v546
    %vm609 = vcmp.eq.s32.totalorder %v544, %v547
    %vm610 = vcmp.eq.s32.totalorder %v545, %v546
    %vm611 = vcmp.eq.s32.totalorder %v545, %v547
    %v612 = vsel %vm548, 1, 0
    %v613 = vsel %vm549, 1, 0
    %v614 = vsel %vm550, 1, 0
    %v615 = vsel %vm551, 1, 0
    %v616 = vsel %vm552, 1, 0
    %v617 = vsel %vm553, 1, 0
    %v618 = vsel %vm554, 1, 0
    %v619 = vsel %vm555, 1, 0
    %v620 = vsel %vm556, 1, 0
    %v621 = vsel %vm557, 1, 0
    %v622 = vsel %vm558, 1, 0
    %v623 = vsel %vm559, 1, 0
    %v624 = vsel %vm560, 1, 0
    %v625 = vsel %vm561, 1, 0
    %v626 = vsel %vm562, 1, 0
    %v627 = vsel %vm563, 1, 0
    %v628 = vsel %vm564, 1, 0
    %v629 = vsel %vm565, 1, 0
    %v630 = vsel %vm566, 1, 0
    %v631 = vsel %vm567, 1, 0
    %v632 = vsel %vm568, 1, 0
    %v633 = vsel %vm569, 1, 0
    %v634 = vsel %vm570, 1, 0
    %v635 = vsel %vm571, 1, 0
    %v636 = vsel %vm572, 1, 0
    %v637 = vsel %vm573, 1, 0
    %v638 = vsel %vm574, 1, 0
    %v639 = vsel %vm575, 1, 0
    %v640 = vsel %vm576, 1, 0
    %v641 = vsel %vm577, 1, 0
    %v642 = vsel %vm578, 1, 0
    %v643 = vsel %vm579, 1, 0
    %v644 = vsel %vm580, 1, 0
    %v645 = vsel %vm581, 1, 0
    %v646 = vsel %vm582, 1, 0
    %v647 = vsel %vm583, 1, 0
    %v648 = vsel %vm584, 1, 0
    %v649 = vsel %vm585, 1, 0
    %v650 = vsel %vm586, 1, 0
    %v651 = vsel %vm587, 1, 0
    %v652 = vsel %vm588, 1, 0
    %v653 = vsel %vm589, 1, 0
    %v654 = vsel %vm590, 1, 0
    %v655 = vsel %vm591, 1, 0
    %v656 = vsel %vm592, 1, 0
    %v657 = vsel %vm593, 1, 0
    %v658 = vsel %vm594, 1, 0
    %v659 = vsel %vm595, 1, 0
    %v660 = vsel %vm596, 1, 0
    %v661 = vsel %vm597, 1, 0
    %v662 = vsel %vm598, 1, 0
    %v663 = vsel %vm599, 1, 0
    %v664 = vsel %vm600, 1, 0
    %v665 = vsel %vm601, 1, 0
    %v666 = vsel %vm602, 1, 0
    %v667 = vsel %vm603, 1, 0
    %v668 = vsel %vm604, 1, 0
    %v669 = vsel %vm605, 1, 0
    %v670 = vsel %vm606, 1, 0
    %v671 = vsel %vm607, 1, 0
    %v672 = vsel %vm608, 1, 0
    %v673 = vsel %vm609, 1, 0
    %v674 = vsel %vm610, 1, 0
    %v675 = vsel %vm611, 1, 0
    %v676 = vcvt.s32.f32 %v612
    %v677 = vcvt.s32.f32 %v613
    %v678 = vcvt.s32.f32 %v614
    %v679 = vcvt.s32.f32 %v615
    %v680 = vcvt.s32.f32 %v616
    %v681 = vcvt.s32.f32 %v617
    %v682 = vcvt.s32.f32 %v618
    %v683 = vcvt.s32.f32 %v619
    %v684 = vcvt.s32.f32 %v620
    %v685 = vcvt.s32.f32 %v621
    %v686 = vcvt.s32.f32 %v622
    %v687 = vcvt.s32.f32 %v623
    %v688 = vcvt.s32.f32 %v624
    %v689 = vcvt.s32.f32 %v625
    %v690 = vcvt.s32.f32 %v626
    %v691 = vcvt.s32.f32 %v627
    %v692 = vcvt.s32.f32 %v628
    %v693 = vcvt.s32.f32 %v629
    %v694 = vcvt.s32.f32 %v630
    %v695 = vcvt.s32.f32 %v631
    %v696 = vcvt.s32.f32 %v632
    %v697 = vcvt.s32.f32 %v633
    %v698 = vcvt.s32.f32 %v634
    %v699 = vcvt.s32.f32 %v635
    %v700 = vcvt.s32.f32 %v636
    %v701 = vcvt.s32.f32 %v637
    %v702 = vcvt.s32.f32 %v638
    %v703 = vcvt.s32.f32 %v639
    %v704 = vcvt.s32.f32 %v640
    %v705 = vcvt.s32.f32 %v641
    %v706 = vcvt.s32.f32 %v642
    %v707 = vcvt.s32.f32 %v643
    %v708 = vcvt.s32.f32 %v644
    %v709 = vcvt.s32.f32 %v645
    %v710 = vcvt.s32.f32 %v646
    %v711 = vcvt.s32.f32 %v647
    %v712 = vcvt.s32.f32 %v648
    %v713 = vcvt.s32.f32 %v649
    %v714 = vcvt.s32.f32 %v650
    %v715 = vcvt.s32.f32 %v651
    %v716 = vcvt.s32.f32 %v652
    %v717 = vcvt.s32.f32 %v653
    %v718 = vcvt.s32.f32 %v654
    %v719 = vcvt.s32.f32 %v655
    %v720 = vcvt.s32.f32 %v656
    %v721 = vcvt.s32.f32 %v657
    %v722 = vcvt.s32.f32 %v658
    %v723 = vcvt.s32.f32 %v659
    %v724 = vcvt.s32.f32 %v660
    %v725 = vcvt.s32.f32 %v661
    %v726 = vcvt.s32.f32 %v662
    %v727 = vcvt.s32.f32 %v663
    %v728 = vcvt.s32.f32 %v664
    %v729 = vcvt.s32.f32 %v665
    %v730 = vcvt.s32.f32 %v666
    %v731 = vcvt.s32.f32 %v667
    %v732 = vcvt.s32.f32 %v668
    %v733 = vcvt.s32.f32 %v669
    %v734 = vcvt.s32.f32 %v670
    %v735 = vcvt.s32.f32 %v671
    %v736 = vcvt.s32.f32 %v672
    %v737 = vcvt.s32.f32 %v673
    %v738 = vcvt.s32.f32 %v674
    %v739 = vcvt.s32.f32 %v675
    %v740 = vpack.c.bf16 %v678, %v676
    %v741 = vpack.c.bf16 %v679, %v677
    %v742 = vpack.c.bf16 %v682, %v680
    %v743 = vpack.c.bf16 %v683, %v681
    %v744 = vpack.c.bf16 %v686, %v684
    %v745 = vpack.c.bf16 %v687, %v685
    %v746 = vpack.c.bf16 %v690, %v688
    %v747 = vpack.c.bf16 %v691, %v689
    %v748 = vpack.c.bf16 %v694, %v692
    %v749 = vpack.c.bf16 %v695, %v693
    %v750 = vpack.c.bf16 %v698, %v696
    %v751 = vpack.c.bf16 %v699, %v697
    %v752 = vpack.c.bf16 %v702, %v700
    %v753 = vpack.c.bf16 %v703, %v701
    %v754 = vpack.c.bf16 %v706, %v704
    %v755 = vpack.c.bf16 %v707, %v705
    %v756 = vpack.c.bf16 %v710, %v708
    %v757 = vpack.c.bf16 %v711, %v709
    %v758 = vpack.c.bf16 %v714, %v712
    %v759 = vpack.c.bf16 %v715, %v713
    %v760 = vpack.c.bf16 %v718, %v716
    %v761 = vpack.c.bf16 %v719, %v717
    %v762 = vpack.c.bf16 %v722, %v720
    %v763 = vpack.c.bf16 %v723, %v721
    %v764 = vpack.c.bf16 %v726, %v724
    %v765 = vpack.c.bf16 %v727, %v725
    %v766 = vpack.c.bf16 %v730, %v728
    %v767 = vpack.c.bf16 %v731, %v729
    %v768 = vpack.c.bf16 %v734, %v732
    %v769 = vpack.c.bf16 %v735, %v733
    %v770 = vpack.c.bf16 %v738, %v736
    %v771 = vpack.c.bf16 %v739, %v737
    %v772 = vlaneseq
    %v773 = vand.u32 %v772, 127
    %v774 = vadd.s32 %v773, 128
    %775 = vset.pattern.permute.xlu0 0
    %776 = vperm.xlu0 %775, %v481
    %v777 = vpop.permute.xlu0 %776
    %778 = vset.pattern.permute.xlu0 0
    %779 = vperm.xlu0 %778, %v482
    %v780 = vpop.permute.xlu0 %779
    %781 = vset.pattern.permute.xlu0 0
    %782 = vperm.xlu0 %781, %v483
    %v783 = vpop.permute.xlu0 %782
    %784 = vset.pattern.permute.xlu0 0
    %785 = vperm.xlu0 %784, %v484
    %v786 = vpop.permute.xlu0 %785
    %787 = vset.pattern.permute.xlu0 0
    %788 = vperm.xlu0 %787, %v485
    %v789 = vpop.permute.xlu0 %788
    %790 = vset.pattern.permute.xlu0 0
    %791 = vperm.xlu0 %790, %v486
    %v792 = vpop.permute.xlu0 %791
    %793 = vset.pattern.permute.xlu0 0
    %794 = vperm.xlu0 %793, %v487
    %v795 = vpop.permute.xlu0 %794
    %796 = vset.pattern.permute.xlu0 0
    %797 = vperm.xlu0 %796, %v488
    %v798 = vpop.permute.xlu0 %797
    %799 = vset.pattern.permute.xlu0 0
    %800 = vperm.xlu0 %799, %v489
    %v801 = vpop.permute.xlu0 %800
    %802 = vset.pattern.permute.xlu0 0
    %803 = vperm.xlu0 %802, %v490
    %v804 = vpop.permute.xlu0 %803
    %805 = vset.pattern.permute.xlu0 0
    %806 = vperm.xlu0 %805, %v491
    %v807 = vpop.permute.xlu0 %806
    %808 = vset.pattern.permute.xlu0 0
    %809 = vperm.xlu0 %808, %v492
    %v810 = vpop.permute.xlu0 %809
    %811 = vset.pattern.permute.xlu0 0
    %812 = vperm.xlu0 %811, %v493
    %v813 = vpop.permute.xlu0 %812
    %814 = vset.pattern.permute.xlu0 0
    %815 = vperm.xlu0 %814, %v494
    %v816 = vpop.permute.xlu0 %815
    %817 = vset.pattern.permute.xlu0 0
    %818 = vperm.xlu0 %817, %v495
    %v819 = vpop.permute.xlu0 %818
    %820 = vset.pattern.permute.xlu0 0
    %821 = vperm.xlu0 %820, %v496
    %v822 = vpop.permute.xlu0 %821
    %823 = vset.pattern.permute.xlu0 0
    %824 = vperm.xlu0 %823, %v497
    %v825 = vpop.permute.xlu0 %824
    %826 = vset.pattern.permute.xlu0 0
    %827 = vperm.xlu0 %826, %v498
    %v828 = vpop.permute.xlu0 %827
    %829 = vset.pattern.permute.xlu0 0
    %830 = vperm.xlu0 %829, %v499
    %v831 = vpop.permute.xlu0 %830
    %832 = vset.pattern.permute.xlu0 0
    %833 = vperm.xlu0 %832, %v500
    %v834 = vpop.permute.xlu0 %833
    %835 = vset.pattern.permute.xlu0 0
    %836 = vperm.xlu0 %835, %v501
    %v837 = vpop.permute.xlu0 %836
    %838 = vset.pattern.permute.xlu0 0
    %839 = vperm.xlu0 %838, %v502
    %v840 = vpop.permute.xlu0 %839
    %841 = vset.pattern.permute.xlu0 0
    %842 = vperm.xlu0 %841, %v503
    %v843 = vpop.permute.xlu0 %842
    %844 = vset.pattern.permute.xlu0 0
    %845 = vperm.xlu0 %844, %v504
    %v846 = vpop.permute.xlu0 %845
    %847 = vset.pattern.permute.xlu0 0
    %848 = vperm.xlu0 %847, %v505
    %v849 = vpop.permute.xlu0 %848
    %850 = vset.pattern.permute.xlu0 0
    %851 = vperm.xlu0 %850, %v506
    %v852 = vpop.permute.xlu0 %851
    %853 = vset.pattern.permute.xlu0 0
    %854 = vperm.xlu0 %853, %v507
    %v855 = vpop.permute.xlu0 %854
    %856 = vset.pattern.permute.xlu0 0
    %857 = vperm.xlu0 %856, %v508
    %v858 = vpop.permute.xlu0 %857
    %859 = vset.pattern.permute.xlu0 0
    %860 = vperm.xlu0 %859, %v509
    %v861 = vpop.permute.xlu0 %860
    %862 = vset.pattern.permute.xlu0 0
    %863 = vperm.xlu0 %862, %v510
    %v864 = vpop.permute.xlu0 %863
    %865 = vset.pattern.permute.xlu0 0
    %866 = vperm.xlu0 %865, %v511
    %v867 = vpop.permute.xlu0 %866
    %868 = vset.pattern.permute.xlu0 0
    %869 = vperm.xlu0 %868, %v512
    %v870 = vpop.permute.xlu0 %869
    %vm871 = vcmp.eq.s32.totalorder %v773, %v777
    %vm872 = vcmp.eq.s32.totalorder %v774, %v777
    %vm873 = vcmp.eq.s32.totalorder %v773, %v780
    %vm874 = vcmp.eq.s32.totalorder %v774, %v780
    %vm875 = vcmp.eq.s32.totalorder %v773, %v783
    %vm876 = vcmp.eq.s32.totalorder %v774, %v783
    %vm877 = vcmp.eq.s32.totalorder %v773, %v786
    %vm878 = vcmp.eq.s32.totalorder %v774, %v786
    %vm879 = vcmp.eq.s32.totalorder %v773, %v789
    %vm880 = vcmp.eq.s32.totalorder %v774, %v789
    %vm881 = vcmp.eq.s32.totalorder %v773, %v792
    %vm882 = vcmp.eq.s32.totalorder %v774, %v792
    %vm883 = vcmp.eq.s32.totalorder %v773, %v795
    %vm884 = vcmp.eq.s32.totalorder %v774, %v795
    %vm885 = vcmp.eq.s32.totalorder %v773, %v798
    %vm886 = vcmp.eq.s32.totalorder %v774, %v798
    %vm887 = vcmp.eq.s32.totalorder %v773, %v801
    %vm888 = vcmp.eq.s32.totalorder %v774, %v801
    %vm889 = vcmp.eq.s32.totalorder %v773, %v804
    %vm890 = vcmp.eq.s32.totalorder %v774, %v804
    %vm891 = vcmp.eq.s32.totalorder %v773, %v807
    %vm892 = vcmp.eq.s32.totalorder %v774, %v807
    %vm893 = vcmp.eq.s32.totalorder %v773, %v810
    %vm894 = vcmp.eq.s32.totalorder %v774, %v810
    %vm895 = vcmp.eq.s32.totalorder %v773, %v813
    %vm896 = vcmp.eq.s32.totalorder %v774, %v813
    %vm897 = vcmp.eq.s32.totalorder %v773, %v816
    %vm898 = vcmp.eq.s32.totalorder %v774, %v816
    %vm899 = vcmp.eq.s32.totalorder %v773, %v819
    %vm900 = vcmp.eq.s32.totalorder %v774, %v819
    %vm901 = vcmp.eq.s32.totalorder %v773, %v822
    %vm902 = vcmp.eq.s32.totalorder %v774, %v822
    %vm903 = vcmp.eq.s32.totalorder %v773, %v825
    %vm904 = vcmp.eq.s32.totalorder %v774, %v825
    %vm905 = vcmp.eq.s32.totalorder %v773, %v828
    %vm906 = vcmp.eq.s32.totalorder %v774, %v828
    %vm907 = vcmp.eq.s32.totalorder %v773, %v831
    %vm908 = vcmp.eq.s32.totalorder %v774, %v831
    %vm909 = vcmp.eq.s32.totalorder %v773, %v834
    %vm910 = vcmp.eq.s32.totalorder %v774, %v834
    %vm911 = vcmp.eq.s32.totalorder %v773, %v837
    %vm912 = vcmp.eq.s32.totalorder %v774, %v837
    %vm913 = vcmp.eq.s32.totalorder %v773, %v840
    %vm914 = vcmp.eq.s32.totalorder %v774, %v840
    %vm915 = vcmp.eq.s32.totalorder %v773, %v843
    %vm916 = vcmp.eq.s32.totalorder %v774, %v843
    %vm917 = vcmp.eq.s32.totalorder %v773, %v846
    %vm918 = vcmp.eq.s32.totalorder %v774, %v846
    %vm919 = vcmp.eq.s32.totalorder %v773, %v849
    %vm920 = vcmp.eq.s32.totalorder %v774, %v849
    %vm921 = vcmp.eq.s32.totalorder %v773, %v852
    %vm922 = vcmp.eq.s32.totalorder %v774, %v852
    %vm923 = vcmp.eq.s32.totalorder %v773, %v855
    %vm924 = vcmp.eq.s32.totalorder %v774, %v855
    %vm925 = vcmp.eq.s32.totalorder %v773, %v858
    %vm926 = vcmp.eq.s32.totalorder %v774, %v858
    %vm927 = vcmp.eq.s32.totalorder %v773, %v861
    %vm928 = vcmp.eq.s32.totalorder %v774, %v861
    %vm929 = vcmp.eq.s32.totalorder %v773, %v864
    %vm930 = vcmp.eq.s32.totalorder %v774, %v864
    %vm931 = vcmp.eq.s32.totalorder %v773, %v867
    %vm932 = vcmp.eq.s32.totalorder %v774, %v867
    %vm933 = vcmp.eq.s32.totalorder %v773, %v870
    %vm934 = vcmp.eq.s32.totalorder %v774, %v870
    %v935 = vsel %vm871, 1, 0
    %v936 = vsel %vm872, 1, 0
    %v937 = vsel %vm873, 1, 0
    %v938 = vsel %vm874, 1, 0
    %v939 = vsel %vm875, 1, 0
    %v940 = vsel %vm876, 1, 0
    %v941 = vsel %vm877, 1, 0
    %v942 = vsel %vm878, 1, 0
    %v943 = vsel %vm879, 1, 0
    %v944 = vsel %vm880, 1, 0
    %v945 = vsel %vm881, 1, 0
    %v946 = vsel %vm882, 1, 0
    %v947 = vsel %vm883, 1, 0
    %v948 = vsel %vm884, 1, 0
    %v949 = vsel %vm885, 1, 0
    %v950 = vsel %vm886, 1, 0
    %v951 = vsel %vm887, 1, 0
    %v952 = vsel %vm888, 1, 0
    %v953 = vsel %vm889, 1, 0
    %v954 = vsel %vm890, 1, 0
    %v955 = vsel %vm891, 1, 0
    %v956 = vsel %vm892, 1, 0
    %v957 = vsel %vm893, 1, 0
    %v958 = vsel %vm894, 1, 0
    %v959 = vsel %vm895, 1, 0
    %v960 = vsel %vm896, 1, 0
    %v961 = vsel %vm897, 1, 0
    %v962 = vsel %vm898, 1, 0
    %v963 = vsel %vm899, 1, 0
    %v964 = vsel %vm900, 1, 0
    %v965 = vsel %vm901, 1, 0
    %v966 = vsel %vm902, 1, 0
    %v967 = vsel %vm903, 1, 0
    %v968 = vsel %vm904, 1, 0
    %v969 = vsel %vm905, 1, 0
    %v970 = vsel %vm906, 1, 0
    %v971 = vsel %vm907, 1, 0
    %v972 = vsel %vm908, 1, 0
    %v973 = vsel %vm909, 1, 0
    %v974 = vsel %vm910, 1, 0
    %v975 = vsel %vm911, 1, 0
    %v976 = vsel %vm912, 1, 0
    %v977 = vsel %vm913, 1, 0
    %v978 = vsel %vm914, 1, 0
    %v979 = vsel %vm915, 1, 0
    %v980 = vsel %vm916, 1, 0
    %v981 = vsel %vm917, 1, 0
    %v982 = vsel %vm918, 1, 0
    %v983 = vsel %vm919, 1, 0
    %v984 = vsel %vm920, 1, 0
    %v985 = vsel %vm921, 1, 0
    %v986 = vsel %vm922, 1, 0
    %v987 = vsel %vm923, 1, 0
    %v988 = vsel %vm924, 1, 0
    %v989 = vsel %vm925, 1, 0
    %v990 = vsel %vm926, 1, 0
    %v991 = vsel %vm927, 1, 0
    %v992 = vsel %vm928, 1, 0
    %v993 = vsel %vm929, 1, 0
    %v994 = vsel %vm930, 1, 0
    %v995 = vsel %vm931, 1, 0
    %v996 = vsel %vm932, 1, 0
    %v997 = vsel %vm933, 1, 0
    %v998 = vsel %vm934, 1, 0
    %v999 = vcvt.s32.f32 %v935
    %v1000 = vcvt.s32.f32 %v936
    %v1001 = vcvt.s32.f32 %v937
    %v1002 = vcvt.s32.f32 %v938
    %v1003 = vcvt.s32.f32 %v939
    %v1004 = vcvt.s32.f32 %v940
    %v1005 = vcvt.s32.f32 %v941
    %v1006 = vcvt.s32.f32 %v942
    %v1007 = vcvt.s32.f32 %v943
    %v1008 = vcvt.s32.f32 %v944
    %v1009 = vcvt.s32.f32 %v945
    %v1010 = vcvt.s32.f32 %v946
    %v1011 = vcvt.s32.f32 %v947
    %v1012 = vcvt.s32.f32 %v948
    %v1013 = vcvt.s32.f32 %v949
    %v1014 = vcvt.s32.f32 %v950
    %v1015 = vcvt.s32.f32 %v951
    %v1016 = vcvt.s32.f32 %v952
    %v1017 = vcvt.s32.f32 %v953
    %v1018 = vcvt.s32.f32 %v954
    %v1019 = vcvt.s32.f32 %v955
    %v1020 = vcvt.s32.f32 %v956
    %v1021 = vcvt.s32.f32 %v957
    %v1022 = vcvt.s32.f32 %v958
    %v1023 = vcvt.s32.f32 %v959
    %v1024 = vcvt.s32.f32 %v960
    %v1025 = vcvt.s32.f32 %v961
    %v1026 = vcvt.s32.f32 %v962
    %v1027 = vcvt.s32.f32 %v963
    %v1028 = vcvt.s32.f32 %v964
    %v1029 = vcvt.s32.f32 %v965
    %v1030 = vcvt.s32.f32 %v966
    %v1031 = vcvt.s32.f32 %v967
    %v1032 = vcvt.s32.f32 %v968
    %v1033 = vcvt.s32.f32 %v969
    %v1034 = vcvt.s32.f32 %v970
    %v1035 = vcvt.s32.f32 %v971
    %v1036 = vcvt.s32.f32 %v972
    %v1037 = vcvt.s32.f32 %v973
    %v1038 = vcvt.s32.f32 %v974
    %v1039 = vcvt.s32.f32 %v975
    %v1040 = vcvt.s32.f32 %v976
    %v1041 = vcvt.s32.f32 %v977
    %v1042 = vcvt.s32.f32 %v978
    %v1043 = vcvt.s32.f32 %v979
    %v1044 = vcvt.s32.f32 %v980
    %v1045 = vcvt.s32.f32 %v981
    %v1046 = vcvt.s32.f32 %v982
    %v1047 = vcvt.s32.f32 %v983
    %v1048 = vcvt.s32.f32 %v984
    %v1049 = vcvt.s32.f32 %v985
    %v1050 = vcvt.s32.f32 %v986
    %v1051 = vcvt.s32.f32 %v987
    %v1052 = vcvt.s32.f32 %v988
    %v1053 = vcvt.s32.f32 %v989
    %v1054 = vcvt.s32.f32 %v990
    %v1055 = vcvt.s32.f32 %v991
    %v1056 = vcvt.s32.f32 %v992
    %v1057 = vcvt.s32.f32 %v993
    %v1058 = vcvt.s32.f32 %v994
    %v1059 = vcvt.s32.f32 %v995
    %v1060 = vcvt.s32.f32 %v996
    %v1061 = vcvt.s32.f32 %v997
    %v1062 = vcvt.s32.f32 %v998
    %v1063 = vpack.c.bf16 %v1001, %v999
    %v1064 = vpack.c.bf16 %v1002, %v1000
    %v1065 = vpack.c.bf16 %v1005, %v1003
    %v1066 = vpack.c.bf16 %v1006, %v1004
    %v1067 = vpack.c.bf16 %v1009, %v1007
    %v1068 = vpack.c.bf16 %v1010, %v1008
    %v1069 = vpack.c.bf16 %v1013, %v1011
    %v1070 = vpack.c.bf16 %v1014, %v1012
    %v1071 = vpack.c.bf16 %v1017, %v1015
    %v1072 = vpack.c.bf16 %v1018, %v1016
    %v1073 = vpack.c.bf16 %v1021, %v1019
    %v1074 = vpack.c.bf16 %v1022, %v1020
    %v1075 = vpack.c.bf16 %v1025, %v1023
    %v1076 = vpack.c.bf16 %v1026, %v1024
    %v1077 = vpack.c.bf16 %v1029, %v1027
    %v1078 = vpack.c.bf16 %v1030, %v1028
    %v1079 = vpack.c.bf16 %v1033, %v1031
    %v1080 = vpack.c.bf16 %v1034, %v1032
    %v1081 = vpack.c.bf16 %v1037, %v1035
    %v1082 = vpack.c.bf16 %v1038, %v1036
    %v1083 = vpack.c.bf16 %v1041, %v1039
    %v1084 = vpack.c.bf16 %v1042, %v1040
    %v1085 = vpack.c.bf16 %v1045, %v1043
    %v1086 = vpack.c.bf16 %v1046, %v1044
    %v1087 = vpack.c.bf16 %v1049, %v1047
    %v1088 = vpack.c.bf16 %v1050, %v1048
    %v1089 = vpack.c.bf16 %v1053, %v1051
    %v1090 = vpack.c.bf16 %v1054, %v1052
    %v1091 = vpack.c.bf16 %v1057, %v1055
    %v1092 = vpack.c.bf16 %v1058, %v1056
    %v1093 = vpack.c.bf16 %v1061, %v1059
    %v1094 = vpack.c.bf16 %v1062, %v1060
    %v1095 = vld [vmem:[%s3] sm:$0xf]
    %v1096 = vld [vmem:[%s3 + $0x4] sm:$0xf]
    %v1097 = vld [vmem:[%s3 + $0x8] sm:$0xf]
    %v1098 = vld [vmem:[%s3 + $0xc] sm:$0xf]
    %v1099 = vld [vmem:[%s3 + $0x10] sm:$0xf]
    %v1100 = vld [vmem:[%s3 + $0x14] sm:$0xf]
    %v1101 = vld [vmem:[%s3 + $0x18] sm:$0xf]
    %v1102 = vld [vmem:[%s3 + $0x1c] sm:$0xf]
    %v1103 = vld [vmem:[%s3 + $0x20] sm:$0xf]
    %v1104 = vld [vmem:[%s3 + $0x24] sm:$0xf]
    %v1105 = vld [vmem:[%s3 + $0x28] sm:$0xf]
    %v1106 = vld [vmem:[%s3 + $0x2c] sm:$0xf]
    %v1107 = vld [vmem:[%s3 + $0x30] sm:$0xf]
    %v1108 = vld [vmem:[%s3 + $0x34] sm:$0xf]
    %v1109 = vld [vmem:[%s3 + $0x38] sm:$0xf]
    %v1110 = vld [vmem:[%s3 + $0x3c] sm:$0xf]
    %v1111 = vld [vmem:[%s3 + $0x40] sm:$0xf]
    %v1112 = vld [vmem:[%s3 + $0x44] sm:$0xf]
    %v1113 = vld [vmem:[%s3 + $0x48] sm:$0xf]
    %v1114 = vld [vmem:[%s3 + $0x4c] sm:$0xf]
    %v1115 = vld [vmem:[%s3 + $0x50] sm:$0xf]
    %v1116 = vld [vmem:[%s3 + $0x54] sm:$0xf]
    %v1117 = vld [vmem:[%s3 + $0x58] sm:$0xf]
    %v1118 = vld [vmem:[%s3 + $0x5c] sm:$0xf]
    %v1119 = vld [vmem:[%s3 + $0x60] sm:$0xf]
    %v1120 = vld [vmem:[%s3 + $0x64] sm:$0xf]
    %v1121 = vld [vmem:[%s3 + $0x68] sm:$0xf]
    %v1122 = vld [vmem:[%s3 + $0x6c] sm:$0xf]
    %v1123 = vld [vmem:[%s3 + $0x70] sm:$0xf]
    %v1124 = vld [vmem:[%s3 + $0x74] sm:$0xf]
    %v1125 = vld [vmem:[%s3 + $0x78] sm:$0xf]
    %v1126 = vld [vmem:[%s3 + $0x7c] sm:$0xf]
    %v1127 = vld [vmem:[%s8] sm:$0xf]
    %v1128 = vld [vmem:[%s8 + $0x4] sm:$0xf]
    %v1129 = vld [vmem:[%s8 + $0x8] sm:$0xf]
    %v1130 = vld [vmem:[%s8 + $0xc] sm:$0xf]
    %v1131 = vld [vmem:[%s8 + $0x10] sm:$0xf]
    %v1132 = vld [vmem:[%s8 + $0x14] sm:$0xf]
    %v1133 = vld [vmem:[%s8 + $0x18] sm:$0xf]
    %v1134 = vld [vmem:[%s8 + $0x1c] sm:$0xf]
    %v1135 = vld [vmem:[%s8 + $0x20] sm:$0xf]
    %v1136 = vld [vmem:[%s8 + $0x24] sm:$0xf]
    %v1137 = vld [vmem:[%s8 + $0x28] sm:$0xf]
    %v1138 = vld [vmem:[%s8 + $0x2c] sm:$0xf]
    %v1139 = vld [vmem:[%s8 + $0x30] sm:$0xf]
    %v1140 = vld [vmem:[%s8 + $0x34] sm:$0xf]
    %v1141 = vld [vmem:[%s8 + $0x38] sm:$0xf]
    %v1142 = vld [vmem:[%s8 + $0x3c] sm:$0xf]
    %v1143 = vld [vmem:[#allocation3] sm:$0xf]
    %v1144 = vld [vmem:[#allocation3 + $0x4] sm:$0xf]
    %v1145 = vld [vmem:[#allocation3 + $0x8] sm:$0xf]
    %v1146 = vld [vmem:[#allocation3 + $0xc] sm:$0xf]
    %v1147 = vld [vmem:[#allocation3 + $0x10] sm:$0xf]
    %v1148 = vld [vmem:[#allocation3 + $0x14] sm:$0xf]
    %v1149 = vld [vmem:[#allocation3 + $0x18] sm:$0xf]
    %v1150 = vld [vmem:[#allocation3 + $0x1c] sm:$0xf]
    %v1151 = vld [vmem:[#allocation3 + $0x20] sm:$0xf]
    %v1152 = vld [vmem:[#allocation3 + $0x24] sm:$0xf]
    %v1153 = vld [vmem:[#allocation3 + $0x28] sm:$0xf]
    %v1154 = vld [vmem:[#allocation3 + $0x2c] sm:$0xf]
    %v1155 = vld [vmem:[#allocation3 + $0x30] sm:$0xf]
    %v1156 = vld [vmem:[#allocation3 + $0x34] sm:$0xf]
    %v1157 = vld [vmem:[#allocation3 + $0x38] sm:$0xf]
    %v1158 = vld [vmem:[#allocation3 + $0x3c] sm:$0xf]
    %v1159 = vld [vmem:[#allocation3 + $0x40] sm:$0xf]
    %v1160 = vld [vmem:[#allocation3 + $0x44] sm:$0xf]
    %v1161 = vld [vmem:[#allocation3 + $0x48] sm:$0xf]
    %v1162 = vld [vmem:[#allocation3 + $0x4c] sm:$0xf]
    %v1163 = vld [vmem:[#allocation3 + $0x50] sm:$0xf]
    %v1164 = vld [vmem:[#allocation3 + $0x54] sm:$0xf]
    %v1165 = vld [vmem:[#allocation3 + $0x58] sm:$0xf]
    %v1166 = vld [vmem:[#allocation3 + $0x5c] sm:$0xf]
    %v1167 = vld [vmem:[#allocation3 + $0x60] sm:$0xf]
    %v1168 = vld [vmem:[#allocation3 + $0x64] sm:$0xf]
    %v1169 = vld [vmem:[#allocation3 + $0x68] sm:$0xf]
    %v1170 = vld [vmem:[#allocation3 + $0x6c] sm:$0xf]
    %v1171 = vld [vmem:[#allocation3 + $0x70] sm:$0xf]
    %v1172 = vld [vmem:[#allocation3 + $0x74] sm:$0xf]
    %v1173 = vld [vmem:[#allocation3 + $0x78] sm:$0xf]
    %v1174 = vld [vmem:[#allocation3 + $0x7c] sm:$0xf]
    %v1207 = vunpack.c.l.b16 %v1143
    %v1208 = vunpack.c.l.b16 %v1144
    %v1209 = vunpack.c.l.b16 %v1145
    %v1210 = vunpack.c.l.b16 %v1146
    %v1211 = vunpack.c.l.b16 %v1147
    %v1212 = vunpack.c.l.b16 %v1148
    %v1213 = vunpack.c.l.b16 %v1149
    %v1214 = vunpack.c.l.b16 %v1150
    %v1215 = vunpack.c.l.b16 %v1151
    %v1216 = vunpack.c.l.b16 %v1152
    %v1217 = vunpack.c.l.b16 %v1153
    %v1218 = vunpack.c.l.b16 %v1154
    %v1219 = vunpack.c.l.b16 %v1155
    %v1220 = vunpack.c.l.b16 %v1156
    %v1221 = vunpack.c.l.b16 %v1157
    %v1222 = vunpack.c.l.b16 %v1158
    %v1223 = vunpack.c.l.b16 %v1159
    %v1224 = vunpack.c.l.b16 %v1160
    %v1225 = vunpack.c.l.b16 %v1161
    %v1226 = vunpack.c.l.b16 %v1162
    %v1227 = vunpack.c.l.b16 %v1163
    %v1228 = vunpack.c.l.b16 %v1164
    %v1229 = vunpack.c.l.b16 %v1165
    %v1230 = vunpack.c.l.b16 %v1166
    %v1231 = vunpack.c.l.b16 %v1167
    %v1232 = vunpack.c.l.b16 %v1168
    %v1233 = vunpack.c.l.b16 %v1169
    %v1234 = vunpack.c.l.b16 %v1170
    %v1235 = vunpack.c.l.b16 %v1171
    %v1236 = vunpack.c.l.b16 %v1172
    %v1237 = vunpack.c.l.b16 %v1173
    %v1238 = vunpack.c.l.b16 %v1174
    %v1239 = vpack.c.b16 %v1208, %v1207
    %v1240 = vpack.c.b16 %v1210, %v1209
    %v1241 = vpack.c.b16 %v1212, %v1211
    %v1242 = vpack.c.b16 %v1214, %v1213
    %v1243 = vpack.c.b16 %v1216, %v1215
    %v1244 = vpack.c.b16 %v1218, %v1217
    %v1245 = vpack.c.b16 %v1220, %v1219
    %v1246 = vpack.c.b16 %v1222, %v1221
    %v1247 = vpack.c.b16 %v1224, %v1223
    %v1248 = vpack.c.b16 %v1226, %v1225
    %v1249 = vpack.c.b16 %v1228, %v1227
    %v1250 = vpack.c.b16 %v1230, %v1229
    %v1251 = vpack.c.b16 %v1232, %v1231
    %v1252 = vpack.c.b16 %v1234, %v1233
    %v1253 = vpack.c.b16 %v1236, %v1235
    %v1254 = vpack.c.b16 %v1238, %v1237
    %1271 = vmatpush.bf16.msra.mxu0 %v1246
    %1272 = vmatpush.bf16.msra.mxu0 %v1245
    %1273 = vmatpush.bf16.msra.mxu0 %v1244
    %1274 = vmatpush.bf16.msra.mxu0 %v1243
    %1275 = vmatpush.bf16.msra.mxu0 %v1242
    %1276 = vmatpush.bf16.msra.mxu0 %v1241
    %1277 = vmatpush.bf16.msra.mxu0 %v1240
    %1278 = vmatpush.bf16.msra.mxu0 %v1239
    %1279 = vmatmul.bf16.gmra.mxu0 %v1063
    %v1280 = vpop.f32.mrf.mxu0
    %v1281 = vadd.f32 0.0, %v1280
    %v1282 = vpop.f32.mrf.mxu0
    %v1283 = vadd.f32 0.0, %v1282
    %1284 = vmatmul.bf16.gmra.mxu0 %v1065
    %v1285 = vpop.f32.mrf.mxu0
    %v1286 = vadd.f32 0.0, %v1285
    %v1287 = vpop.f32.mrf.mxu0
    %v1288 = vadd.f32 0.0, %v1287
    %1289 = vmatmul.bf16.gmra.mxu0 %v1067
    %v1290 = vpop.f32.mrf.mxu0
    %v1291 = vadd.f32 0.0, %v1290
    %v1292 = vpop.f32.mrf.mxu0
    %v1293 = vadd.f32 0.0, %v1292
    %1294 = vmatmul.bf16.gmra.mxu0 %v1069
    %v1295 = vpop.f32.mrf.mxu0
    %v1296 = vadd.f32 0.0, %v1295
    %v1297 = vpop.f32.mrf.mxu0
    %v1298 = vadd.f32 0.0, %v1297
    %1299 = vmatmul.bf16.gmra.mxu0 %v1071
    %v1300 = vpop.f32.mrf.mxu0
    %v1301 = vadd.f32 0.0, %v1300
    %v1302 = vpop.f32.mrf.mxu0
    %v1303 = vadd.f32 0.0, %v1302
    %1304 = vmatmul.bf16.gmra.mxu0 %v1073
    %v1305 = vpop.f32.mrf.mxu0
    %v1306 = vadd.f32 0.0, %v1305
    %v1307 = vpop.f32.mrf.mxu0
    %v1308 = vadd.f32 0.0, %v1307
    %1309 = vmatmul.bf16.gmra.mxu0 %v1075
    %v1310 = vpop.f32.mrf.mxu0
    %v1311 = vadd.f32 0.0, %v1310
    %v1312 = vpop.f32.mrf.mxu0
    %v1313 = vadd.f32 0.0, %v1312
    %1314 = vmatmul.bf16.gmra.mxu0 %v1077
    %v1315 = vpop.f32.mrf.mxu0
    %v1316 = vadd.f32 0.0, %v1315
    %v1317 = vpop.f32.mrf.mxu0
    %v1318 = vadd.f32 0.0, %v1317
    %1319 = vmatmul.bf16.gmra.mxu0 %v1079
    %v1320 = vpop.f32.mrf.mxu0
    %v1321 = vadd.f32 0.0, %v1320
    %v1322 = vpop.f32.mrf.mxu0
    %v1323 = vadd.f32 0.0, %v1322
    %1324 = vmatmul.bf16.gmra.mxu0 %v1081
    %v1325 = vpop.f32.mrf.mxu0
    %v1326 = vadd.f32 0.0, %v1325
    %v1327 = vpop.f32.mrf.mxu0
    %v1328 = vadd.f32 0.0, %v1327
    %1329 = vmatmul.bf16.gmra.mxu0 %v1083
    %v1330 = vpop.f32.mrf.mxu0
    %v1331 = vadd.f32 0.0, %v1330
    %v1332 = vpop.f32.mrf.mxu0
    %v1333 = vadd.f32 0.0, %v1332
    %1334 = vmatmul.bf16.gmra.mxu0 %v1085
    %v1335 = vpop.f32.mrf.mxu0
    %v1336 = vadd.f32 0.0, %v1335
    %v1337 = vpop.f32.mrf.mxu0
    %v1338 = vadd.f32 0.0, %v1337
    %1339 = vmatmul.bf16.gmra.mxu0 %v1087
    %v1340 = vpop.f32.mrf.mxu0
    %v1341 = vadd.f32 0.0, %v1340
    %v1342 = vpop.f32.mrf.mxu0
    %v1343 = vadd.f32 0.0, %v1342
    %1344 = vmatmul.bf16.gmra.mxu0 %v1089
    %v1345 = vpop.f32.mrf.mxu0
    %v1346 = vadd.f32 0.0, %v1345
    %v1347 = vpop.f32.mrf.mxu0
    %v1348 = vadd.f32 0.0, %v1347
    %1349 = vmatmul.bf16.gmra.mxu0 %v1091
    %v1350 = vpop.f32.mrf.mxu0
    %v1351 = vadd.f32 0.0, %v1350
    %v1352 = vpop.f32.mrf.mxu0
    %v1353 = vadd.f32 0.0, %v1352
    %1354 = vmatmul.bf16.gmra.mxu0 %v1093
    %v1355 = vpop.f32.mrf.mxu0
    %v1356 = vadd.f32 0.0, %v1355
    %v1357 = vpop.f32.mrf.mxu0
    %v1358 = vadd.f32 0.0, %v1357
    %1359 = vdwg.mxu0
    %1360 = vmatpush.bf16.msra.mxu0 %v1254
    %1361 = vmatpush.bf16.msra.mxu0 %v1253
    %1362 = vmatpush.bf16.msra.mxu0 %v1252
    %1363 = vmatpush.bf16.msra.mxu0 %v1251
    %1364 = vmatpush.bf16.msra.mxu0 %v1250
    %1365 = vmatpush.bf16.msra.mxu0 %v1249
    %1366 = vmatpush.bf16.msra.mxu0 %v1248
    %1367 = vmatpush.bf16.msra.mxu0 %v1247
    %1368 = vmatmul.bf16.gmra.mxu0 %v1064
    %v1369 = vpop.f32.mrf.mxu0
    %v1370 = vadd.f32 %v1281, %v1369
    %v1371 = vpop.f32.mrf.mxu0
    %v1372 = vadd.f32 %v1283, %v1371
    %1373 = vmatmul.bf16.gmra.mxu0 %v1066
    %v1374 = vpop.f32.mrf.mxu0
    %v1375 = vadd.f32 %v1286, %v1374
    %v1376 = vpop.f32.mrf.mxu0
    %v1377 = vadd.f32 %v1288, %v1376
    %1378 = vmatmul.bf16.gmra.mxu0 %v1068
    %v1379 = vpop.f32.mrf.mxu0
    %v1380 = vadd.f32 %v1291, %v1379
    %v1381 = vpop.f32.mrf.mxu0
    %v1382 = vadd.f32 %v1293, %v1381
    %1383 = vmatmul.bf16.gmra.mxu0 %v1070
    %v1384 = vpop.f32.mrf.mxu0
    %v1385 = vadd.f32 %v1296, %v1384
    %v1386 = vpop.f32.mrf.mxu0
    %v1387 = vadd.f32 %v1298, %v1386
    %1388 = vmatmul.bf16.gmra.mxu0 %v1072
    %v1389 = vpop.f32.mrf.mxu0
    %v1390 = vadd.f32 %v1301, %v1389
    %v1391 = vpop.f32.mrf.mxu0
    %v1392 = vadd.f32 %v1303, %v1391
    %1393 = vmatmul.bf16.gmra.mxu0 %v1074
    %v1394 = vpop.f32.mrf.mxu0
    %v1395 = vadd.f32 %v1306, %v1394
    %v1396 = vpop.f32.mrf.mxu0
    %v1397 = vadd.f32 %v1308, %v1396
    %1398 = vmatmul.bf16.gmra.mxu0 %v1076
    %v1399 = vpop.f32.mrf.mxu0
    %v1400 = vadd.f32 %v1311, %v1399
    %v1401 = vpop.f32.mrf.mxu0
    %v1402 = vadd.f32 %v1313, %v1401
    %1403 = vmatmul.bf16.gmra.mxu0 %v1078
    %v1404 = vpop.f32.mrf.mxu0
    %v1405 = vadd.f32 %v1316, %v1404
    %v1406 = vpop.f32.mrf.mxu0
    %v1407 = vadd.f32 %v1318, %v1406
    %1408 = vmatmul.bf16.gmra.mxu0 %v1080
    %v1409 = vpop.f32.mrf.mxu0
    %v1410 = vadd.f32 %v1321, %v1409
    %v1411 = vpop.f32.mrf.mxu0
    %v1412 = vadd.f32 %v1323, %v1411
    %1413 = vmatmul.bf16.gmra.mxu0 %v1082
    %v1414 = vpop.f32.mrf.mxu0
    %v1415 = vadd.f32 %v1326, %v1414
    %v1416 = vpop.f32.mrf.mxu0
    %v1417 = vadd.f32 %v1328, %v1416
    %1418 = vmatmul.bf16.gmra.mxu0 %v1084
    %v1419 = vpop.f32.mrf.mxu0
    %v1420 = vadd.f32 %v1331, %v1419
    %v1421 = vpop.f32.mrf.mxu0
    %v1422 = vadd.f32 %v1333, %v1421
    %1423 = vmatmul.bf16.gmra.mxu0 %v1086
    %v1424 = vpop.f32.mrf.mxu0
    %v1425 = vadd.f32 %v1336, %v1424
    %v1426 = vpop.f32.mrf.mxu0
    %v1427 = vadd.f32 %v1338, %v1426
    %1428 = vmatmul.bf16.gmra.mxu0 %v1088
    %v1429 = vpop.f32.mrf.mxu0
    %v1430 = vadd.f32 %v1341, %v1429
    %v1431 = vpop.f32.mrf.mxu0
    %v1432 = vadd.f32 %v1343, %v1431
    %1433 = vmatmul.bf16.gmra.mxu0 %v1090
    %v1434 = vpop.f32.mrf.mxu0
    %v1435 = vadd.f32 %v1346, %v1434
    %v1436 = vpop.f32.mrf.mxu0
    %v1437 = vadd.f32 %v1348, %v1436
    %1438 = vmatmul.bf16.gmra.mxu0 %v1092
    %v1439 = vpop.f32.mrf.mxu0
    %v1440 = vadd.f32 %v1351, %v1439
    %v1441 = vpop.f32.mrf.mxu0
    %v1442 = vadd.f32 %v1353, %v1441
    %1443 = vmatmul.bf16.gmra.mxu0 %v1094
    %v1444 = vpop.f32.mrf.mxu0
    %v1445 = vadd.f32 %v1356, %v1444
    %v1446 = vpop.f32.mrf.mxu0
    %v1447 = vadd.f32 %v1358, %v1446
    %1448 = vdwg.mxu0
    %v1481 = vunpack.c.l.b16 %v1095
    %v1482 = vunpack.c.l.b16 %v1096
    %v1483 = vunpack.c.l.b16 %v1097
    %v1484 = vunpack.c.l.b16 %v1098
    %v1485 = vunpack.c.l.b16 %v1099
    %v1486 = vunpack.c.l.b16 %v1100
    %v1487 = vunpack.c.l.b16 %v1101
    %v1488 = vunpack.c.l.b16 %v1102
    %v1489 = vunpack.c.l.b16 %v1103
    %v1490 = vunpack.c.l.b16 %v1104
    %v1491 = vunpack.c.l.b16 %v1105
    %v1492 = vunpack.c.l.b16 %v1106
    %v1493 = vunpack.c.l.b16 %v1107
    %v1494 = vunpack.c.l.b16 %v1108
    %v1495 = vunpack.c.l.b16 %v1109
    %v1496 = vunpack.c.l.b16 %v1110
    %v1497 = vunpack.c.l.b16 %v1111
    %v1498 = vunpack.c.l.b16 %v1112
    %v1499 = vunpack.c.l.b16 %v1113
    %v1500 = vunpack.c.l.b16 %v1114
    %v1501 = vunpack.c.l.b16 %v1115
    %v1502 = vunpack.c.l.b16 %v1116
    %v1503 = vunpack.c.l.b16 %v1117
    %v1504 = vunpack.c.l.b16 %v1118
    %v1505 = vunpack.c.l.b16 %v1119
    %v1506 = vunpack.c.l.b16 %v1120
    %v1507 = vunpack.c.l.b16 %v1121
    %v1508 = vunpack.c.l.b16 %v1122
    %v1509 = vunpack.c.l.b16 %v1123
    %v1510 = vunpack.c.l.b16 %v1124
    %v1511 = vunpack.c.l.b16 %v1125
    %v1512 = vunpack.c.l.b16 %v1126
    %v1513 = vpack.c.b16 %v1482, %v1481
    %v1514 = vpack.c.b16 %v1484, %v1483
    %v1515 = vpack.c.b16 %v1486, %v1485
    %v1516 = vpack.c.b16 %v1488, %v1487
    %v1517 = vpack.c.b16 %v1490, %v1489
    %v1518 = vpack.c.b16 %v1492, %v1491
    %v1519 = vpack.c.b16 %v1494, %v1493
    %v1520 = vpack.c.b16 %v1496, %v1495
    %v1521 = vpack.c.b16 %v1498, %v1497
    %v1522 = vpack.c.b16 %v1500, %v1499
    %v1523 = vpack.c.b16 %v1502, %v1501
    %v1524 = vpack.c.b16 %v1504, %v1503
    %v1525 = vpack.c.b16 %v1506, %v1505
    %v1526 = vpack.c.b16 %v1508, %v1507
    %v1527 = vpack.c.b16 %v1510, %v1509
    %v1528 = vpack.c.b16 %v1512, %v1511
    %v1561 = vunpack.c.l.b16 %v1127
    %v1562 = vunpack.c.l.b16 %v1128
    %v1563 = vunpack.c.l.b16 %v1129
    %v1564 = vunpack.c.l.b16 %v1130
    %v1565 = vunpack.c.l.b16 %v1131
    %v1566 = vunpack.c.l.b16 %v1132
    %v1567 = vunpack.c.l.b16 %v1133
    %v1568 = vunpack.c.l.b16 %v1134
    %v1569 = vunpack.c.l.b16 %v1135
    %v1570 = vunpack.c.l.b16 %v1136
    %v1571 = vunpack.c.l.b16 %v1137
    %v1572 = vunpack.c.l.b16 %v1138
    %v1573 = vunpack.c.l.b16 %v1139
    %v1574 = vunpack.c.l.b16 %v1140
    %v1575 = vunpack.c.l.b16 %v1141
    %v1576 = vunpack.c.l.b16 %v1142
    %v1577 = vpack.c.b16 %v1562, %v1561
    %v1578 = vpack.c.b16 %v1564, %v1563
    %v1579 = vpack.c.b16 %v1566, %v1565
    %v1580 = vpack.c.b16 %v1568, %v1567
    %v1581 = vpack.c.b16 %v1570, %v1569
    %v1582 = vpack.c.b16 %v1572, %v1571
    %v1583 = vpack.c.b16 %v1574, %v1573
    %v1584 = vpack.c.b16 %v1576, %v1575
    %1593 = vmatpush.bf16.msra.mxu0 %v1584
    %1594 = vmatpush.bf16.msra.mxu0 %v1583
    %1595 = vmatpush.bf16.msra.mxu0 %v1582
    %1596 = vmatpush.bf16.msra.mxu0 %v1581
    %1597 = vmatpush.bf16.msra.mxu0 %v1580
    %1598 = vmatpush.bf16.msra.mxu0 %v1579
    %1599 = vmatpush.bf16.msra.mxu0 %v1578
    %1600 = vmatpush.bf16.msra.mxu0 %v1577
    %1601 = vmatmul.bf16.gmra.mxu0 %v1513
    %v1602 = vpop.f32.mrf.mxu0
    %v1603 = vadd.f32 %v1370, %v1602
    %v1604 = vpop.f32.mrf.mxu0
    %v1605 = vadd.f32 %v1372, %v1604
    %1606 = vmatmul.bf16.gmra.mxu0 %v1514
    %v1607 = vpop.f32.mrf.mxu0
    %v1608 = vadd.f32 %v1375, %v1607
    %v1609 = vpop.f32.mrf.mxu0
    %v1610 = vadd.f32 %v1377, %v1609
    %1611 = vmatmul.bf16.gmra.mxu0 %v1515
    %v1612 = vpop.f32.mrf.mxu0
    %v1613 = vadd.f32 %v1380, %v1612
    %v1614 = vpop.f32.mrf.mxu0
    %v1615 = vadd.f32 %v1382, %v1614
    %1616 = vmatmul.bf16.gmra.mxu0 %v1516
    %v1617 = vpop.f32.mrf.mxu0
    %v1618 = vadd.f32 %v1385, %v1617
    %v1619 = vpop.f32.mrf.mxu0
    %v1620 = vadd.f32 %v1387, %v1619
    %1621 = vmatmul.bf16.gmra.mxu0 %v1517
    %v1622 = vpop.f32.mrf.mxu0
    %v1623 = vadd.f32 %v1390, %v1622
    %v1624 = vpop.f32.mrf.mxu0
    %v1625 = vadd.f32 %v1392, %v1624
    %1626 = vmatmul.bf16.gmra.mxu0 %v1518
    %v1627 = vpop.f32.mrf.mxu0
    %v1628 = vadd.f32 %v1395, %v1627
    %v1629 = vpop.f32.mrf.mxu0
    %v1630 = vadd.f32 %v1397, %v1629
    %1631 = vmatmul.bf16.gmra.mxu0 %v1519
    %v1632 = vpop.f32.mrf.mxu0
    %v1633 = vadd.f32 %v1400, %v1632
    %v1634 = vpop.f32.mrf.mxu0
    %v1635 = vadd.f32 %v1402, %v1634
    %1636 = vmatmul.bf16.gmra.mxu0 %v1520
    %v1637 = vpop.f32.mrf.mxu0
    %v1638 = vadd.f32 %v1405, %v1637
    %v1639 = vpop.f32.mrf.mxu0
    %v1640 = vadd.f32 %v1407, %v1639
    %1641 = vmatmul.bf16.gmra.mxu0 %v1521
    %v1642 = vpop.f32.mrf.mxu0
    %v1643 = vadd.f32 %v1410, %v1642
    %v1644 = vpop.f32.mrf.mxu0
    %v1645 = vadd.f32 %v1412, %v1644
    %1646 = vmatmul.bf16.gmra.mxu0 %v1522
    %v1647 = vpop.f32.mrf.mxu0
    %v1648 = vadd.f32 %v1415, %v1647
    %v1649 = vpop.f32.mrf.mxu0
    %v1650 = vadd.f32 %v1417, %v1649
    %1651 = vmatmul.bf16.gmra.mxu0 %v1523
    %v1652 = vpop.f32.mrf.mxu0
    %v1653 = vadd.f32 %v1420, %v1652
    %v1654 = vpop.f32.mrf.mxu0
    %v1655 = vadd.f32 %v1422, %v1654
    %1656 = vmatmul.bf16.gmra.mxu0 %v1524
    %v1657 = vpop.f32.mrf.mxu0
    %v1658 = vadd.f32 %v1425, %v1657
    %v1659 = vpop.f32.mrf.mxu0
    %v1660 = vadd.f32 %v1427, %v1659
    %1661 = vmatmul.bf16.gmra.mxu0 %v1525
    %v1662 = vpop.f32.mrf.mxu0
    %v1663 = vadd.f32 %v1430, %v1662
    %v1664 = vpop.f32.mrf.mxu0
    %v1665 = vadd.f32 %v1432, %v1664
    %1666 = vmatmul.bf16.gmra.mxu0 %v1526
    %v1667 = vpop.f32.mrf.mxu0
    %v1668 = vadd.f32 %v1435, %v1667
    %v1669 = vpop.f32.mrf.mxu0
    %v1670 = vadd.f32 %v1437, %v1669
    %1671 = vmatmul.bf16.gmra.mxu0 %v1527
    %v1672 = vpop.f32.mrf.mxu0
    %v1673 = vadd.f32 %v1440, %v1672
    %v1674 = vpop.f32.mrf.mxu0
    %v1675 = vadd.f32 %v1442, %v1674
    %1676 = vmatmul.bf16.gmra.mxu0 %v1528
    %v1677 = vpop.f32.mrf.mxu0
    %v1678 = vadd.f32 %v1445, %v1677
    %v1679 = vpop.f32.mrf.mxu0
    %v1680 = vadd.f32 %v1447, %v1679
    %1681 = vdwg.mxu0
    %v1682 = vld [vmem:[%s10] sm:$0x1]
    %v1684 = vperm.slane %v1682, 0
    %v1686 = vadd.f32 %v1603, %v1684
    %v1687 = vadd.f32 %v1605, %v1684
    %v1688 = vadd.f32 %v1608, %v1684
    %v1689 = vadd.f32 %v1610, %v1684
    %v1690 = vadd.f32 %v1613, %v1684
    %v1691 = vadd.f32 %v1615, %v1684
    %v1692 = vadd.f32 %v1618, %v1684
    %v1693 = vadd.f32 %v1620, %v1684
    %v1694 = vadd.f32 %v1623, %v1684
    %v1695 = vadd.f32 %v1625, %v1684
    %v1696 = vadd.f32 %v1628, %v1684
    %v1697 = vadd.f32 %v1630, %v1684
    %v1698 = vadd.f32 %v1633, %v1684
    %v1699 = vadd.f32 %v1635, %v1684
    %v1700 = vadd.f32 %v1638, %v1684
    %v1701 = vadd.f32 %v1640, %v1684
    %v1702 = vadd.f32 %v1643, %v1684
    %v1703 = vadd.f32 %v1645, %v1684
    %v1704 = vadd.f32 %v1648, %v1684
    %v1705 = vadd.f32 %v1650, %v1684
    %v1706 = vadd.f32 %v1653, %v1684
    %v1707 = vadd.f32 %v1655, %v1684
    %v1708 = vadd.f32 %v1658, %v1684
    %v1709 = vadd.f32 %v1660, %v1684
    %v1710 = vadd.f32 %v1663, %v1684
    %v1711 = vadd.f32 %v1665, %v1684
    %v1712 = vadd.f32 %v1668, %v1684
    %v1713 = vadd.f32 %v1670, %v1684
    %v1714 = vadd.f32 %v1673, %v1684
    %v1715 = vadd.f32 %v1675, %v1684
    %v1716 = vadd.f32 %v1678, %v1684
    %v1717 = vadd.f32 %v1680, %v1684
    %v1718 = vsub.f32 0.0, %v1686
    %v1719 = vsub.f32 0.0, %v1687
    %v1720 = vsub.f32 0.0, %v1688
    %v1721 = vsub.f32 0.0, %v1689
    %v1722 = vsub.f32 0.0, %v1690
    %v1723 = vsub.f32 0.0, %v1691
    %v1724 = vsub.f32 0.0, %v1692
    %v1725 = vsub.f32 0.0, %v1693
    %v1726 = vsub.f32 0.0, %v1694
    %v1727 = vsub.f32 0.0, %v1695
    %v1728 = vsub.f32 0.0, %v1696
    %v1729 = vsub.f32 0.0, %v1697
    %v1730 = vsub.f32 0.0, %v1698
    %v1731 = vsub.f32 0.0, %v1699
    %v1732 = vsub.f32 0.0, %v1700
    %v1733 = vsub.f32 0.0, %v1701
    %v1734 = vsub.f32 0.0, %v1702
    %v1735 = vsub.f32 0.0, %v1703
    %v1736 = vsub.f32 0.0, %v1704
    %v1737 = vsub.f32 0.0, %v1705
    %v1738 = vsub.f32 0.0, %v1706
    %v1739 = vsub.f32 0.0, %v1707
    %v1740 = vsub.f32 0.0, %v1708
    %v1741 = vsub.f32 0.0, %v1709
    %v1742 = vsub.f32 0.0, %v1710
    %v1743 = vsub.f32 0.0, %v1711
    %v1744 = vsub.f32 0.0, %v1712
    %v1745 = vsub.f32 0.0, %v1713
    %v1746 = vsub.f32 0.0, %v1714
    %v1747 = vsub.f32 0.0, %v1715
    %v1748 = vsub.f32 0.0, %v1716
    %v1749 = vsub.f32 0.0, %v1717
    %v1750 = vmul.f32 %v1718, 1.442695
    %v1751 = vpow.pop %v1750
    %v1752 = vmul.f32 %v1719, 1.442695
    %v1753 = vpow.pop %v1752
    %v1754 = vmul.f32 %v1720, 1.442695
    %v1755 = vpow.pop %v1754
    %v1756 = vmul.f32 %v1721, 1.442695
    %v1757 = vpow.pop %v1756
    %v1758 = vmul.f32 %v1722, 1.442695
    %v1759 = vpow.pop %v1758
    %v1760 = vmul.f32 %v1723, 1.442695
    %v1761 = vpow.pop %v1760
    %v1762 = vmul.f32 %v1724, 1.442695
    %v1763 = vpow.pop %v1762
    %v1764 = vmul.f32 %v1725, 1.442695
    %v1765 = vpow.pop %v1764
    %v1766 = vmul.f32 %v1726, 1.442695
    %v1767 = vpow.pop %v1766
    %v1768 = vmul.f32 %v1727, 1.442695
    %v1769 = vpow.pop %v1768
    %v1770 = vmul.f32 %v1728, 1.442695
    %v1771 = vpow.pop %v1770
    %v1772 = vmul.f32 %v1729, 1.442695
    %v1773 = vpow.pop %v1772
    %v1774 = vmul.f32 %v1730, 1.442695
    %v1775 = vpow.pop %v1774
    %v1776 = vmul.f32 %v1731, 1.442695
    %v1777 = vpow.pop %v1776
    %v1778 = vmul.f32 %v1732, 1.442695
    %v1779 = vpow.pop %v1778
    %v1780 = vmul.f32 %v1733, 1.442695
    %v1781 = vpow.pop %v1780
    %v1782 = vmul.f32 %v1734, 1.442695
    %v1783 = vpow.pop %v1782
    %v1784 = vmul.f32 %v1735, 1.442695
    %v1785 = vpow.pop %v1784
    %v1786 = vmul.f32 %v1736, 1.442695
    %v1787 = vpow.pop %v1786
    %v1788 = vmul.f32 %v1737, 1.442695
    %v1789 = vpow.pop %v1788
    %v1790 = vmul.f32 %v1738, 1.442695
    %v1791 = vpow.pop %v1790
    %v1792 = vmul.f32 %v1739, 1.442695
    %v1793 = vpow.pop %v1792
    %v1794 = vmul.f32 %v1740, 1.442695
    %v1795 = vpow.pop %v1794
    %v1796 = vmul.f32 %v1741, 1.442695
    %v1797 = vpow.pop %v1796
    %v1798 = vmul.f32 %v1742, 1.442695
    %v1799 = vpow.pop %v1798
    %v1800 = vmul.f32 %v1743, 1.442695
    %v1801 = vpow.pop %v1800
    %v1802 = vmul.f32 %v1744, 1.442695
    %v1803 = vpow.pop %v1802
    %v1804 = vmul.f32 %v1745, 1.442695
    %v1805 = vpow.pop %v1804
    %v1806 = vmul.f32 %v1746, 1.442695
    %v1807 = vpow.pop %v1806
    %v1808 = vmul.f32 %v1747, 1.442695
    %v1809 = vpow.pop %v1808
    %v1810 = vmul.f32 %v1748, 1.442695
    %v1811 = vpow.pop %v1810
    %v1812 = vmul.f32 %v1749, 1.442695
    %v1813 = vpow.pop %v1812
    %v1814 = vadd.f32 %v1751, 1.0
    %v1815 = vadd.f32 %v1753, 1.0
    %v1816 = vadd.f32 %v1755, 1.0
    %v1817 = vadd.f32 %v1757, 1.0
    %v1818 = vadd.f32 %v1759, 1.0
    %v1819 = vadd.f32 %v1761, 1.0
    %v1820 = vadd.f32 %v1763, 1.0
    %v1821 = vadd.f32 %v1765, 1.0
    %v1822 = vadd.f32 %v1767, 1.0
    %v1823 = vadd.f32 %v1769, 1.0
    %v1824 = vadd.f32 %v1771, 1.0
    %v1825 = vadd.f32 %v1773, 1.0
    %v1826 = vadd.f32 %v1775, 1.0
    %v1827 = vadd.f32 %v1777, 1.0
    %v1828 = vadd.f32 %v1779, 1.0
    %v1829 = vadd.f32 %v1781, 1.0
    %v1830 = vadd.f32 %v1783, 1.0
    %v1831 = vadd.f32 %v1785, 1.0
    %v1832 = vadd.f32 %v1787, 1.0
    %v1833 = vadd.f32 %v1789, 1.0
    %v1834 = vadd.f32 %v1791, 1.0
    %v1835 = vadd.f32 %v1793, 1.0
    %v1836 = vadd.f32 %v1795, 1.0
    %v1837 = vadd.f32 %v1797, 1.0
    %v1838 = vadd.f32 %v1799, 1.0
    %v1839 = vadd.f32 %v1801, 1.0
    %v1840 = vadd.f32 %v1803, 1.0
    %v1841 = vadd.f32 %v1805, 1.0
    %v1842 = vadd.f32 %v1807, 1.0
    %v1843 = vadd.f32 %v1809, 1.0
    %v1844 = vadd.f32 %v1811, 1.0
    %v1845 = vadd.f32 %v1813, 1.0
    %v1846 = vrcp.pop %v1814
    %v1847 = vmul.f32 %v1814, %v1846
    %v1848 = vsub.f32 1.0, %v1847
    %v1849 = vmul.f32 %v1846, %v1848
    %v1850 = vadd.f32 %v1846, %v1849
    %vm1851 = vweird.f32 %v1814
    %vm1852 = vweird.f32 %v1846
    %vm1853 = vmor %vm1851, %vm1852
    %v1854 = vsel %vm1853, %v1846, %v1850
    %v1855 = vand.u32 2147483647, %v1814
    %vm1856 = vcmp.eq.f32.partialorder %v1855, 8.507059e+37
    %v1857 = vand.u32 %v1814, 2147483648
    %v1858 = vor.u32 1.1754944e-38, %v1857
    %v1859 = vsel %vm1856, %v1858, %v1854
    %v1860 = vmul.f32 1.0, %v1859
    %v1861 = vrcp.pop %v1815
    %v1862 = vmul.f32 %v1815, %v1861
    %v1863 = vsub.f32 1.0, %v1862
    %v1864 = vmul.f32 %v1861, %v1863
    %v1865 = vadd.f32 %v1861, %v1864
    %vm1866 = vweird.f32 %v1815
    %vm1867 = vweird.f32 %v1861
    %vm1868 = vmor %vm1866, %vm1867
    %v1869 = vsel %vm1868, %v1861, %v1865
    %v1870 = vand.u32 2147483647, %v1815
    %vm1871 = vcmp.eq.f32.partialorder %v1870, 8.507059e+37
    %v1872 = vand.u32 %v1815, 2147483648
    %v1873 = vor.u32 1.1754944e-38, %v1872
    %v1874 = vsel %vm1871, %v1873, %v1869
    %v1875 = vmul.f32 1.0, %v1874
    %v1876 = vrcp.pop %v1816
    %v1877 = vmul.f32 %v1816, %v1876
    %v1878 = vsub.f32 1.0, %v1877
    %v1879 = vmul.f32 %v1876, %v1878
    %v1880 = vadd.f32 %v1876, %v1879
    %vm1881 = vweird.f32 %v1816
    %vm1882 = vweird.f32 %v1876
    %vm1883 = vmor %vm1881, %vm1882
    %v1884 = vsel %vm1883, %v1876, %v1880
    %v1885 = vand.u32 2147483647, %v1816
    %vm1886 = vcmp.eq.f32.partialorder %v1885, 8.507059e+37
    %v1887 = vand.u32 %v1816, 2147483648
    %v1888 = vor.u32 1.1754944e-38, %v1887
    %v1889 = vsel %vm1886, %v1888, %v1884
    %v1890 = vmul.f32 1.0, %v1889
    %v1891 = vrcp.pop %v1817
    %v1892 = vmul.f32 %v1817, %v1891
    %v1893 = vsub.f32 1.0, %v1892
    %v1894 = vmul.f32 %v1891, %v1893
    %v1895 = vadd.f32 %v1891, %v1894
    %vm1896 = vweird.f32 %v1817
    %vm1897 = vweird.f32 %v1891
    %vm1898 = vmor %vm1896, %vm1897
    %v1899 = vsel %vm1898, %v1891, %v1895
    %v1900 = vand.u32 2147483647, %v1817
    %vm1901 = vcmp.eq.f32.partialorder %v1900, 8.507059e+37
    %v1902 = vand.u32 %v1817, 2147483648
    %v1903 = vor.u32 1.1754944e-38, %v1902
    %v1904 = vsel %vm1901, %v1903, %v1899
    %v1905 = vmul.f32 1.0, %v1904
    %v1906 = vrcp.pop %v1818
    %v1907 = vmul.f32 %v1818, %v1906
    %v1908 = vsub.f32 1.0, %v1907
    %v1909 = vmul.f32 %v1906, %v1908
    %v1910 = vadd.f32 %v1906, %v1909
    %vm1911 = vweird.f32 %v1818
    %vm1912 = vweird.f32 %v1906
    %vm1913 = vmor %vm1911, %vm1912
    %v1914 = vsel %vm1913, %v1906, %v1910
    %v1915 = vand.u32 2147483647, %v1818
    %vm1916 = vcmp.eq.f32.partialorder %v1915, 8.507059e+37
    %v1917 = vand.u32 %v1818, 2147483648
    %v1918 = vor.u32 1.1754944e-38, %v1917
    %v1919 = vsel %vm1916, %v1918, %v1914
    %v1920 = vmul.f32 1.0, %v1919
    %v1921 = vrcp.pop %v1819
    %v1922 = vmul.f32 %v1819, %v1921
    %v1923 = vsub.f32 1.0, %v1922
    %v1924 = vmul.f32 %v1921, %v1923
    %v1925 = vadd.f32 %v1921, %v1924
    %vm1926 = vweird.f32 %v1819
    %vm1927 = vweird.f32 %v1921
    %vm1928 = vmor %vm1926, %vm1927
    %v1929 = vsel %vm1928, %v1921, %v1925
    %v1930 = vand.u32 2147483647, %v1819
    %vm1931 = vcmp.eq.f32.partialorder %v1930, 8.507059e+37
    %v1932 = vand.u32 %v1819, 2147483648
    %v1933 = vor.u32 1.1754944e-38, %v1932
    %v1934 = vsel %vm1931, %v1933, %v1929
    %v1935 = vmul.f32 1.0, %v1934
    %v1936 = vrcp.pop %v1820
    %v1937 = vmul.f32 %v1820, %v1936
    %v1938 = vsub.f32 1.0, %v1937
    %v1939 = vmul.f32 %v1936, %v1938
    %v1940 = vadd.f32 %v1936, %v1939
    %vm1941 = vweird.f32 %v1820
    %vm1942 = vweird.f32 %v1936
    %vm1943 = vmor %vm1941, %vm1942
    %v1944 = vsel %vm1943, %v1936, %v1940
    %v1945 = vand.u32 2147483647, %v1820
    %vm1946 = vcmp.eq.f32.partialorder %v1945, 8.507059e+37
    %v1947 = vand.u32 %v1820, 2147483648
    %v1948 = vor.u32 1.1754944e-38, %v1947
    %v1949 = vsel %vm1946, %v1948, %v1944
    %v1950 = vmul.f32 1.0, %v1949
    %v1951 = vrcp.pop %v1821
    %v1952 = vmul.f32 %v1821, %v1951
    %v1953 = vsub.f32 1.0, %v1952
    %v1954 = vmul.f32 %v1951, %v1953
    %v1955 = vadd.f32 %v1951, %v1954
    %vm1956 = vweird.f32 %v1821
    %vm1957 = vweird.f32 %v1951
    %vm1958 = vmor %vm1956, %vm1957
    %v1959 = vsel %vm1958, %v1951, %v1955
    %v1960 = vand.u32 2147483647, %v1821
    %vm1961 = vcmp.eq.f32.partialorder %v1960, 8.507059e+37
    %v1962 = vand.u32 %v1821, 2147483648
    %v1963 = vor.u32 1.1754944e-38, %v1962
    %v1964 = vsel %vm1961, %v1963, %v1959
    %v1965 = vmul.f32 1.0, %v1964
    %v1966 = vrcp.pop %v1822
    %v1967 = vmul.f32 %v1822, %v1966
    %v1968 = vsub.f32 1.0, %v1967
    %v1969 = vmul.f32 %v1966, %v1968
    %v1970 = vadd.f32 %v1966, %v1969
    %vm1971 = vweird.f32 %v1822
    %vm1972 = vweird.f32 %v1966
    %vm1973 = vmor %vm1971, %vm1972
    %v1974 = vsel %vm1973, %v1966, %v1970
    %v1975 = vand.u32 2147483647, %v1822
    %vm1976 = vcmp.eq.f32.partialorder %v1975, 8.507059e+37
    %v1977 = vand.u32 %v1822, 2147483648
    %v1978 = vor.u32 1.1754944e-38, %v1977
    %v1979 = vsel %vm1976, %v1978, %v1974
    %v1980 = vmul.f32 1.0, %v1979
    %v1981 = vrcp.pop %v1823
    %v1982 = vmul.f32 %v1823, %v1981
    %v1983 = vsub.f32 1.0, %v1982
    %v1984 = vmul.f32 %v1981, %v1983
    %v1985 = vadd.f32 %v1981, %v1984
    %vm1986 = vweird.f32 %v1823
    %vm1987 = vweird.f32 %v1981
    %vm1988 = vmor %vm1986, %vm1987
    %v1989 = vsel %vm1988, %v1981, %v1985
    %v1990 = vand.u32 2147483647, %v1823
    %vm1991 = vcmp.eq.f32.partialorder %v1990, 8.507059e+37
    %v1992 = vand.u32 %v1823, 2147483648
    %v1993 = vor.u32 1.1754944e-38, %v1992
    %v1994 = vsel %vm1991, %v1993, %v1989
    %v1995 = vmul.f32 1.0, %v1994
    %v1996 = vrcp.pop %v1824
    %v1997 = vmul.f32 %v1824, %v1996
    %v1998 = vsub.f32 1.0, %v1997
    %v1999 = vmul.f32 %v1996, %v1998
    %v2000 = vadd.f32 %v1996, %v1999
    %vm2001 = vweird.f32 %v1824
    %vm2002 = vweird.f32 %v1996
    %vm2003 = vmor %vm2001, %vm2002
    %v2004 = vsel %vm2003, %v1996, %v2000
    %v2005 = vand.u32 2147483647, %v1824
    %vm2006 = vcmp.eq.f32.partialorder %v2005, 8.507059e+37
    %v2007 = vand.u32 %v1824, 2147483648
    %v2008 = vor.u32 1.1754944e-38, %v2007
    %v2009 = vsel %vm2006, %v2008, %v2004
    %v2010 = vmul.f32 1.0, %v2009
    %v2011 = vrcp.pop %v1825
    %v2012 = vmul.f32 %v1825, %v2011
    %v2013 = vsub.f32 1.0, %v2012
    %v2014 = vmul.f32 %v2011, %v2013
    %v2015 = vadd.f32 %v2011, %v2014
    %vm2016 = vweird.f32 %v1825
    %vm2017 = vweird.f32 %v2011
    %vm2018 = vmor %vm2016, %vm2017
    %v2019 = vsel %vm2018, %v2011, %v2015
    %v2020 = vand.u32 2147483647, %v1825
    %vm2021 = vcmp.eq.f32.partialorder %v2020, 8.507059e+37
    %v2022 = vand.u32 %v1825, 2147483648
    %v2023 = vor.u32 1.1754944e-38, %v2022
    %v2024 = vsel %vm2021, %v2023, %v2019
    %v2025 = vmul.f32 1.0, %v2024
    %v2026 = vrcp.pop %v1826
    %v2027 = vmul.f32 %v1826, %v2026
    %v2028 = vsub.f32 1.0, %v2027
    %v2029 = vmul.f32 %v2026, %v2028
    %v2030 = vadd.f32 %v2026, %v2029
    %vm2031 = vweird.f32 %v1826
    %vm2032 = vweird.f32 %v2026
    %vm2033 = vmor %vm2031, %vm2032
    %v2034 = vsel %vm2033, %v2026, %v2030
    %v2035 = vand.u32 2147483647, %v1826
    %vm2036 = vcmp.eq.f32.partialorder %v2035, 8.507059e+37
    %v2037 = vand.u32 %v1826, 2147483648
    %v2038 = vor.u32 1.1754944e-38, %v2037
    %v2039 = vsel %vm2036, %v2038, %v2034
    %v2040 = vmul.f32 1.0, %v2039
    %v2041 = vrcp.pop %v1827
    %v2042 = vmul.f32 %v1827, %v2041
    %v2043 = vsub.f32 1.0, %v2042
    %v2044 = vmul.f32 %v2041, %v2043
    %v2045 = vadd.f32 %v2041, %v2044
    %vm2046 = vweird.f32 %v1827
    %vm2047 = vweird.f32 %v2041
    %vm2048 = vmor %vm2046, %vm2047
    %v2049 = vsel %vm2048, %v2041, %v2045
    %v2050 = vand.u32 2147483647, %v1827
    %vm2051 = vcmp.eq.f32.partialorder %v2050, 8.507059e+37
    %v2052 = vand.u32 %v1827, 2147483648
    %v2053 = vor.u32 1.1754944e-38, %v2052
    %v2054 = vsel %vm2051, %v2053, %v2049
    %v2055 = vmul.f32 1.0, %v2054
    %v2056 = vrcp.pop %v1828
    %v2057 = vmul.f32 %v1828, %v2056
    %v2058 = vsub.f32 1.0, %v2057
    %v2059 = vmul.f32 %v2056, %v2058
    %v2060 = vadd.f32 %v2056, %v2059
    %vm2061 = vweird.f32 %v1828
    %vm2062 = vweird.f32 %v2056
    %vm2063 = vmor %vm2061, %vm2062
    %v2064 = vsel %vm2063, %v2056, %v2060
    %v2065 = vand.u32 2147483647, %v1828
    %vm2066 = vcmp.eq.f32.partialorder %v2065, 8.507059e+37
    %v2067 = vand.u32 %v1828, 2147483648
    %v2068 = vor.u32 1.1754944e-38, %v2067
    %v2069 = vsel %vm2066, %v2068, %v2064
    %v2070 = vmul.f32 1.0, %v2069
    %v2071 = vrcp.pop %v1829
    %v2072 = vmul.f32 %v1829, %v2071
    %v2073 = vsub.f32 1.0, %v2072
    %v2074 = vmul.f32 %v2071, %v2073
    %v2075 = vadd.f32 %v2071, %v2074
    %vm2076 = vweird.f32 %v1829
    %vm2077 = vweird.f32 %v2071
    %vm2078 = vmor %vm2076, %vm2077
    %v2079 = vsel %vm2078, %v2071, %v2075
    %v2080 = vand.u32 2147483647, %v1829
    %vm2081 = vcmp.eq.f32.partialorder %v2080, 8.507059e+37
    %v2082 = vand.u32 %v1829, 2147483648
    %v2083 = vor.u32 1.1754944e-38, %v2082
    %v2084 = vsel %vm2081, %v2083, %v2079
    %v2085 = vmul.f32 1.0, %v2084
    %v2086 = vrcp.pop %v1830
    %v2087 = vmul.f32 %v1830, %v2086
    %v2088 = vsub.f32 1.0, %v2087
    %v2089 = vmul.f32 %v2086, %v2088
    %v2090 = vadd.f32 %v2086, %v2089
    %vm2091 = vweird.f32 %v1830
    %vm2092 = vweird.f32 %v2086
    %vm2093 = vmor %vm2091, %vm2092
    %v2094 = vsel %vm2093, %v2086, %v2090
    %v2095 = vand.u32 2147483647, %v1830
    %vm2096 = vcmp.eq.f32.partialorder %v2095, 8.507059e+37
    %v2097 = vand.u32 %v1830, 2147483648
    %v2098 = vor.u32 1.1754944e-38, %v2097
    %v2099 = vsel %vm2096, %v2098, %v2094
    %v2100 = vmul.f32 1.0, %v2099
    %v2101 = vrcp.pop %v1831
    %v2102 = vmul.f32 %v1831, %v2101
    %v2103 = vsub.f32 1.0, %v2102
    %v2104 = vmul.f32 %v2101, %v2103
    %v2105 = vadd.f32 %v2101, %v2104
    %vm2106 = vweird.f32 %v1831
    %vm2107 = vweird.f32 %v2101
    %vm2108 = vmor %vm2106, %vm2107
    %v2109 = vsel %vm2108, %v2101, %v2105
    %v2110 = vand.u32 2147483647, %v1831
    %vm2111 = vcmp.eq.f32.partialorder %v2110, 8.507059e+37
    %v2112 = vand.u32 %v1831, 2147483648
    %v2113 = vor.u32 1.1754944e-38, %v2112
    %v2114 = vsel %vm2111, %v2113, %v2109
    %v2115 = vmul.f32 1.0, %v2114
    %v2116 = vrcp.pop %v1832
    %v2117 = vmul.f32 %v1832, %v2116
    %v2118 = vsub.f32 1.0, %v2117
    %v2119 = vmul.f32 %v2116, %v2118
    %v2120 = vadd.f32 %v2116, %v2119
    %vm2121 = vweird.f32 %v1832
    %vm2122 = vweird.f32 %v2116
    %vm2123 = vmor %vm2121, %vm2122
    %v2124 = vsel %vm2123, %v2116, %v2120
    %v2125 = vand.u32 2147483647, %v1832
    %vm2126 = vcmp.eq.f32.partialorder %v2125, 8.507059e+37
    %v2127 = vand.u32 %v1832, 2147483648
    %v2128 = vor.u32 1.1754944e-38, %v2127
    %v2129 = vsel %vm2126, %v2128, %v2124
    %v2130 = vmul.f32 1.0, %v2129
    %v2131 = vrcp.pop %v1833
    %v2132 = vmul.f32 %v1833, %v2131
    %v2133 = vsub.f32 1.0, %v2132
    %v2134 = vmul.f32 %v2131, %v2133
    %v2135 = vadd.f32 %v2131, %v2134
    %vm2136 = vweird.f32 %v1833
    %vm2137 = vweird.f32 %v2131
    %vm2138 = vmor %vm2136, %vm2137
    %v2139 = vsel %vm2138, %v2131, %v2135
    %v2140 = vand.u32 2147483647, %v1833
    %vm2141 = vcmp.eq.f32.partialorder %v2140, 8.507059e+37
    %v2142 = vand.u32 %v1833, 2147483648
    %v2143 = vor.u32 1.1754944e-38, %v2142
    %v2144 = vsel %vm2141, %v2143, %v2139
    %v2145 = vmul.f32 1.0, %v2144
    %v2146 = vrcp.pop %v1834
    %v2147 = vmul.f32 %v1834, %v2146
    %v2148 = vsub.f32 1.0, %v2147
    %v2149 = vmul.f32 %v2146, %v2148
    %v2150 = vadd.f32 %v2146, %v2149
    %vm2151 = vweird.f32 %v1834
    %vm2152 = vweird.f32 %v2146
    %vm2153 = vmor %vm2151, %vm2152
    %v2154 = vsel %vm2153, %v2146, %v2150
    %v2155 = vand.u32 2147483647, %v1834
    %vm2156 = vcmp.eq.f32.partialorder %v2155, 8.507059e+37
    %v2157 = vand.u32 %v1834, 2147483648
    %v2158 = vor.u32 1.1754944e-38, %v2157
    %v2159 = vsel %vm2156, %v2158, %v2154
    %v2160 = vmul.f32 1.0, %v2159
    %v2161 = vrcp.pop %v1835
    %v2162 = vmul.f32 %v1835, %v2161
    %v2163 = vsub.f32 1.0, %v2162
    %v2164 = vmul.f32 %v2161, %v2163
    %v2165 = vadd.f32 %v2161, %v2164
    %vm2166 = vweird.f32 %v1835
    %vm2167 = vweird.f32 %v2161
    %vm2168 = vmor %vm2166, %vm2167
    %v2169 = vsel %vm2168, %v2161, %v2165
    %v2170 = vand.u32 2147483647, %v1835
    %vm2171 = vcmp.eq.f32.partialorder %v2170, 8.507059e+37
    %v2172 = vand.u32 %v1835, 2147483648
    %v2173 = vor.u32 1.1754944e-38, %v2172
    %v2174 = vsel %vm2171, %v2173, %v2169
    %v2175 = vmul.f32 1.0, %v2174
    %v2176 = vrcp.pop %v1836
    %v2177 = vmul.f32 %v1836, %v2176
    %v2178 = vsub.f32 1.0, %v2177
    %v2179 = vmul.f32 %v2176, %v2178
    %v2180 = vadd.f32 %v2176, %v2179
    %vm2181 = vweird.f32 %v1836
    %vm2182 = vweird.f32 %v2176
    %vm2183 = vmor %vm2181, %vm2182
    %v2184 = vsel %vm2183, %v2176, %v2180
    %v2185 = vand.u32 2147483647, %v1836
    %vm2186 = vcmp.eq.f32.partialorder %v2185, 8.507059e+37
    %v2187 = vand.u32 %v1836, 2147483648
    %v2188 = vor.u32 1.1754944e-38, %v2187
    %v2189 = vsel %vm2186, %v2188, %v2184
    %v2190 = vmul.f32 1.0, %v2189
    %v2191 = vrcp.pop %v1837
    %v2192 = vmul.f32 %v1837, %v2191
    %v2193 = vsub.f32 1.0, %v2192
    %v2194 = vmul.f32 %v2191, %v2193
    %v2195 = vadd.f32 %v2191, %v2194
    %vm2196 = vweird.f32 %v1837
    %vm2197 = vweird.f32 %v2191
    %vm2198 = vmor %vm2196, %vm2197
    %v2199 = vsel %vm2198, %v2191, %v2195
    %v2200 = vand.u32 2147483647, %v1837
    %vm2201 = vcmp.eq.f32.partialorder %v2200, 8.507059e+37
    %v2202 = vand.u32 %v1837, 2147483648
    %v2203 = vor.u32 1.1754944e-38, %v2202
    %v2204 = vsel %vm2201, %v2203, %v2199
    %v2205 = vmul.f32 1.0, %v2204
    %v2206 = vrcp.pop %v1838
    %v2207 = vmul.f32 %v1838, %v2206
    %v2208 = vsub.f32 1.0, %v2207
    %v2209 = vmul.f32 %v2206, %v2208
    %v2210 = vadd.f32 %v2206, %v2209
    %vm2211 = vweird.f32 %v1838
    %vm2212 = vweird.f32 %v2206
    %vm2213 = vmor %vm2211, %vm2212
    %v2214 = vsel %vm2213, %v2206, %v2210
    %v2215 = vand.u32 2147483647, %v1838
    %vm2216 = vcmp.eq.f32.partialorder %v2215, 8.507059e+37
    %v2217 = vand.u32 %v1838, 2147483648
    %v2218 = vor.u32 1.1754944e-38, %v2217
    %v2219 = vsel %vm2216, %v2218, %v2214
    %v2220 = vmul.f32 1.0, %v2219
    %v2221 = vrcp.pop %v1839
    %v2222 = vmul.f32 %v1839, %v2221
    %v2223 = vsub.f32 1.0, %v2222
    %v2224 = vmul.f32 %v2221, %v2223
    %v2225 = vadd.f32 %v2221, %v2224
    %vm2226 = vweird.f32 %v1839
    %vm2227 = vweird.f32 %v2221
    %vm2228 = vmor %vm2226, %vm2227
    %v2229 = vsel %vm2228, %v2221, %v2225
    %v2230 = vand.u32 2147483647, %v1839
    %vm2231 = vcmp.eq.f32.partialorder %v2230, 8.507059e+37
    %v2232 = vand.u32 %v1839, 2147483648
    %v2233 = vor.u32 1.1754944e-38, %v2232
    %v2234 = vsel %vm2231, %v2233, %v2229
    %v2235 = vmul.f32 1.0, %v2234
    %v2236 = vrcp.pop %v1840
    %v2237 = vmul.f32 %v1840, %v2236
    %v2238 = vsub.f32 1.0, %v2237
    %v2239 = vmul.f32 %v2236, %v2238
    %v2240 = vadd.f32 %v2236, %v2239
    %vm2241 = vweird.f32 %v1840
    %vm2242 = vweird.f32 %v2236
    %vm2243 = vmor %vm2241, %vm2242
    %v2244 = vsel %vm2243, %v2236, %v2240
    %v2245 = vand.u32 2147483647, %v1840
    %vm2246 = vcmp.eq.f32.partialorder %v2245, 8.507059e+37
    %v2247 = vand.u32 %v1840, 2147483648
    %v2248 = vor.u32 1.1754944e-38, %v2247
    %v2249 = vsel %vm2246, %v2248, %v2244
    %v2250 = vmul.f32 1.0, %v2249
    %v2251 = vrcp.pop %v1841
    %v2252 = vmul.f32 %v1841, %v2251
    %v2253 = vsub.f32 1.0, %v2252
    %v2254 = vmul.f32 %v2251, %v2253
    %v2255 = vadd.f32 %v2251, %v2254
    %vm2256 = vweird.f32 %v1841
    %vm2257 = vweird.f32 %v2251
    %vm2258 = vmor %vm2256, %vm2257
    %v2259 = vsel %vm2258, %v2251, %v2255
    %v2260 = vand.u32 2147483647, %v1841
    %vm2261 = vcmp.eq.f32.partialorder %v2260, 8.507059e+37
    %v2262 = vand.u32 %v1841, 2147483648
    %v2263 = vor.u32 1.1754944e-38, %v2262
    %v2264 = vsel %vm2261, %v2263, %v2259
    %v2265 = vmul.f32 1.0, %v2264
    %v2266 = vrcp.pop %v1842
    %v2267 = vmul.f32 %v1842, %v2266
    %v2268 = vsub.f32 1.0, %v2267
    %v2269 = vmul.f32 %v2266, %v2268
    %v2270 = vadd.f32 %v2266, %v2269
    %vm2271 = vweird.f32 %v1842
    %vm2272 = vweird.f32 %v2266
    %vm2273 = vmor %vm2271, %vm2272
    %v2274 = vsel %vm2273, %v2266, %v2270
    %v2275 = vand.u32 2147483647, %v1842
    %vm2276 = vcmp.eq.f32.partialorder %v2275, 8.507059e+37
    %v2277 = vand.u32 %v1842, 2147483648
    %v2278 = vor.u32 1.1754944e-38, %v2277
    %v2279 = vsel %vm2276, %v2278, %v2274
    %v2280 = vmul.f32 1.0, %v2279
    %v2281 = vrcp.pop %v1843
    %v2282 = vmul.f32 %v1843, %v2281
    %v2283 = vsub.f32 1.0, %v2282
    %v2284 = vmul.f32 %v2281, %v2283
    %v2285 = vadd.f32 %v2281, %v2284
    %vm2286 = vweird.f32 %v1843
    %vm2287 = vweird.f32 %v2281
    %vm2288 = vmor %vm2286, %vm2287
    %v2289 = vsel %vm2288, %v2281, %v2285
    %v2290 = vand.u32 2147483647, %v1843
    %vm2291 = vcmp.eq.f32.partialorder %v2290, 8.507059e+37
    %v2292 = vand.u32 %v1843, 2147483648
    %v2293 = vor.u32 1.1754944e-38, %v2292
    %v2294 = vsel %vm2291, %v2293, %v2289
    %v2295 = vmul.f32 1.0, %v2294
    %v2296 = vrcp.pop %v1844
    %v2297 = vmul.f32 %v1844, %v2296
    %v2298 = vsub.f32 1.0, %v2297
    %v2299 = vmul.f32 %v2296, %v2298
    %v2300 = vadd.f32 %v2296, %v2299
    %vm2301 = vweird.f32 %v1844
    %vm2302 = vweird.f32 %v2296
    %vm2303 = vmor %vm2301, %vm2302
    %v2304 = vsel %vm2303, %v2296, %v2300
    %v2305 = vand.u32 2147483647, %v1844
    %vm2306 = vcmp.eq.f32.partialorder %v2305, 8.507059e+37
    %v2307 = vand.u32 %v1844, 2147483648
    %v2308 = vor.u32 1.1754944e-38, %v2307
    %v2309 = vsel %vm2306, %v2308, %v2304
    %v2310 = vmul.f32 1.0, %v2309
    %v2311 = vrcp.pop %v1845
    %v2312 = vmul.f32 %v1845, %v2311
    %v2313 = vsub.f32 1.0, %v2312
    %v2314 = vmul.f32 %v2311, %v2313
    %v2315 = vadd.f32 %v2311, %v2314
    %vm2316 = vweird.f32 %v1845
    %vm2317 = vweird.f32 %v2311
    %vm2318 = vmor %vm2316, %vm2317
    %v2319 = vsel %vm2318, %v2311, %v2315
    %v2320 = vand.u32 2147483647, %v1845
    %vm2321 = vcmp.eq.f32.partialorder %v2320, 8.507059e+37
    %v2322 = vand.u32 %v1845, 2147483648
    %v2323 = vor.u32 1.1754944e-38, %v2322
    %v2324 = vsel %vm2321, %v2323, %v2319
    %v2325 = vmul.f32 1.0, %v2324
    %v2326 = vmul.f32 %v1686, %v1860
    %v2327 = vmul.f32 %v1687, %v1875
    %v2328 = vmul.f32 %v1688, %v1890
    %v2329 = vmul.f32 %v1689, %v1905
    %v2330 = vmul.f32 %v1690, %v1920
    %v2331 = vmul.f32 %v1691, %v1935
    %v2332 = vmul.f32 %v1692, %v1950
    %v2333 = vmul.f32 %v1693, %v1965
    %v2334 = vmul.f32 %v1694, %v1980
    %v2335 = vmul.f32 %v1695, %v1995
    %v2336 = vmul.f32 %v1696, %v2010
    %v2337 = vmul.f32 %v1697, %v2025
    %v2338 = vmul.f32 %v1698, %v2040
    %v2339 = vmul.f32 %v1699, %v2055
    %v2340 = vmul.f32 %v1700, %v2070
    %v2341 = vmul.f32 %v1701, %v2085
    %v2342 = vmul.f32 %v1702, %v2100
    %v2343 = vmul.f32 %v1703, %v2115
    %v2344 = vmul.f32 %v1704, %v2130
    %v2345 = vmul.f32 %v1705, %v2145
    %v2346 = vmul.f32 %v1706, %v2160
    %v2347 = vmul.f32 %v1707, %v2175
    %v2348 = vmul.f32 %v1708, %v2190
    %v2349 = vmul.f32 %v1709, %v2205
    %v2350 = vmul.f32 %v1710, %v2220
    %v2351 = vmul.f32 %v1711, %v2235
    %v2352 = vmul.f32 %v1712, %v2250
    %v2353 = vmul.f32 %v1713, %v2265
    %v2354 = vmul.f32 %v1714, %v2280
    %v2355 = vmul.f32 %v1715, %v2295
    %v2356 = vmul.f32 %v1716, %v2310
    %v2357 = vmul.f32 %v1717, %v2325
    %v2358 = vpack.c.bf16 %v2327, %v2326
    %v2359 = vpack.c.bf16 %v2329, %v2328
    %v2360 = vpack.c.bf16 %v2331, %v2330
    %v2361 = vpack.c.bf16 %v2333, %v2332
    %v2362 = vpack.c.bf16 %v2335, %v2334
    %v2363 = vpack.c.bf16 %v2337, %v2336
    %v2364 = vpack.c.bf16 %v2339, %v2338
    %v2365 = vpack.c.bf16 %v2341, %v2340
    %v2366 = vpack.c.bf16 %v2343, %v2342
    %v2367 = vpack.c.bf16 %v2345, %v2344
    %v2368 = vpack.c.bf16 %v2347, %v2346
    %v2369 = vpack.c.bf16 %v2349, %v2348
    %v2370 = vpack.c.bf16 %v2351, %v2350
    %v2371 = vpack.c.bf16 %v2353, %v2352
    %v2372 = vpack.c.bf16 %v2355, %v2354
    %v2373 = vpack.c.bf16 %v2357, %v2356
    %v2374 = vld [vmem:[#allocation8] sm:$0xf]
    %v2375 = vld [vmem:[#allocation8 + $0x4] sm:$0xf]
    %v2376 = vld [vmem:[#allocation8 + $0x8] sm:$0xf]
    %v2377 = vld [vmem:[#allocation8 + $0xc] sm:$0xf]
    %v2378 = vld [vmem:[#allocation8 + $0x10] sm:$0xf]
    %v2379 = vld [vmem:[#allocation8 + $0x14] sm:$0xf]
    %v2380 = vld [vmem:[#allocation8 + $0x18] sm:$0xf]
    %v2381 = vld [vmem:[#allocation8 + $0x1c] sm:$0xf]
    %v2382 = vld [vmem:[#allocation8 + $0x20] sm:$0xf]
    %v2383 = vld [vmem:[#allocation8 + $0x24] sm:$0xf]
    %v2384 = vld [vmem:[#allocation8 + $0x28] sm:$0xf]
    %v2385 = vld [vmem:[#allocation8 + $0x2c] sm:$0xf]
    %v2386 = vld [vmem:[#allocation8 + $0x30] sm:$0xf]
    %v2387 = vld [vmem:[#allocation8 + $0x34] sm:$0xf]
    %v2388 = vld [vmem:[#allocation8 + $0x38] sm:$0xf]
    %v2389 = vld [vmem:[#allocation8 + $0x3c] sm:$0xf]
    %v2390 = vld [vmem:[%s12] sm:$0x1]
    %v2392 = vperm.slane %v2390, 0
    %v2410 = vunpack.c.l.b16 %v2374
    %v2411 = vunpack.c.l.b16 %v2375
    %v2412 = vunpack.c.l.b16 %v2376
    %v2413 = vunpack.c.l.b16 %v2377
    %v2414 = vunpack.c.l.b16 %v2378
    %v2415 = vunpack.c.l.b16 %v2379
    %v2416 = vunpack.c.l.b16 %v2380
    %v2417 = vunpack.c.l.b16 %v2381
    %v2418 = vunpack.c.l.b16 %v2382
    %v2419 = vunpack.c.l.b16 %v2383
    %v2420 = vunpack.c.l.b16 %v2384
    %v2421 = vunpack.c.l.b16 %v2385
    %v2422 = vunpack.c.l.b16 %v2386
    %v2423 = vunpack.c.l.b16 %v2387
    %v2424 = vunpack.c.l.b16 %v2388
    %v2425 = vunpack.c.l.b16 %v2389
    %v2426 = vpack.c.b16 %v2411, %v2410
    %v2427 = vpack.c.b16 %v2413, %v2412
    %v2428 = vpack.c.b16 %v2415, %v2414
    %v2429 = vpack.c.b16 %v2417, %v2416
    %v2430 = vpack.c.b16 %v2419, %v2418
    %v2431 = vpack.c.b16 %v2421, %v2420
    %v2432 = vpack.c.b16 %v2423, %v2422
    %v2433 = vpack.c.b16 %v2425, %v2424
    %2442 = vmatpush.bf16.msra.mxu0 %v2433
    %2443 = vmatpush.bf16.msra.mxu0 %v2432
    %2444 = vmatpush.bf16.msra.mxu0 %v2431
    %2445 = vmatpush.bf16.msra.mxu0 %v2430
    %2446 = vmatpush.bf16.msra.mxu0 %v2429
    %2447 = vmatpush.bf16.msra.mxu0 %v2428
    %2448 = vmatpush.bf16.msra.mxu0 %v2427
    %2449 = vmatpush.bf16.msra.mxu0 %v2426
    %2450 = vmatmul.bf16.gmra.mxu0 %v2358
    %v2451 = vpop.f32.mrf.mxu0
    %v2452 = vadd.f32 %v2392, %v2451
    %v2453 = vpop.f32.mrf.mxu0
    %v2454 = vadd.f32 %v2392, %v2453
    %2455 = vmatmul.bf16.gmra.mxu0 %v2359
    %v2456 = vpop.f32.mrf.mxu0
    %v2457 = vadd.f32 %v2392, %v2456
    %v2458 = vpop.f32.mrf.mxu0
    %v2459 = vadd.f32 %v2392, %v2458
    %2460 = vmatmul.bf16.gmra.mxu0 %v2360
    %v2461 = vpop.f32.mrf.mxu0
    %v2462 = vadd.f32 %v2392, %v2461
    %v2463 = vpop.f32.mrf.mxu0
    %v2464 = vadd.f32 %v2392, %v2463
    %2465 = vmatmul.bf16.gmra.mxu0 %v2361
    %v2466 = vpop.f32.mrf.mxu0
    %v2467 = vadd.f32 %v2392, %v2466
    %v2468 = vpop.f32.mrf.mxu0
    %v2469 = vadd.f32 %v2392, %v2468
    %2470 = vmatmul.bf16.gmra.mxu0 %v2362
    %v2471 = vpop.f32.mrf.mxu0
    %v2472 = vadd.f32 %v2392, %v2471
    %v2473 = vpop.f32.mrf.mxu0
    %v2474 = vadd.f32 %v2392, %v2473
    %2475 = vmatmul.bf16.gmra.mxu0 %v2363
    %v2476 = vpop.f32.mrf.mxu0
    %v2477 = vadd.f32 %v2392, %v2476
    %v2478 = vpop.f32.mrf.mxu0
    %v2479 = vadd.f32 %v2392, %v2478
    %2480 = vmatmul.bf16.gmra.mxu0 %v2364
    %v2481 = vpop.f32.mrf.mxu0
    %v2482 = vadd.f32 %v2392, %v2481
    %v2483 = vpop.f32.mrf.mxu0
    %v2484 = vadd.f32 %v2392, %v2483
    %2485 = vmatmul.bf16.gmra.mxu0 %v2365
    %v2486 = vpop.f32.mrf.mxu0
    %v2487 = vadd.f32 %v2392, %v2486
    %v2488 = vpop.f32.mrf.mxu0
    %v2489 = vadd.f32 %v2392, %v2488
    %2490 = vmatmul.bf16.gmra.mxu0 %v2366
    %v2491 = vpop.f32.mrf.mxu0
    %v2492 = vadd.f32 %v2392, %v2491
    %v2493 = vpop.f32.mrf.mxu0
    %v2494 = vadd.f32 %v2392, %v2493
    %2495 = vmatmul.bf16.gmra.mxu0 %v2367
    %v2496 = vpop.f32.mrf.mxu0
    %v2497 = vadd.f32 %v2392, %v2496
    %v2498 = vpop.f32.mrf.mxu0
    %v2499 = vadd.f32 %v2392, %v2498
    %2500 = vmatmul.bf16.gmra.mxu0 %v2368
    %v2501 = vpop.f32.mrf.mxu0
    %v2502 = vadd.f32 %v2392, %v2501
    %v2503 = vpop.f32.mrf.mxu0
    %v2504 = vadd.f32 %v2392, %v2503
    %2505 = vmatmul.bf16.gmra.mxu0 %v2369
    %v2506 = vpop.f32.mrf.mxu0
    %v2507 = vadd.f32 %v2392, %v2506
    %v2508 = vpop.f32.mrf.mxu0
    %v2509 = vadd.f32 %v2392, %v2508
    %2510 = vmatmul.bf16.gmra.mxu0 %v2370
    %v2511 = vpop.f32.mrf.mxu0
    %v2512 = vadd.f32 %v2392, %v2511
    %v2513 = vpop.f32.mrf.mxu0
    %v2514 = vadd.f32 %v2392, %v2513
    %2515 = vmatmul.bf16.gmra.mxu0 %v2371
    %v2516 = vpop.f32.mrf.mxu0
    %v2517 = vadd.f32 %v2392, %v2516
    %v2518 = vpop.f32.mrf.mxu0
    %v2519 = vadd.f32 %v2392, %v2518
    %2520 = vmatmul.bf16.gmra.mxu0 %v2372
    %v2521 = vpop.f32.mrf.mxu0
    %v2522 = vadd.f32 %v2392, %v2521
    %v2523 = vpop.f32.mrf.mxu0
    %v2524 = vadd.f32 %v2392, %v2523
    %2525 = vmatmul.bf16.gmra.mxu0 %v2373
    %v2526 = vpop.f32.mrf.mxu0
    %v2527 = vadd.f32 %v2392, %v2526
    %v2528 = vpop.f32.mrf.mxu0
    %v2529 = vadd.f32 %v2392, %v2528
    %2530 = vdwg.mxu0
    %v2531 = vld [vmem:[%s13] sm:$0x1]
    %v2532 = vld [vmem:[%s14] sm:$0x1]
    %vm2533 = vcmp.lt.s32.totalorder %v773, 32
    %v2534 = vsel %vm2533, 1, 0
    %v2535 = vcvt.s32.f32 %v2534
    %v2536 = vmul.f32 %v2452, %v2535
    %v2537 = vmul.f32 %v2454, %v2535
    %v2538 = vmul.f32 %v2457, %v2535
    %v2539 = vmul.f32 %v2459, %v2535
    %v2540 = vmul.f32 %v2462, %v2535
    %v2541 = vmul.f32 %v2464, %v2535
    %v2542 = vmul.f32 %v2467, %v2535
    %v2543 = vmul.f32 %v2469, %v2535
    %v2544 = vmul.f32 %v2472, %v2535
    %v2545 = vmul.f32 %v2474, %v2535
    %v2546 = vmul.f32 %v2477, %v2535
    %v2547 = vmul.f32 %v2479, %v2535
    %v2548 = vmul.f32 %v2482, %v2535
    %v2549 = vmul.f32 %v2484, %v2535
    %v2550 = vmul.f32 %v2487, %v2535
    %v2551 = vmul.f32 %v2489, %v2535
    %v2552 = vmul.f32 %v2492, %v2535
    %v2553 = vmul.f32 %v2494, %v2535
    %v2554 = vmul.f32 %v2497, %v2535
    %v2555 = vmul.f32 %v2499, %v2535
    %v2556 = vmul.f32 %v2502, %v2535
    %v2557 = vmul.f32 %v2504, %v2535
    %v2558 = vmul.f32 %v2507, %v2535
    %v2559 = vmul.f32 %v2509, %v2535
    %v2560 = vmul.f32 %v2512, %v2535
    %v2561 = vmul.f32 %v2514, %v2535
    %v2562 = vmul.f32 %v2517, %v2535
    %v2563 = vmul.f32 %v2519, %v2535
    %v2564 = vmul.f32 %v2522, %v2535
    %v2565 = vmul.f32 %v2524, %v2535
    %v2566 = vmul.f32 %v2527, %v2535
    %v2567 = vmul.f32 %v2529, %v2535
    %2568 = vadd.xlane.f32.xlu0 %v2536
    %v2569 = vpop.xlane.xlu0 %2568
    %2570 = vadd.xlane.f32.xlu0 %v2537
    %v2571 = vpop.xlane.xlu0 %2570
    %2572 = vadd.xlane.f32.xlu0 %v2538
    %v2573 = vpop.xlane.xlu0 %2572
    %2574 = vadd.xlane.f32.xlu0 %v2539
    %v2575 = vpop.xlane.xlu0 %2574
    %2576 = vadd.xlane.f32.xlu0 %v2540
    %v2577 = vpop.xlane.xlu0 %2576
    %2578 = vadd.xlane.f32.xlu0 %v2541
    %v2579 = vpop.xlane.xlu0 %2578
    %2580 = vadd.xlane.f32.xlu0 %v2542
    %v2581 = vpop.xlane.xlu0 %2580
    %2582 = vadd.xlane.f32.xlu0 %v2543
    %v2583 = vpop.xlane.xlu0 %2582
    %2584 = vadd.xlane.f32.xlu0 %v2544
    %v2585 = vpop.xlane.xlu0 %2584
    %2586 = vadd.xlane.f32.xlu0 %v2545
    %v2587 = vpop.xlane.xlu0 %2586
    %2588 = vadd.xlane.f32.xlu0 %v2546
    %v2589 = vpop.xlane.xlu0 %2588
    %2590 = vadd.xlane.f32.xlu0 %v2547
    %v2591 = vpop.xlane.xlu0 %2590
    %2592 = vadd.xlane.f32.xlu0 %v2548
    %v2593 = vpop.xlane.xlu0 %2592
    %2594 = vadd.xlane.f32.xlu0 %v2549
    %v2595 = vpop.xlane.xlu0 %2594
    %2596 = vadd.xlane.f32.xlu0 %v2550
    %v2597 = vpop.xlane.xlu0 %2596
    %2598 = vadd.xlane.f32.xlu0 %v2551
    %v2599 = vpop.xlane.xlu0 %2598
    %2600 = vadd.xlane.f32.xlu0 %v2552
    %v2601 = vpop.xlane.xlu0 %2600
    %2602 = vadd.xlane.f32.xlu0 %v2553
    %v2603 = vpop.xlane.xlu0 %2602
    %2604 = vadd.xlane.f32.xlu0 %v2554
    %v2605 = vpop.xlane.xlu0 %2604
    %2606 = vadd.xlane.f32.xlu0 %v2555
    %v2607 = vpop.xlane.xlu0 %2606
    %2608 = vadd.xlane.f32.xlu0 %v2556
    %v2609 = vpop.xlane.xlu0 %2608
    %2610 = vadd.xlane.f32.xlu0 %v2557
    %v2611 = vpop.xlane.xlu0 %2610
    %2612 = vadd.xlane.f32.xlu0 %v2558
    %v2613 = vpop.xlane.xlu0 %2612
    %2614 = vadd.xlane.f32.xlu0 %v2559
    %v2615 = vpop.xlane.xlu0 %2614
    %2616 = vadd.xlane.f32.xlu0 %v2560
    %v2617 = vpop.xlane.xlu0 %2616
    %2618 = vadd.xlane.f32.xlu0 %v2561
    %v2619 = vpop.xlane.xlu0 %2618
    %2620 = vadd.xlane.f32.xlu0 %v2562
    %v2621 = vpop.xlane.xlu0 %2620
    %2622 = vadd.xlane.f32.xlu0 %v2563
    %v2623 = vpop.xlane.xlu0 %2622
    %2624 = vadd.xlane.f32.xlu0 %v2564
    %v2625 = vpop.xlane.xlu0 %2624
    %2626 = vadd.xlane.f32.xlu0 %v2565
    %v2627 = vpop.xlane.xlu0 %2626
    %2628 = vadd.xlane.f32.xlu0 %v2566
    %v2629 = vpop.xlane.xlu0 %2628
    %2630 = vadd.xlane.f32.xlu0 %v2567
    %v2631 = vpop.xlane.xlu0 %2630
    %v2632 = vmul.f32 %v2569, 0.03125
    %v2633 = vmul.f32 %v2571, 0.03125
    %v2634 = vmul.f32 %v2573, 0.03125
    %v2635 = vmul.f32 %v2575, 0.03125
    %v2636 = vmul.f32 %v2577, 0.03125
    %v2637 = vmul.f32 %v2579, 0.03125
    %v2638 = vmul.f32 %v2581, 0.03125
    %v2639 = vmul.f32 %v2583, 0.03125
    %v2640 = vmul.f32 %v2585, 0.03125
    %v2641 = vmul.f32 %v2587, 0.03125
    %v2642 = vmul.f32 %v2589, 0.03125
    %v2643 = vmul.f32 %v2591, 0.03125
    %v2644 = vmul.f32 %v2593, 0.03125
    %v2645 = vmul.f32 %v2595, 0.03125
    %v2646 = vmul.f32 %v2597, 0.03125
    %v2647 = vmul.f32 %v2599, 0.03125
    %v2648 = vmul.f32 %v2601, 0.03125
    %v2649 = vmul.f32 %v2603, 0.03125
    %v2650 = vmul.f32 %v2605, 0.03125
    %v2651 = vmul.f32 %v2607, 0.03125
    %v2652 = vmul.f32 %v2609, 0.03125
    %v2653 = vmul.f32 %v2611, 0.03125
    %v2654 = vmul.f32 %v2613, 0.03125
    %v2655 = vmul.f32 %v2615, 0.03125
    %v2656 = vmul.f32 %v2617, 0.03125
    %v2657 = vmul.f32 %v2619, 0.03125
    %v2658 = vmul.f32 %v2621, 0.03125
    %v2659 = vmul.f32 %v2623, 0.03125
    %v2660 = vmul.f32 %v2625, 0.03125
    %v2661 = vmul.f32 %v2627, 0.03125
    %v2662 = vmul.f32 %v2629, 0.03125
    %v2663 = vmul.f32 %v2631, 0.03125
    %v2664 = vsub.f32 %v2536, %v2632
    %v2665 = vsub.f32 %v2537, %v2633
    %v2666 = vsub.f32 %v2538, %v2634
    %v2667 = vsub.f32 %v2539, %v2635
    %v2668 = vsub.f32 %v2540, %v2636
    %v2669 = vsub.f32 %v2541, %v2637
    %v2670 = vsub.f32 %v2542, %v2638
    %v2671 = vsub.f32 %v2543, %v2639
    %v2672 = vsub.f32 %v2544, %v2640
    %v2673 = vsub.f32 %v2545, %v2641
    %v2674 = vsub.f32 %v2546, %v2642
    %v2675 = vsub.f32 %v2547, %v2643
    %v2676 = vsub.f32 %v2548, %v2644
    %v2677 = vsub.f32 %v2549, %v2645
    %v2678 = vsub.f32 %v2550, %v2646
    %v2679 = vsub.f32 %v2551, %v2647
    %v2680 = vsub.f32 %v2552, %v2648
    %v2681 = vsub.f32 %v2553, %v2649
    %v2682 = vsub.f32 %v2554, %v2650
    %v2683 = vsub.f32 %v2555, %v2651
    %v2684 = vsub.f32 %v2556, %v2652
    %v2685 = vsub.f32 %v2557, %v2653
    %v2686 = vsub.f32 %v2558, %v2654
    %v2687 = vsub.f32 %v2559, %v2655
    %v2688 = vsub.f32 %v2560, %v2656
    %v2689 = vsub.f32 %v2561, %v2657
    %v2690 = vsub.f32 %v2562, %v2658
    %v2691 = vsub.f32 %v2563, %v2659
    %v2692 = vsub.f32 %v2564, %v2660
    %v2693 = vsub.f32 %v2565, %v2661
    %v2694 = vsub.f32 %v2566, %v2662
    %v2695 = vsub.f32 %v2567, %v2663
    %v2696 = vmul.f32 %v2664, %v2535
    %v2697 = vmul.f32 %v2665, %v2535
    %v2698 = vmul.f32 %v2666, %v2535
    %v2699 = vmul.f32 %v2667, %v2535
    %v2700 = vmul.f32 %v2668, %v2535
    %v2701 = vmul.f32 %v2669, %v2535
    %v2702 = vmul.f32 %v2670, %v2535
    %v2703 = vmul.f32 %v2671, %v2535
    %v2704 = vmul.f32 %v2672, %v2535
    %v2705 = vmul.f32 %v2673, %v2535
    %v2706 = vmul.f32 %v2674, %v2535
    %v2707 = vmul.f32 %v2675, %v2535
    %v2708 = vmul.f32 %v2676, %v2535
    %v2709 = vmul.f32 %v2677, %v2535
    %v2710 = vmul.f32 %v2678, %v2535
    %v2711 = vmul.f32 %v2679, %v2535
    %v2712 = vmul.f32 %v2680, %v2535
    %v2713 = vmul.f32 %v2681, %v2535
    %v2714 = vmul.f32 %v2682, %v2535
    %v2715 = vmul.f32 %v2683, %v2535
    %v2716 = vmul.f32 %v2684, %v2535
    %v2717 = vmul.f32 %v2685, %v2535
    %v2718 = vmul.f32 %v2686, %v2535
    %v2719 = vmul.f32 %v2687, %v2535
    %v2720 = vmul.f32 %v2688, %v2535
    %v2721 = vmul.f32 %v2689, %v2535
    %v2722 = vmul.f32 %v2690, %v2535
    %v2723 = vmul.f32 %v2691, %v2535
    %v2724 = vmul.f32 %v2692, %v2535
    %v2725 = vmul.f32 %v2693, %v2535
    %v2726 = vmul.f32 %v2694, %v2535
    %v2727 = vmul.f32 %v2695, %v2535
    %v2728 = vmul.f32 %v2696, %v2696
    %v2729 = vmul.f32 %v2697, %v2697
    %v2730 = vmul.f32 %v2698, %v2698
    %v2731 = vmul.f32 %v2699, %v2699
    %v2732 = vmul.f32 %v2700, %v2700
    %v2733 = vmul.f32 %v2701, %v2701
    %v2734 = vmul.f32 %v2702, %v2702
    %v2735 = vmul.f32 %v2703, %v2703
    %v2736 = vmul.f32 %v2704, %v2704
    %v2737 = vmul.f32 %v2705, %v2705
    %v2738 = vmul.f32 %v2706, %v2706
    %v2739 = vmul.f32 %v2707, %v2707
    %v2740 = vmul.f32 %v2708, %v2708
    %v2741 = vmul.f32 %v2709, %v2709
    %v2742 = vmul.f32 %v2710, %v2710
    %v2743 = vmul.f32 %v2711, %v2711
    %v2744 = vmul.f32 %v2712, %v2712
    %v2745 = vmul.f32 %v2713, %v2713
    %v2746 = vmul.f32 %v2714, %v2714
    %v2747 = vmul.f32 %v2715, %v2715
    %v2748 = vmul.f32 %v2716, %v2716
    %v2749 = vmul.f32 %v2717, %v2717
    %v2750 = vmul.f32 %v2718, %v2718
    %v2751 = vmul.f32 %v2719, %v2719
    %v2752 = vmul.f32 %v2720, %v2720
    %v2753 = vmul.f32 %v2721, %v2721
    %v2754 = vmul.f32 %v2722, %v2722
    %v2755 = vmul.f32 %v2723, %v2723
    %v2756 = vmul.f32 %v2724, %v2724
    %v2757 = vmul.f32 %v2725, %v2725
    %v2758 = vmul.f32 %v2726, %v2726
    %v2759 = vmul.f32 %v2727, %v2727
    %2760 = vadd.xlane.f32.xlu0 %v2728
    %v2761 = vpop.xlane.xlu0 %2760
    %2762 = vadd.xlane.f32.xlu0 %v2729
    %v2763 = vpop.xlane.xlu0 %2762
    %2764 = vadd.xlane.f32.xlu0 %v2730
    %v2765 = vpop.xlane.xlu0 %2764
    %2766 = vadd.xlane.f32.xlu0 %v2731
    %v2767 = vpop.xlane.xlu0 %2766
    %2768 = vadd.xlane.f32.xlu0 %v2732
    %v2769 = vpop.xlane.xlu0 %2768
    %2770 = vadd.xlane.f32.xlu0 %v2733
    %v2771 = vpop.xlane.xlu0 %2770
    %2772 = vadd.xlane.f32.xlu0 %v2734
    %v2773 = vpop.xlane.xlu0 %2772
    %2774 = vadd.xlane.f32.xlu0 %v2735
    %v2775 = vpop.xlane.xlu0 %2774
    %2776 = vadd.xlane.f32.xlu0 %v2736
    %v2777 = vpop.xlane.xlu0 %2776
    %2778 = vadd.xlane.f32.xlu0 %v2737
    %v2779 = vpop.xlane.xlu0 %2778
    %2780 = vadd.xlane.f32.xlu0 %v2738
    %v2781 = vpop.xlane.xlu0 %2780
    %2782 = vadd.xlane.f32.xlu0 %v2739
    %v2783 = vpop.xlane.xlu0 %2782
    %2784 = vadd.xlane.f32.xlu0 %v2740
    %v2785 = vpop.xlane.xlu0 %2784
    %2786 = vadd.xlane.f32.xlu0 %v2741
    %v2787 = vpop.xlane.xlu0 %2786
    %2788 = vadd.xlane.f32.xlu0 %v2742
    %v2789 = vpop.xlane.xlu0 %2788
    %2790 = vadd.xlane.f32.xlu0 %v2743
    %v2791 = vpop.xlane.xlu0 %2790
    %2792 = vadd.xlane.f32.xlu0 %v2744
    %v2793 = vpop.xlane.xlu0 %2792
    %2794 = vadd.xlane.f32.xlu0 %v2745
    %v2795 = vpop.xlane.xlu0 %2794
    %2796 = vadd.xlane.f32.xlu0 %v2746
    %v2797 = vpop.xlane.xlu0 %2796
    %2798 = vadd.xlane.f32.xlu0 %v2747
    %v2799 = vpop.xlane.xlu0 %2798
    %2800 = vadd.xlane.f32.xlu0 %v2748
    %v2801 = vpop.xlane.xlu0 %2800
    %2802 = vadd.xlane.f32.xlu0 %v2749
    %v2803 = vpop.xlane.xlu0 %2802
    %2804 = vadd.xlane.f32.xlu0 %v2750
    %v2805 = vpop.xlane.xlu0 %2804
    %2806 = vadd.xlane.f32.xlu0 %v2751
    %v2807 = vpop.xlane.xlu0 %2806
    %2808 = vadd.xlane.f32.xlu0 %v2752
    %v2809 = vpop.xlane.xlu0 %2808
    %2810 = vadd.xlane.f32.xlu0 %v2753
    %v2811 = vpop.xlane.xlu0 %2810
    %2812 = vadd.xlane.f32.xlu0 %v2754
    %v2813 = vpop.xlane.xlu0 %2812
    %2814 = vadd.xlane.f32.xlu0 %v2755
    %v2815 = vpop.xlane.xlu0 %2814
    %2816 = vadd.xlane.f32.xlu0 %v2756
    %v2817 = vpop.xlane.xlu0 %2816
    %2818 = vadd.xlane.f32.xlu0 %v2757
    %v2819 = vpop.xlane.xlu0 %2818
    %2820 = vadd.xlane.f32.xlu0 %v2758
    %v2821 = vpop.xlane.xlu0 %2820
    %2822 = vadd.xlane.f32.xlu0 %v2759
    %v2823 = vpop.xlane.xlu0 %2822
    %v2824 = vmul.f32 %v2761, 0.03125
    %v2825 = vmul.f32 %v2763, 0.03125
    %v2826 = vmul.f32 %v2765, 0.03125
    %v2827 = vmul.f32 %v2767, 0.03125
    %v2828 = vmul.f32 %v2769, 0.03125
    %v2829 = vmul.f32 %v2771, 0.03125
    %v2830 = vmul.f32 %v2773, 0.03125
    %v2831 = vmul.f32 %v2775, 0.03125
    %v2832 = vmul.f32 %v2777, 0.03125
    %v2833 = vmul.f32 %v2779, 0.03125
    %v2834 = vmul.f32 %v2781, 0.03125
    %v2835 = vmul.f32 %v2783, 0.03125
    %v2836 = vmul.f32 %v2785, 0.03125
    %v2837 = vmul.f32 %v2787, 0.03125
    %v2838 = vmul.f32 %v2789, 0.03125
    %v2839 = vmul.f32 %v2791, 0.03125
    %v2840 = vmul.f32 %v2793, 0.03125
    %v2841 = vmul.f32 %v2795, 0.03125
    %v2842 = vmul.f32 %v2797, 0.03125
    %v2843 = vmul.f32 %v2799, 0.03125
    %v2844 = vmul.f32 %v2801, 0.03125
    %v2845 = vmul.f32 %v2803, 0.03125
    %v2846 = vmul.f32 %v2805, 0.03125
    %v2847 = vmul.f32 %v2807, 0.03125
    %v2848 = vmul.f32 %v2809, 0.03125
    %v2849 = vmul.f32 %v2811, 0.03125
    %v2850 = vmul.f32 %v2813, 0.03125
    %v2851 = vmul.f32 %v2815, 0.03125
    %v2852 = vmul.f32 %v2817, 0.03125
    %v2853 = vmul.f32 %v2819, 0.03125
    %v2854 = vmul.f32 %v2821, 0.03125
    %v2855 = vmul.f32 %v2823, 0.03125
    %v2856 = vadd.f32 %v2824, 1e-05
    %v2857 = vadd.f32 %v2825, 1e-05
    %v2858 = vadd.f32 %v2826, 1e-05
    %v2859 = vadd.f32 %v2827, 1e-05
    %v2860 = vadd.f32 %v2828, 1e-05
    %v2861 = vadd.f32 %v2829, 1e-05
    %v2862 = vadd.f32 %v2830, 1e-05
    %v2863 = vadd.f32 %v2831, 1e-05
    %v2864 = vadd.f32 %v2832, 1e-05
    %v2865 = vadd.f32 %v2833, 1e-05
    %v2866 = vadd.f32 %v2834, 1e-05
    %v2867 = vadd.f32 %v2835, 1e-05
    %v2868 = vadd.f32 %v2836, 1e-05
    %v2869 = vadd.f32 %v2837, 1e-05
    %v2870 = vadd.f32 %v2838, 1e-05
    %v2871 = vadd.f32 %v2839, 1e-05
    %v2872 = vadd.f32 %v2840, 1e-05
    %v2873 = vadd.f32 %v2841, 1e-05
    %v2874 = vadd.f32 %v2842, 1e-05
    %v2875 = vadd.f32 %v2843, 1e-05
    %v2876 = vadd.f32 %v2844, 1e-05
    %v2877 = vadd.f32 %v2845, 1e-05
    %v2878 = vadd.f32 %v2846, 1e-05
    %v2879 = vadd.f32 %v2847, 1e-05
    %v2880 = vadd.f32 %v2848, 1e-05
    %v2881 = vadd.f32 %v2849, 1e-05
    %v2882 = vadd.f32 %v2850, 1e-05
    %v2883 = vadd.f32 %v2851, 1e-05
    %v2884 = vadd.f32 %v2852, 1e-05
    %v2885 = vadd.f32 %v2853, 1e-05
    %v2886 = vadd.f32 %v2854, 1e-05
    %v2887 = vadd.f32 %v2855, 1e-05
    %v2888 = vrsqrt.pop %v2856
    %v2889 = vmul.f32 %v2888, %v2856
    %v2890 = vmul.f32 %v2889, %v2888
    %v2891 = vmul.f32 0.5, %v2890
    %v2892 = vsub.f32 1.5, %v2891
    %v2893 = vmul.f32 %v2888, %v2892
    %vm2894 = vweird.f32 %v2856
    %vm2895 = vweird.f32 %v2888
    %vm2896 = vmor %vm2894, %vm2895
    %v2897 = vsel %vm2896, %v2888, %v2893
    %v2898 = vrsqrt.pop %v2857
    %v2899 = vmul.f32 %v2898, %v2857
    %v2900 = vmul.f32 %v2899, %v2898
    %v2901 = vmul.f32 0.5, %v2900
    %v2902 = vsub.f32 1.5, %v2901
    %v2903 = vmul.f32 %v2898, %v2902
    %vm2904 = vweird.f32 %v2857
    %vm2905 = vweird.f32 %v2898
    %vm2906 = vmor %vm2904, %vm2905
    %v2907 = vsel %vm2906, %v2898, %v2903
    %v2908 = vrsqrt.pop %v2858
    %v2909 = vmul.f32 %v2908, %v2858
    %v2910 = vmul.f32 %v2909, %v2908
    %v2911 = vmul.f32 0.5, %v2910
    %v2912 = vsub.f32 1.5, %v2911
    %v2913 = vmul.f32 %v2908, %v2912
    %vm2914 = vweird.f32 %v2858
    %vm2915 = vweird.f32 %v2908
    %vm2916 = vmor %vm2914, %vm2915
    %v2917 = vsel %vm2916, %v2908, %v2913
    %v2918 = vrsqrt.pop %v2859
    %v2919 = vmul.f32 %v2918, %v2859
    %v2920 = vmul.f32 %v2919, %v2918
    %v2921 = vmul.f32 0.5, %v2920
    %v2922 = vsub.f32 1.5, %v2921
    %v2923 = vmul.f32 %v2918, %v2922
    %vm2924 = vweird.f32 %v2859
    %vm2925 = vweird.f32 %v2918
    %vm2926 = vmor %vm2924, %vm2925
    %v2927 = vsel %vm2926, %v2918, %v2923
    %v2928 = vrsqrt.pop %v2860
    %v2929 = vmul.f32 %v2928, %v2860
    %v2930 = vmul.f32 %v2929, %v2928
    %v2931 = vmul.f32 0.5, %v2930
    %v2932 = vsub.f32 1.5, %v2931
    %v2933 = vmul.f32 %v2928, %v2932
    %vm2934 = vweird.f32 %v2860
    %vm2935 = vweird.f32 %v2928
    %vm2936 = vmor %vm2934, %vm2935
    %v2937 = vsel %vm2936, %v2928, %v2933
    %v2938 = vrsqrt.pop %v2861
    %v2939 = vmul.f32 %v2938, %v2861
    %v2940 = vmul.f32 %v2939, %v2938
    %v2941 = vmul.f32 0.5, %v2940
    %v2942 = vsub.f32 1.5, %v2941
    %v2943 = vmul.f32 %v2938, %v2942
    %vm2944 = vweird.f32 %v2861
    %vm2945 = vweird.f32 %v2938
    %vm2946 = vmor %vm2944, %vm2945
    %v2947 = vsel %vm2946, %v2938, %v2943
    %v2948 = vrsqrt.pop %v2862
    %v2949 = vmul.f32 %v2948, %v2862
    %v2950 = vmul.f32 %v2949, %v2948
    %v2951 = vmul.f32 0.5, %v2950
    %v2952 = vsub.f32 1.5, %v2951
    %v2953 = vmul.f32 %v2948, %v2952
    %vm2954 = vweird.f32 %v2862
    %vm2955 = vweird.f32 %v2948
    %vm2956 = vmor %vm2954, %vm2955
    %v2957 = vsel %vm2956, %v2948, %v2953
    %v2958 = vrsqrt.pop %v2863
    %v2959 = vmul.f32 %v2958, %v2863
    %v2960 = vmul.f32 %v2959, %v2958
    %v2961 = vmul.f32 0.5, %v2960
    %v2962 = vsub.f32 1.5, %v2961
    %v2963 = vmul.f32 %v2958, %v2962
    %vm2964 = vweird.f32 %v2863
    %vm2965 = vweird.f32 %v2958
    %vm2966 = vmor %vm2964, %vm2965
    %v2967 = vsel %vm2966, %v2958, %v2963
    %v2968 = vrsqrt.pop %v2864
    %v2969 = vmul.f32 %v2968, %v2864
    %v2970 = vmul.f32 %v2969, %v2968
    %v2971 = vmul.f32 0.5, %v2970
    %v2972 = vsub.f32 1.5, %v2971
    %v2973 = vmul.f32 %v2968, %v2972
    %vm2974 = vweird.f32 %v2864
    %vm2975 = vweird.f32 %v2968
    %vm2976 = vmor %vm2974, %vm2975
    %v2977 = vsel %vm2976, %v2968, %v2973
    %v2978 = vrsqrt.pop %v2865
    %v2979 = vmul.f32 %v2978, %v2865
    %v2980 = vmul.f32 %v2979, %v2978
    %v2981 = vmul.f32 0.5, %v2980
    %v2982 = vsub.f32 1.5, %v2981
    %v2983 = vmul.f32 %v2978, %v2982
    %vm2984 = vweird.f32 %v2865
    %vm2985 = vweird.f32 %v2978
    %vm2986 = vmor %vm2984, %vm2985
    %v2987 = vsel %vm2986, %v2978, %v2983
    %v2988 = vrsqrt.pop %v2866
    %v2989 = vmul.f32 %v2988, %v2866
    %v2990 = vmul.f32 %v2989, %v2988
    %v2991 = vmul.f32 0.5, %v2990
    %v2992 = vsub.f32 1.5, %v2991
    %v2993 = vmul.f32 %v2988, %v2992
    %vm2994 = vweird.f32 %v2866
    %vm2995 = vweird.f32 %v2988
    %vm2996 = vmor %vm2994, %vm2995
    %v2997 = vsel %vm2996, %v2988, %v2993
    %v2998 = vrsqrt.pop %v2867
    %v2999 = vmul.f32 %v2998, %v2867
    %v3000 = vmul.f32 %v2999, %v2998
    %v3001 = vmul.f32 0.5, %v3000
    %v3002 = vsub.f32 1.5, %v3001
    %v3003 = vmul.f32 %v2998, %v3002
    %vm3004 = vweird.f32 %v2867
    %vm3005 = vweird.f32 %v2998
    %vm3006 = vmor %vm3004, %vm3005
    %v3007 = vsel %vm3006, %v2998, %v3003
    %v3008 = vrsqrt.pop %v2868
    %v3009 = vmul.f32 %v3008, %v2868
    %v3010 = vmul.f32 %v3009, %v3008
    %v3011 = vmul.f32 0.5, %v3010
    %v3012 = vsub.f32 1.5, %v3011
    %v3013 = vmul.f32 %v3008, %v3012
    %vm3014 = vweird.f32 %v2868
    %vm3015 = vweird.f32 %v3008
    %vm3016 = vmor %vm3014, %vm3015
    %v3017 = vsel %vm3016, %v3008, %v3013
    %v3018 = vrsqrt.pop %v2869
    %v3019 = vmul.f32 %v3018, %v2869
    %v3020 = vmul.f32 %v3019, %v3018
    %v3021 = vmul.f32 0.5, %v3020
    %v3022 = vsub.f32 1.5, %v3021
    %v3023 = vmul.f32 %v3018, %v3022
    %vm3024 = vweird.f32 %v2869
    %vm3025 = vweird.f32 %v3018
    %vm3026 = vmor %vm3024, %vm3025
    %v3027 = vsel %vm3026, %v3018, %v3023
    %v3028 = vrsqrt.pop %v2870
    %v3029 = vmul.f32 %v3028, %v2870
    %v3030 = vmul.f32 %v3029, %v3028
    %v3031 = vmul.f32 0.5, %v3030
    %v3032 = vsub.f32 1.5, %v3031
    %v3033 = vmul.f32 %v3028, %v3032
    %vm3034 = vweird.f32 %v2870
    %vm3035 = vweird.f32 %v3028
    %vm3036 = vmor %vm3034, %vm3035
    %v3037 = vsel %vm3036, %v3028, %v3033
    %v3038 = vrsqrt.pop %v2871
    %v3039 = vmul.f32 %v3038, %v2871
    %v3040 = vmul.f32 %v3039, %v3038
    %v3041 = vmul.f32 0.5, %v3040
    %v3042 = vsub.f32 1.5, %v3041
    %v3043 = vmul.f32 %v3038, %v3042
    %vm3044 = vweird.f32 %v2871
    %vm3045 = vweird.f32 %v3038
    %vm3046 = vmor %vm3044, %vm3045
    %v3047 = vsel %vm3046, %v3038, %v3043
    %v3048 = vrsqrt.pop %v2872
    %v3049 = vmul.f32 %v3048, %v2872
    %v3050 = vmul.f32 %v3049, %v3048
    %v3051 = vmul.f32 0.5, %v3050
    %v3052 = vsub.f32 1.5, %v3051
    %v3053 = vmul.f32 %v3048, %v3052
    %vm3054 = vweird.f32 %v2872
    %vm3055 = vweird.f32 %v3048
    %vm3056 = vmor %vm3054, %vm3055
    %v3057 = vsel %vm3056, %v3048, %v3053
    %v3058 = vrsqrt.pop %v2873
    %v3059 = vmul.f32 %v3058, %v2873
    %v3060 = vmul.f32 %v3059, %v3058
    %v3061 = vmul.f32 0.5, %v3060
    %v3062 = vsub.f32 1.5, %v3061
    %v3063 = vmul.f32 %v3058, %v3062
    %vm3064 = vweird.f32 %v2873
    %vm3065 = vweird.f32 %v3058
    %vm3066 = vmor %vm3064, %vm3065
    %v3067 = vsel %vm3066, %v3058, %v3063
    %v3068 = vrsqrt.pop %v2874
    %v3069 = vmul.f32 %v3068, %v2874
    %v3070 = vmul.f32 %v3069, %v3068
    %v3071 = vmul.f32 0.5, %v3070
    %v3072 = vsub.f32 1.5, %v3071
    %v3073 = vmul.f32 %v3068, %v3072
    %vm3074 = vweird.f32 %v2874
    %vm3075 = vweird.f32 %v3068
    %vm3076 = vmor %vm3074, %vm3075
    %v3077 = vsel %vm3076, %v3068, %v3073
    %v3078 = vrsqrt.pop %v2875
    %v3079 = vmul.f32 %v3078, %v2875
    %v3080 = vmul.f32 %v3079, %v3078
    %v3081 = vmul.f32 0.5, %v3080
    %v3082 = vsub.f32 1.5, %v3081
    %v3083 = vmul.f32 %v3078, %v3082
    %vm3084 = vweird.f32 %v2875
    %vm3085 = vweird.f32 %v3078
    %vm3086 = vmor %vm3084, %vm3085
    %v3087 = vsel %vm3086, %v3078, %v3083
    %v3088 = vrsqrt.pop %v2876
    %v3089 = vmul.f32 %v3088, %v2876
    %v3090 = vmul.f32 %v3089, %v3088
    %v3091 = vmul.f32 0.5, %v3090
    %v3092 = vsub.f32 1.5, %v3091
    %v3093 = vmul.f32 %v3088, %v3092
    %vm3094 = vweird.f32 %v2876
    %vm3095 = vweird.f32 %v3088
    %vm3096 = vmor %vm3094, %vm3095
    %v3097 = vsel %vm3096, %v3088, %v3093
    %v3098 = vrsqrt.pop %v2877
    %v3099 = vmul.f32 %v3098, %v2877
    %v3100 = vmul.f32 %v3099, %v3098
    %v3101 = vmul.f32 0.5, %v3100
    %v3102 = vsub.f32 1.5, %v3101
    %v3103 = vmul.f32 %v3098, %v3102
    %vm3104 = vweird.f32 %v2877
    %vm3105 = vweird.f32 %v3098
    %vm3106 = vmor %vm3104, %vm3105
    %v3107 = vsel %vm3106, %v3098, %v3103
    %v3108 = vrsqrt.pop %v2878
    %v3109 = vmul.f32 %v3108, %v2878
    %v3110 = vmul.f32 %v3109, %v3108
    %v3111 = vmul.f32 0.5, %v3110
    %v3112 = vsub.f32 1.5, %v3111
    %v3113 = vmul.f32 %v3108, %v3112
    %vm3114 = vweird.f32 %v2878
    %vm3115 = vweird.f32 %v3108
    %vm3116 = vmor %vm3114, %vm3115
    %v3117 = vsel %vm3116, %v3108, %v3113
    %v3118 = vrsqrt.pop %v2879
    %v3119 = vmul.f32 %v3118, %v2879
    %v3120 = vmul.f32 %v3119, %v3118
    %v3121 = vmul.f32 0.5, %v3120
    %v3122 = vsub.f32 1.5, %v3121
    %v3123 = vmul.f32 %v3118, %v3122
    %vm3124 = vweird.f32 %v2879
    %vm3125 = vweird.f32 %v3118
    %vm3126 = vmor %vm3124, %vm3125
    %v3127 = vsel %vm3126, %v3118, %v3123
    %v3128 = vrsqrt.pop %v2880
    %v3129 = vmul.f32 %v3128, %v2880
    %v3130 = vmul.f32 %v3129, %v3128
    %v3131 = vmul.f32 0.5, %v3130
    %v3132 = vsub.f32 1.5, %v3131
    %v3133 = vmul.f32 %v3128, %v3132
    %vm3134 = vweird.f32 %v2880
    %vm3135 = vweird.f32 %v3128
    %vm3136 = vmor %vm3134, %vm3135
    %v3137 = vsel %vm3136, %v3128, %v3133
    %v3138 = vrsqrt.pop %v2881
    %v3139 = vmul.f32 %v3138, %v2881
    %v3140 = vmul.f32 %v3139, %v3138
    %v3141 = vmul.f32 0.5, %v3140
    %v3142 = vsub.f32 1.5, %v3141
    %v3143 = vmul.f32 %v3138, %v3142
    %vm3144 = vweird.f32 %v2881
    %vm3145 = vweird.f32 %v3138
    %vm3146 = vmor %vm3144, %vm3145
    %v3147 = vsel %vm3146, %v3138, %v3143
    %v3148 = vrsqrt.pop %v2882
    %v3149 = vmul.f32 %v3148, %v2882
    %v3150 = vmul.f32 %v3149, %v3148
    %v3151 = vmul.f32 0.5, %v3150
    %v3152 = vsub.f32 1.5, %v3151
    %v3153 = vmul.f32 %v3148, %v3152
    %vm3154 = vweird.f32 %v2882
    %vm3155 = vweird.f32 %v3148
    %vm3156 = vmor %vm3154, %vm3155
    %v3157 = vsel %vm3156, %v3148, %v3153
    %v3158 = vrsqrt.pop %v2883
    %v3159 = vmul.f32 %v3158, %v2883
    %v3160 = vmul.f32 %v3159, %v3158
    %v3161 = vmul.f32 0.5, %v3160
    %v3162 = vsub.f32 1.5, %v3161
    %v3163 = vmul.f32 %v3158, %v3162
    %vm3164 = vweird.f32 %v2883
    %vm3165 = vweird.f32 %v3158
    %vm3166 = vmor %vm3164, %vm3165
    %v3167 = vsel %vm3166, %v3158, %v3163
    %v3168 = vrsqrt.pop %v2884
    %v3169 = vmul.f32 %v3168, %v2884
    %v3170 = vmul.f32 %v3169, %v3168
    %v3171 = vmul.f32 0.5, %v3170
    %v3172 = vsub.f32 1.5, %v3171
    %v3173 = vmul.f32 %v3168, %v3172
    %vm3174 = vweird.f32 %v2884
    %vm3175 = vweird.f32 %v3168
    %vm3176 = vmor %vm3174, %vm3175
    %v3177 = vsel %vm3176, %v3168, %v3173
    %v3178 = vrsqrt.pop %v2885
    %v3179 = vmul.f32 %v3178, %v2885
    %v3180 = vmul.f32 %v3179, %v3178
    %v3181 = vmul.f32 0.5, %v3180
    %v3182 = vsub.f32 1.5, %v3181
    %v3183 = vmul.f32 %v3178, %v3182
    %vm3184 = vweird.f32 %v2885
    %vm3185 = vweird.f32 %v3178
    %vm3186 = vmor %vm3184, %vm3185
    %v3187 = vsel %vm3186, %v3178, %v3183
    %v3188 = vrsqrt.pop %v2886
    %v3189 = vmul.f32 %v3188, %v2886
    %v3190 = vmul.f32 %v3189, %v3188
    %v3191 = vmul.f32 0.5, %v3190
    %v3192 = vsub.f32 1.5, %v3191
    %v3193 = vmul.f32 %v3188, %v3192
    %vm3194 = vweird.f32 %v2886
    %vm3195 = vweird.f32 %v3188
    %vm3196 = vmor %vm3194, %vm3195
    %v3197 = vsel %vm3196, %v3188, %v3193
    %v3198 = vrsqrt.pop %v2887
    %v3199 = vmul.f32 %v3198, %v2887
    %v3200 = vmul.f32 %v3199, %v3198
    %v3201 = vmul.f32 0.5, %v3200
    %v3202 = vsub.f32 1.5, %v3201
    %v3203 = vmul.f32 %v3198, %v3202
    %vm3204 = vweird.f32 %v2887
    %vm3205 = vweird.f32 %v3198
    %vm3206 = vmor %vm3204, %vm3205
    %v3207 = vsel %vm3206, %v3198, %v3203
    %v3208 = vmul.f32 %v2696, %v2897
    %v3209 = vmul.f32 %v2697, %v2907
    %v3210 = vmul.f32 %v2698, %v2917
    %v3211 = vmul.f32 %v2699, %v2927
    %v3212 = vmul.f32 %v2700, %v2937
    %v3213 = vmul.f32 %v2701, %v2947
    %v3214 = vmul.f32 %v2702, %v2957
    %v3215 = vmul.f32 %v2703, %v2967
    %v3216 = vmul.f32 %v2704, %v2977
    %v3217 = vmul.f32 %v2705, %v2987
    %v3218 = vmul.f32 %v2706, %v2997
    %v3219 = vmul.f32 %v2707, %v3007
    %v3220 = vmul.f32 %v2708, %v3017
    %v3221 = vmul.f32 %v2709, %v3027
    %v3222 = vmul.f32 %v2710, %v3037
    %v3223 = vmul.f32 %v2711, %v3047
    %v3224 = vmul.f32 %v2712, %v3057
    %v3225 = vmul.f32 %v2713, %v3067
    %v3226 = vmul.f32 %v2714, %v3077
    %v3227 = vmul.f32 %v2715, %v3087
    %v3228 = vmul.f32 %v2716, %v3097
    %v3229 = vmul.f32 %v2717, %v3107
    %v3230 = vmul.f32 %v2718, %v3117
    %v3231 = vmul.f32 %v2719, %v3127
    %v3232 = vmul.f32 %v2720, %v3137
    %v3233 = vmul.f32 %v2721, %v3147
    %v3234 = vmul.f32 %v2722, %v3157
    %v3235 = vmul.f32 %v2723, %v3167
    %v3236 = vmul.f32 %v2724, %v3177
    %v3237 = vmul.f32 %v2725, %v3187
    %v3238 = vmul.f32 %v2726, %v3197
    %v3239 = vmul.f32 %v2727, %v3207
    %v3241 = vperm.slane %v2531, 0
    %v3243 = vmul.f32 %v3208, %v3241
    %v3244 = vmul.f32 %v3209, %v3241
    %v3245 = vmul.f32 %v3210, %v3241
    %v3246 = vmul.f32 %v3211, %v3241
    %v3247 = vmul.f32 %v3212, %v3241
    %v3248 = vmul.f32 %v3213, %v3241
    %v3249 = vmul.f32 %v3214, %v3241
    %v3250 = vmul.f32 %v3215, %v3241
    %v3251 = vmul.f32 %v3216, %v3241
    %v3252 = vmul.f32 %v3217, %v3241
    %v3253 = vmul.f32 %v3218, %v3241
    %v3254 = vmul.f32 %v3219, %v3241
    %v3255 = vmul.f32 %v3220, %v3241
    %v3256 = vmul.f32 %v3221, %v3241
    %v3257 = vmul.f32 %v3222, %v3241
    %v3258 = vmul.f32 %v3223, %v3241
    %v3259 = vmul.f32 %v3224, %v3241
    %v3260 = vmul.f32 %v3225, %v3241
    %v3261 = vmul.f32 %v3226, %v3241
    %v3262 = vmul.f32 %v3227, %v3241
    %v3263 = vmul.f32 %v3228, %v3241
    %v3264 = vmul.f32 %v3229, %v3241
    %v3265 = vmul.f32 %v3230, %v3241
    %v3266 = vmul.f32 %v3231, %v3241
    %v3267 = vmul.f32 %v3232, %v3241
    %v3268 = vmul.f32 %v3233, %v3241
    %v3269 = vmul.f32 %v3234, %v3241
    %v3270 = vmul.f32 %v3235, %v3241
    %v3271 = vmul.f32 %v3236, %v3241
    %v3272 = vmul.f32 %v3237, %v3241
    %v3273 = vmul.f32 %v3238, %v3241
    %v3274 = vmul.f32 %v3239, %v3241
    %v3276 = vperm.slane %v2532, 0
    %v3278 = vadd.f32 %v3243, %v3276
    %v3279 = vadd.f32 %v3244, %v3276
    %v3280 = vadd.f32 %v3245, %v3276
    %v3281 = vadd.f32 %v3246, %v3276
    %v3282 = vadd.f32 %v3247, %v3276
    %v3283 = vadd.f32 %v3248, %v3276
    %v3284 = vadd.f32 %v3249, %v3276
    %v3285 = vadd.f32 %v3250, %v3276
    %v3286 = vadd.f32 %v3251, %v3276
    %v3287 = vadd.f32 %v3252, %v3276
    %v3288 = vadd.f32 %v3253, %v3276
    %v3289 = vadd.f32 %v3254, %v3276
    %v3290 = vadd.f32 %v3255, %v3276
    %v3291 = vadd.f32 %v3256, %v3276
    %v3292 = vadd.f32 %v3257, %v3276
    %v3293 = vadd.f32 %v3258, %v3276
    %v3294 = vadd.f32 %v3259, %v3276
    %v3295 = vadd.f32 %v3260, %v3276
    %v3296 = vadd.f32 %v3261, %v3276
    %v3297 = vadd.f32 %v3262, %v3276
    %v3298 = vadd.f32 %v3263, %v3276
    %v3299 = vadd.f32 %v3264, %v3276
    %v3300 = vadd.f32 %v3265, %v3276
    %v3301 = vadd.f32 %v3266, %v3276
    %v3302 = vadd.f32 %v3267, %v3276
    %v3303 = vadd.f32 %v3268, %v3276
    %v3304 = vadd.f32 %v3269, %v3276
    %v3305 = vadd.f32 %v3270, %v3276
    %v3306 = vadd.f32 %v3271, %v3276
    %v3307 = vadd.f32 %v3272, %v3276
    %v3308 = vadd.f32 %v3273, %v3276
    %v3309 = vadd.f32 %v3274, %v3276
    %v3310 = vld [vmem:[#allocation2] sm:$0xff]
    %v3311 = vld [vmem:[#allocation2 + $0x8] sm:$0xff]
    %v3312 = vld [vmem:[#allocation2 + $0x10] sm:$0xff]
    %v3313 = vld [vmem:[#allocation2 + $0x18] sm:$0xff]
    %v3314 = vld [vmem:[#allocation2 + $0x20] sm:$0xff]
    %v3315 = vld [vmem:[#allocation2 + $0x28] sm:$0xff]
    %v3316 = vld [vmem:[#allocation2 + $0x30] sm:$0xff]
    %v3317 = vld [vmem:[#allocation2 + $0x38] sm:$0xff]
    %v3318 = vld [vmem:[#allocation2 + $0x40] sm:$0xff]
    %v3319 = vld [vmem:[#allocation2 + $0x48] sm:$0xff]
    %v3320 = vld [vmem:[#allocation2 + $0x50] sm:$0xff]
    %v3321 = vld [vmem:[#allocation2 + $0x58] sm:$0xff]
    %v3322 = vld [vmem:[#allocation2 + $0x60] sm:$0xff]
    %v3323 = vld [vmem:[#allocation2 + $0x68] sm:$0xff]
    %v3324 = vld [vmem:[#allocation2 + $0x70] sm:$0xff]
    %v3325 = vld [vmem:[#allocation2 + $0x78] sm:$0xff]
    %v3326 = vld [vmem:[#allocation2 + $0x80] sm:$0xff]
    %v3327 = vld [vmem:[#allocation2 + $0x88] sm:$0xff]
    %v3328 = vld [vmem:[#allocation2 + $0x90] sm:$0xff]
    %v3329 = vld [vmem:[#allocation2 + $0x98] sm:$0xff]
    %v3330 = vld [vmem:[#allocation2 + $0xa0] sm:$0xff]
    %v3331 = vld [vmem:[#allocation2 + $0xa8] sm:$0xff]
    %v3332 = vld [vmem:[#allocation2 + $0xb0] sm:$0xff]
    %v3333 = vld [vmem:[#allocation2 + $0xb8] sm:$0xff]
    %v3334 = vld [vmem:[#allocation2 + $0xc0] sm:$0xff]
    %v3335 = vld [vmem:[#allocation2 + $0xc8] sm:$0xff]
    %v3336 = vld [vmem:[#allocation2 + $0xd0] sm:$0xff]
    %v3337 = vld [vmem:[#allocation2 + $0xd8] sm:$0xff]
    %v3338 = vld [vmem:[#allocation2 + $0xe0] sm:$0xff]
    %v3339 = vld [vmem:[#allocation2 + $0xe8] sm:$0xff]
    %v3340 = vld [vmem:[#allocation2 + $0xf0] sm:$0xff]
    %v3341 = vld [vmem:[#allocation2 + $0xf8] sm:$0xff]
    %v3342 = vpack.c.bf16 %v3279, %v3278
    %v3343 = vpack.c.bf16 %v3281, %v3280
    %v3344 = vpack.c.bf16 %v3283, %v3282
    %v3345 = vpack.c.bf16 %v3285, %v3284
    %v3346 = vpack.c.bf16 %v3287, %v3286
    %v3347 = vpack.c.bf16 %v3289, %v3288
    %v3348 = vpack.c.bf16 %v3291, %v3290
    %v3349 = vpack.c.bf16 %v3293, %v3292
    %v3350 = vpack.c.bf16 %v3295, %v3294
    %v3351 = vpack.c.bf16 %v3297, %v3296
    %v3352 = vpack.c.bf16 %v3299, %v3298
    %v3353 = vpack.c.bf16 %v3301, %v3300
    %v3354 = vpack.c.bf16 %v3303, %v3302
    %v3355 = vpack.c.bf16 %v3305, %v3304
    %v3356 = vpack.c.bf16 %v3307, %v3306
    %v3357 = vpack.c.bf16 %v3309, %v3308
    %3358 = vmatpush.bf16.msra.mxu0 %v3349
    %3359 = vmatpush.bf16.msra.mxu0 %v3348
    %3360 = vmatpush.bf16.msra.mxu0 %v3347
    %3361 = vmatpush.bf16.msra.mxu0 %v3346
    %3362 = vmatpush.bf16.msra.mxu0 %v3345
    %3363 = vmatpush.bf16.msra.mxu0 %v3344
    %3364 = vmatpush.bf16.msra.mxu0 %v3343
    %3365 = vmatpush.bf16.msra.mxu0 %v3342
    %3366 = vmatmul.bf16.gmra.mxu0 %v740
    %v3367 = vpop.f32.mrf.mxu0
    %v3368 = vadd.f32 0.0, %v3367
    %v3369 = vpop.f32.mrf.mxu0
    %v3370 = vadd.f32 0.0, %v3369
    %3371 = vmatmul.bf16.gmra.mxu0 %v742
    %v3372 = vpop.f32.mrf.mxu0
    %v3373 = vadd.f32 0.0, %v3372
    %v3374 = vpop.f32.mrf.mxu0
    %v3375 = vadd.f32 0.0, %v3374
    %3376 = vmatmul.bf16.gmra.mxu0 %v744
    %v3377 = vpop.f32.mrf.mxu0
    %v3378 = vadd.f32 0.0, %v3377
    %v3379 = vpop.f32.mrf.mxu0
    %v3380 = vadd.f32 0.0, %v3379
    %3381 = vmatmul.bf16.gmra.mxu0 %v746
    %v3382 = vpop.f32.mrf.mxu0
    %v3383 = vadd.f32 0.0, %v3382
    %v3384 = vpop.f32.mrf.mxu0
    %v3385 = vadd.f32 0.0, %v3384
    %3386 = vmatmul.bf16.gmra.mxu0 %v748
    %v3387 = vpop.f32.mrf.mxu0
    %v3388 = vadd.f32 0.0, %v3387
    %v3389 = vpop.f32.mrf.mxu0
    %v3390 = vadd.f32 0.0, %v3389
    %3391 = vmatmul.bf16.gmra.mxu0 %v750
    %v3392 = vpop.f32.mrf.mxu0
    %v3393 = vadd.f32 0.0, %v3392
    %v3394 = vpop.f32.mrf.mxu0
    %v3395 = vadd.f32 0.0, %v3394
    %3396 = vmatmul.bf16.gmra.mxu0 %v752
    %v3397 = vpop.f32.mrf.mxu0
    %v3398 = vadd.f32 0.0, %v3397
    %v3399 = vpop.f32.mrf.mxu0
    %v3400 = vadd.f32 0.0, %v3399
    %3401 = vmatmul.bf16.gmra.mxu0 %v754
    %v3402 = vpop.f32.mrf.mxu0
    %v3403 = vadd.f32 0.0, %v3402
    %v3404 = vpop.f32.mrf.mxu0
    %v3405 = vadd.f32 0.0, %v3404
    %3406 = vmatmul.bf16.gmra.mxu0 %v756
    %v3407 = vpop.f32.mrf.mxu0
    %v3408 = vadd.f32 0.0, %v3407
    %v3409 = vpop.f32.mrf.mxu0
    %v3410 = vadd.f32 0.0, %v3409
    %3411 = vmatmul.bf16.gmra.mxu0 %v758
    %v3412 = vpop.f32.mrf.mxu0
    %v3413 = vadd.f32 0.0, %v3412
    %v3414 = vpop.f32.mrf.mxu0
    %v3415 = vadd.f32 0.0, %v3414
    %3416 = vmatmul.bf16.gmra.mxu0 %v760
    %v3417 = vpop.f32.mrf.mxu0
    %v3418 = vadd.f32 0.0, %v3417
    %v3419 = vpop.f32.mrf.mxu0
    %v3420 = vadd.f32 0.0, %v3419
    %3421 = vmatmul.bf16.gmra.mxu0 %v762
    %v3422 = vpop.f32.mrf.mxu0
    %v3423 = vadd.f32 0.0, %v3422
    %v3424 = vpop.f32.mrf.mxu0
    %v3425 = vadd.f32 0.0, %v3424
    %3426 = vmatmul.bf16.gmra.mxu0 %v764
    %v3427 = vpop.f32.mrf.mxu0
    %v3428 = vadd.f32 0.0, %v3427
    %v3429 = vpop.f32.mrf.mxu0
    %v3430 = vadd.f32 0.0, %v3429
    %3431 = vmatmul.bf16.gmra.mxu0 %v766
    %v3432 = vpop.f32.mrf.mxu0
    %v3433 = vadd.f32 0.0, %v3432
    %v3434 = vpop.f32.mrf.mxu0
    %v3435 = vadd.f32 0.0, %v3434
    %3436 = vmatmul.bf16.gmra.mxu0 %v768
    %v3437 = vpop.f32.mrf.mxu0
    %v3438 = vadd.f32 0.0, %v3437
    %v3439 = vpop.f32.mrf.mxu0
    %v3440 = vadd.f32 0.0, %v3439
    %3441 = vmatmul.bf16.gmra.mxu0 %v770
    %v3442 = vpop.f32.mrf.mxu0
    %v3443 = vadd.f32 0.0, %v3442
    %v3444 = vpop.f32.mrf.mxu0
    %v3445 = vadd.f32 0.0, %v3444
    %3446 = vdwg.mxu0
    %3447 = vmatpush.bf16.msra.mxu0 %v3357
    %3448 = vmatpush.bf16.msra.mxu0 %v3356
    %3449 = vmatpush.bf16.msra.mxu0 %v3355
    %3450 = vmatpush.bf16.msra.mxu0 %v3354
    %3451 = vmatpush.bf16.msra.mxu0 %v3353
    %3452 = vmatpush.bf16.msra.mxu0 %v3352
    %3453 = vmatpush.bf16.msra.mxu0 %v3351
    %3454 = vmatpush.bf16.msra.mxu0 %v3350
    %3455 = vmatmul.bf16.gmra.mxu0 %v741
    %v3456 = vpop.f32.mrf.mxu0
    %v3457 = vadd.f32 %v3368, %v3456
    %v3458 = vpop.f32.mrf.mxu0
    %v3459 = vadd.f32 %v3370, %v3458
    %3460 = vmatmul.bf16.gmra.mxu0 %v743
    %v3461 = vpop.f32.mrf.mxu0
    %v3462 = vadd.f32 %v3373, %v3461
    %v3463 = vpop.f32.mrf.mxu0
    %v3464 = vadd.f32 %v3375, %v3463
    %3465 = vmatmul.bf16.gmra.mxu0 %v745
    %v3466 = vpop.f32.mrf.mxu0
    %v3467 = vadd.f32 %v3378, %v3466
    %v3468 = vpop.f32.mrf.mxu0
    %v3469 = vadd.f32 %v3380, %v3468
    %3470 = vmatmul.bf16.gmra.mxu0 %v747
    %v3471 = vpop.f32.mrf.mxu0
    %v3472 = vadd.f32 %v3383, %v3471
    %v3473 = vpop.f32.mrf.mxu0
    %v3474 = vadd.f32 %v3385, %v3473
    %3475 = vmatmul.bf16.gmra.mxu0 %v749
    %v3476 = vpop.f32.mrf.mxu0
    %v3477 = vadd.f32 %v3388, %v3476
    %v3478 = vpop.f32.mrf.mxu0
    %v3479 = vadd.f32 %v3390, %v3478
    %3480 = vmatmul.bf16.gmra.mxu0 %v751
    %v3481 = vpop.f32.mrf.mxu0
    %v3482 = vadd.f32 %v3393, %v3481
    %v3483 = vpop.f32.mrf.mxu0
    %v3484 = vadd.f32 %v3395, %v3483
    %3485 = vmatmul.bf16.gmra.mxu0 %v753
    %v3486 = vpop.f32.mrf.mxu0
    %v3487 = vadd.f32 %v3398, %v3486
    %v3488 = vpop.f32.mrf.mxu0
    %v3489 = vadd.f32 %v3400, %v3488
    %3490 = vmatmul.bf16.gmra.mxu0 %v755
    %v3491 = vpop.f32.mrf.mxu0
    %v3492 = vadd.f32 %v3403, %v3491
    %v3493 = vpop.f32.mrf.mxu0
    %v3494 = vadd.f32 %v3405, %v3493
    %3495 = vmatmul.bf16.gmra.mxu0 %v757
    %v3496 = vpop.f32.mrf.mxu0
    %v3497 = vadd.f32 %v3408, %v3496
    %v3498 = vpop.f32.mrf.mxu0
    %v3499 = vadd.f32 %v3410, %v3498
    %3500 = vmatmul.bf16.gmra.mxu0 %v759
    %v3501 = vpop.f32.mrf.mxu0
    %v3502 = vadd.f32 %v3413, %v3501
    %v3503 = vpop.f32.mrf.mxu0
    %v3504 = vadd.f32 %v3415, %v3503
    %3505 = vmatmul.bf16.gmra.mxu0 %v761
    %v3506 = vpop.f32.mrf.mxu0
    %v3507 = vadd.f32 %v3418, %v3506
    %v3508 = vpop.f32.mrf.mxu0
    %v3509 = vadd.f32 %v3420, %v3508
    %3510 = vmatmul.bf16.gmra.mxu0 %v763
    %v3511 = vpop.f32.mrf.mxu0
    %v3512 = vadd.f32 %v3423, %v3511
    %v3513 = vpop.f32.mrf.mxu0
    %v3514 = vadd.f32 %v3425, %v3513
    %3515 = vmatmul.bf16.gmra.mxu0 %v765
    %v3516 = vpop.f32.mrf.mxu0
    %v3517 = vadd.f32 %v3428, %v3516
    %v3518 = vpop.f32.mrf.mxu0
    %v3519 = vadd.f32 %v3430, %v3518
    %3520 = vmatmul.bf16.gmra.mxu0 %v767
    %v3521 = vpop.f32.mrf.mxu0
    %v3522 = vadd.f32 %v3433, %v3521
    %v3523 = vpop.f32.mrf.mxu0
    %v3524 = vadd.f32 %v3435, %v3523
    %3525 = vmatmul.bf16.gmra.mxu0 %v769
    %v3526 = vpop.f32.mrf.mxu0
    %v3527 = vadd.f32 %v3438, %v3526
    %v3528 = vpop.f32.mrf.mxu0
    %v3529 = vadd.f32 %v3440, %v3528
    %3530 = vmatmul.bf16.gmra.mxu0 %v771
    %v3531 = vpop.f32.mrf.mxu0
    %v3532 = vadd.f32 %v3443, %v3531
    %v3533 = vpop.f32.mrf.mxu0
    %v3534 = vadd.f32 %v3445, %v3533
    %3535 = vdwg.mxu0
    %v3536 = vadd.f32 %v3310, %v3457
    %v3537 = vadd.f32 %v3311, %v3459
    %v3538 = vadd.f32 %v3312, %v3462
    %v3539 = vadd.f32 %v3313, %v3464
    %v3540 = vadd.f32 %v3314, %v3467
    %v3541 = vadd.f32 %v3315, %v3469
    %v3542 = vadd.f32 %v3316, %v3472
    %v3543 = vadd.f32 %v3317, %v3474
    %v3544 = vadd.f32 %v3318, %v3477
    %v3545 = vadd.f32 %v3319, %v3479
    %v3546 = vadd.f32 %v3320, %v3482
    %v3547 = vadd.f32 %v3321, %v3484
    %v3548 = vadd.f32 %v3322, %v3487
    %v3549 = vadd.f32 %v3323, %v3489
    %v3550 = vadd.f32 %v3324, %v3492
    %v3551 = vadd.f32 %v3325, %v3494
    %v3552 = vadd.f32 %v3326, %v3497
    %v3553 = vadd.f32 %v3327, %v3499
    %v3554 = vadd.f32 %v3328, %v3502
    %v3555 = vadd.f32 %v3329, %v3504
    %v3556 = vadd.f32 %v3330, %v3507
    %v3557 = vadd.f32 %v3331, %v3509
    %v3558 = vadd.f32 %v3332, %v3512
    %v3559 = vadd.f32 %v3333, %v3514
    %v3560 = vadd.f32 %v3334, %v3517
    %v3561 = vadd.f32 %v3335, %v3519
    %v3562 = vadd.f32 %v3336, %v3522
    %v3563 = vadd.f32 %v3337, %v3524
    %v3564 = vadd.f32 %v3338, %v3527
    %v3565 = vadd.f32 %v3339, %v3529
    %v3566 = vadd.f32 %v3340, %v3532
    %v3567 = vadd.f32 %v3341, %v3534
    %3568 = vst [vmem:[#allocation2] sm:$0xff] %v3536
    %3569 = vst [vmem:[#allocation2 + $0x8] sm:$0xff] %v3537
    %3570 = vst [vmem:[#allocation2 + $0x10] sm:$0xff] %v3538
    %3571 = vst [vmem:[#allocation2 + $0x18] sm:$0xff] %v3539
    %3572 = vst [vmem:[#allocation2 + $0x20] sm:$0xff] %v3540
    %3573 = vst [vmem:[#allocation2 + $0x28] sm:$0xff] %v3541
    %3574 = vst [vmem:[#allocation2 + $0x30] sm:$0xff] %v3542
    %3575 = vst [vmem:[#allocation2 + $0x38] sm:$0xff] %v3543
    %3576 = vst [vmem:[#allocation2 + $0x40] sm:$0xff] %v3544
    %3577 = vst [vmem:[#allocation2 + $0x48] sm:$0xff] %v3545
    %3578 = vst [vmem:[#allocation2 + $0x50] sm:$0xff] %v3546
    %3579 = vst [vmem:[#allocation2 + $0x58] sm:$0xff] %v3547
    %3580 = vst [vmem:[#allocation2 + $0x60] sm:$0xff] %v3548
    %3581 = vst [vmem:[#allocation2 + $0x68] sm:$0xff] %v3549
    %3582 = vst [vmem:[#allocation2 + $0x70] sm:$0xff] %v3550
    %3583 = vst [vmem:[#allocation2 + $0x78] sm:$0xff] %v3551
    %3584 = vst [vmem:[#allocation2 + $0x80] sm:$0xff] %v3552
    %3585 = vst [vmem:[#allocation2 + $0x88] sm:$0xff] %v3553
    %3586 = vst [vmem:[#allocation2 + $0x90] sm:$0xff] %v3554
    %3587 = vst [vmem:[#allocation2 + $0x98] sm:$0xff] %v3555
    %3588 = vst [vmem:[#allocation2 + $0xa0] sm:$0xff] %v3556
    %3589 = vst [vmem:[#allocation2 + $0xa8] sm:$0xff] %v3557
    %3590 = vst [vmem:[#allocation2 + $0xb0] sm:$0xff] %v3558
    %3591 = vst [vmem:[#allocation2 + $0xb8] sm:$0xff] %v3559
    %3592 = vst [vmem:[#allocation2 + $0xc0] sm:$0xff] %v3560
    %3593 = vst [vmem:[#allocation2 + $0xc8] sm:$0xff] %v3561
    %3594 = vst [vmem:[#allocation2 + $0xd0] sm:$0xff] %v3562
    %3595 = vst [vmem:[#allocation2 + $0xd8] sm:$0xff] %v3563
    %3596 = vst [vmem:[#allocation2 + $0xe0] sm:$0xff] %v3564
    %3597 = vst [vmem:[#allocation2 + $0xe8] sm:$0xff] %v3565
    %3598 = vst [vmem:[#allocation2 + $0xf0] sm:$0xff] %v3566
    %3599 = vst [vmem:[#allocation2 + $0xf8] sm:$0xff] %v3567
    %s3600 = sld [smem:[#allocation7]]
    %p3601 = scmp.eq.s32.totalorder %s3600, 1
    // Predicated region
    $region98: #{tpu_custom_call.1} parent=1 // pred_check
      %p3602 = pneg %p3601
    $region99: #{tpu_custom_call.1} parent=1 // pred_check_branch
      %3604 = sbr.rel (%p3602) target = $region101
    $region100: #{tpu_custom_call.1} parent=1 // pred_region
      %v3605 = vld [vmem:[#allocation2] sm:$0xff]
      %v3606 = vld [vmem:[#allocation2 + $0x8] sm:$0xff]
      %v3607 = vld [vmem:[#allocation2 + $0x10] sm:$0xff]
      %v3608 = vld [vmem:[#allocation2 + $0x18] sm:$0xff]
      %v3609 = vld [vmem:[#allocation2 + $0x20] sm:$0xff]
      %v3610 = vld [vmem:[#allocation2 + $0x28] sm:$0xff]
      %v3611 = vld [vmem:[#allocation2 + $0x30] sm:$0xff]
      %v3612 = vld [vmem:[#allocation2 + $0x38] sm:$0xff]
      %v3613 = vld [vmem:[#allocation2 + $0x40] sm:$0xff]
      %v3614 = vld [vmem:[#allocation2 + $0x48] sm:$0xff]
      %v3615 = vld [vmem:[#allocation2 + $0x50] sm:$0xff]
      %v3616 = vld [vmem:[#allocation2 + $0x58] sm:$0xff]
      %v3617 = vld [vmem:[#allocation2 + $0x60] sm:$0xff]
      %v3618 = vld [vmem:[#allocation2 + $0x68] sm:$0xff]
      %v3619 = vld [vmem:[#allocation2 + $0x70] sm:$0xff]
      %v3620 = vld [vmem:[#allocation2 + $0x78] sm:$0xff]
      %v3621 = vld [vmem:[#allocation2 + $0x80] sm:$0xff]
      %v3622 = vld [vmem:[#allocation2 + $0x88] sm:$0xff]
      %v3623 = vld [vmem:[#allocation2 + $0x90] sm:$0xff]
      %v3624 = vld [vmem:[#allocation2 + $0x98] sm:$0xff]
      %v3625 = vld [vmem:[#allocation2 + $0xa0] sm:$0xff]
      %v3626 = vld [vmem:[#allocation2 + $0xa8] sm:$0xff]
      %v3627 = vld [vmem:[#allocation2 + $0xb0] sm:$0xff]
      %v3628 = vld [vmem:[#allocation2 + $0xb8] sm:$0xff]
      %v3629 = vld [vmem:[#allocation2 + $0xc0] sm:$0xff]
      %v3630 = vld [vmem:[#allocation2 + $0xc8] sm:$0xff]
      %v3631 = vld [vmem:[#allocation2 + $0xd0] sm:$0xff]
      %v3632 = vld [vmem:[#allocation2 + $0xd8] sm:$0xff]
      %v3633 = vld [vmem:[#allocation2 + $0xe0] sm:$0xff]
      %v3634 = vld [vmem:[#allocation2 + $0xe8] sm:$0xff]
      %v3635 = vld [vmem:[#allocation2 + $0xf0] sm:$0xff]
      %v3636 = vld [vmem:[#allocation2 + $0xf8] sm:$0xff]
      %v3637 = vld [vmem:[%s173] sm:$0xff]
      %v3638 = vld [vmem:[%s173 + $0x8] sm:$0xff]
      %v3639 = vld [vmem:[%s173 + $0x10] sm:$0xff]
      %v3640 = vld [vmem:[%s173 + $0x18] sm:$0xff]
      %v3641 = vld [vmem:[%s173 + $0x20] sm:$0xff]
      %v3642 = vld [vmem:[%s173 + $0x28] sm:$0xff]
      %v3643 = vld [vmem:[%s173 + $0x30] sm:$0xff]
      %v3644 = vld [vmem:[%s173 + $0x38] sm:$0xff]
      %v3645 = vld [vmem:[%s173 + $0x40] sm:$0xff]
      %v3646 = vld [vmem:[%s173 + $0x48] sm:$0xff]
      %v3647 = vld [vmem:[%s173 + $0x50] sm:$0xff]
      %v3648 = vld [vmem:[%s173 + $0x58] sm:$0xff]
      %v3649 = vld [vmem:[%s173 + $0x60] sm:$0xff]
      %v3650 = vld [vmem:[%s173 + $0x68] sm:$0xff]
      %v3651 = vld [vmem:[%s173 + $0x70] sm:$0xff]
      %v3652 = vld [vmem:[%s173 + $0x78] sm:$0xff]
      %v3653 = vld [vmem:[%s173 + $0x80] sm:$0xff]
      %v3654 = vld [vmem:[%s173 + $0x88] sm:$0xff]
      %v3655 = vld [vmem:[%s173 + $0x90] sm:$0xff]
      %v3656 = vld [vmem:[%s173 + $0x98] sm:$0xff]
      %v3657 = vld [vmem:[%s173 + $0xa0] sm:$0xff]
      %v3658 = vld [vmem:[%s173 + $0xa8] sm:$0xff]
      %v3659 = vld [vmem:[%s173 + $0xb0] sm:$0xff]
      %v3660 = vld [vmem:[%s173 + $0xb8] sm:$0xff]
      %v3661 = vld [vmem:[%s173 + $0xc0] sm:$0xff]
      %v3662 = vld [vmem:[%s173 + $0xc8] sm:$0xff]
      %v3663 = vld [vmem:[%s173 + $0xd0] sm:$0xff]
      %v3664 = vld [vmem:[%s173 + $0xd8] sm:$0xff]
      %v3665 = vld [vmem:[%s173 + $0xe0] sm:$0xff]
      %v3666 = vld [vmem:[%s173 + $0xe8] sm:$0xff]
      %v3667 = vld [vmem:[%s173 + $0xf0] sm:$0xff]
      %v3668 = vld [vmem:[%s173 + $0xf8] sm:$0xff]
      %3670 = vset.pattern.permute.xlu0 0
      %3671 = vperm.xlu0 %3670, %v3637
      %v3672 = vpop.permute.xlu0 %3671
      %3675 = vset.pattern.permute.xlu0 0
      %3676 = vperm.xlu0 %3675, %v3638
      %v3677 = vpop.permute.xlu0 %3676
      %3680 = vset.pattern.permute.xlu0 0
      %3681 = vperm.xlu0 %3680, %v3639
      %v3682 = vpop.permute.xlu0 %3681
      %3685 = vset.pattern.permute.xlu0 0
      %3686 = vperm.xlu0 %3685, %v3640
      %v3687 = vpop.permute.xlu0 %3686
      %3690 = vset.pattern.permute.xlu0 0
      %3691 = vperm.xlu0 %3690, %v3641
      %v3692 = vpop.permute.xlu0 %3691
      %3695 = vset.pattern.permute.xlu0 0
      %3696 = vperm.xlu0 %3695, %v3642
      %v3697 = vpop.permute.xlu0 %3696
      %3700 = vset.pattern.permute.xlu0 0
      %3701 = vperm.xlu0 %3700, %v3643
      %v3702 = vpop.permute.xlu0 %3701
      %3705 = vset.pattern.permute.xlu0 0
      %3706 = vperm.xlu0 %3705, %v3644
      %v3707 = vpop.permute.xlu0 %3706
      %3710 = vset.pattern.permute.xlu0 0
      %3711 = vperm.xlu0 %3710, %v3645
      %v3712 = vpop.permute.xlu0 %3711
      %3715 = vset.pattern.permute.xlu0 0
      %3716 = vperm.xlu0 %3715, %v3646
      %v3717 = vpop.permute.xlu0 %3716
      %3720 = vset.pattern.permute.xlu0 0
      %3721 = vperm.xlu0 %3720, %v3647
      %v3722 = vpop.permute.xlu0 %3721
      %3725 = vset.pattern.permute.xlu0 0
      %3726 = vperm.xlu0 %3725, %v3648
      %v3727 = vpop.permute.xlu0 %3726
      %3730 = vset.pattern.permute.xlu0 0
      %3731 = vperm.xlu0 %3730, %v3649
      %v3732 = vpop.permute.xlu0 %3731
      %3735 = vset.pattern.permute.xlu0 0
      %3736 = vperm.xlu0 %3735, %v3650
      %v3737 = vpop.permute.xlu0 %3736
      %3740 = vset.pattern.permute.xlu0 0
      %3741 = vperm.xlu0 %3740, %v3651
      %v3742 = vpop.permute.xlu0 %3741
      %3745 = vset.pattern.permute.xlu0 0
      %3746 = vperm.xlu0 %3745, %v3652
      %v3747 = vpop.permute.xlu0 %3746
      %3750 = vset.pattern.permute.xlu0 0
      %3751 = vperm.xlu0 %3750, %v3653
      %v3752 = vpop.permute.xlu0 %3751
      %3755 = vset.pattern.permute.xlu0 0
      %3756 = vperm.xlu0 %3755, %v3654
      %v3757 = vpop.permute.xlu0 %3756
      %3760 = vset.pattern.permute.xlu0 0
      %3761 = vperm.xlu0 %3760, %v3655
      %v3762 = vpop.permute.xlu0 %3761
      %3765 = vset.pattern.permute.xlu0 0
      %3766 = vperm.xlu0 %3765, %v3656
      %v3767 = vpop.permute.xlu0 %3766
      %3770 = vset.pattern.permute.xlu0 0
      %3771 = vperm.xlu0 %3770, %v3657
      %v3772 = vpop.permute.xlu0 %3771
      %3775 = vset.pattern.permute.xlu0 0
      %3776 = vperm.xlu0 %3775, %v3658
      %v3777 = vpop.permute.xlu0 %3776
      %3780 = vset.pattern.permute.xlu0 0
      %3781 = vperm.xlu0 %3780, %v3659
      %v3782 = vpop.permute.xlu0 %3781
      %3785 = vset.pattern.permute.xlu0 0
      %3786 = vperm.xlu0 %3785, %v3660
      %v3787 = vpop.permute.xlu0 %3786
      %3790 = vset.pattern.permute.xlu0 0
      %3791 = vperm.xlu0 %3790, %v3661
      %v3792 = vpop.permute.xlu0 %3791
      %3795 = vset.pattern.permute.xlu0 0
      %3796 = vperm.xlu0 %3795, %v3662
      %v3797 = vpop.permute.xlu0 %3796
      %3800 = vset.pattern.permute.xlu0 0
      %3801 = vperm.xlu0 %3800, %v3663
      %v3802 = vpop.permute.xlu0 %3801
      %3805 = vset.pattern.permute.xlu0 0
      %3806 = vperm.xlu0 %3805, %v3664
      %v3807 = vpop.permute.xlu0 %3806
      %3810 = vset.pattern.permute.xlu0 0
      %3811 = vperm.xlu0 %3810, %v3665
      %v3812 = vpop.permute.xlu0 %3811
      %3815 = vset.pattern.permute.xlu0 0
      %3816 = vperm.xlu0 %3815, %v3666
      %v3817 = vpop.permute.xlu0 %3816
      %3820 = vset.pattern.permute.xlu0 0
      %3821 = vperm.xlu0 %3820, %v3667
      %v3822 = vpop.permute.xlu0 %3821
      %3825 = vset.pattern.permute.xlu0 0
      %3826 = vperm.xlu0 %3825, %v3668
      %v3827 = vpop.permute.xlu0 %3826
      %v3829 = vmul.f32 %v3605, %v3672
      %v3830 = vmul.f32 %v3606, %v3677
      %v3831 = vmul.f32 %v3607, %v3682
      %v3832 = vmul.f32 %v3608, %v3687
      %v3833 = vmul.f32 %v3609, %v3692
      %v3834 = vmul.f32 %v3610, %v3697
      %v3835 = vmul.f32 %v3611, %v3702
      %v3836 = vmul.f32 %v3612, %v3707
      %v3837 = vmul.f32 %v3613, %v3712
      %v3838 = vmul.f32 %v3614, %v3717
      %v3839 = vmul.f32 %v3615, %v3722
      %v3840 = vmul.f32 %v3616, %v3727
      %v3841 = vmul.f32 %v3617, %v3732
      %v3842 = vmul.f32 %v3618, %v3737
      %v3843 = vmul.f32 %v3619, %v3742
      %v3844 = vmul.f32 %v3620, %v3747
      %v3845 = vmul.f32 %v3621, %v3752
      %v3846 = vmul.f32 %v3622, %v3757
      %v3847 = vmul.f32 %v3623, %v3762
      %v3848 = vmul.f32 %v3624, %v3767
      %v3849 = vmul.f32 %v3625, %v3772
      %v3850 = vmul.f32 %v3626, %v3777
      %v3851 = vmul.f32 %v3627, %v3782
      %v3852 = vmul.f32 %v3628, %v3787
      %v3853 = vmul.f32 %v3629, %v3792
      %v3854 = vmul.f32 %v3630, %v3797
      %v3855 = vmul.f32 %v3631, %v3802
      %v3856 = vmul.f32 %v3632, %v3807
      %v3857 = vmul.f32 %v3633, %v3812
      %v3858 = vmul.f32 %v3634, %v3817
      %v3859 = vmul.f32 %v3635, %v3822
      %v3860 = vmul.f32 %v3636, %v3827
      %v3861 = vpack.c.bf16 %v3830, %v3829
      %v3862 = vpack.c.bf16 %v3832, %v3831
      %v3863 = vpack.c.bf16 %v3834, %v3833
      %v3864 = vpack.c.bf16 %v3836, %v3835
      %v3865 = vpack.c.bf16 %v3838, %v3837
      %v3866 = vpack.c.bf16 %v3840, %v3839
      %v3867 = vpack.c.bf16 %v3842, %v3841
      %v3868 = vpack.c.bf16 %v3844, %v3843
      %v3869 = vpack.c.bf16 %v3846, %v3845
      %v3870 = vpack.c.bf16 %v3848, %v3847
      %v3871 = vpack.c.bf16 %v3850, %v3849
      %v3872 = vpack.c.bf16 %v3852, %v3851
      %v3873 = vpack.c.bf16 %v3854, %v3853
      %v3874 = vpack.c.bf16 %v3856, %v3855
      %v3875 = vpack.c.bf16 %v3858, %v3857
      %v3876 = vpack.c.bf16 %v3860, %v3859
      %v3877 = vld [vmem:[#allocation11] sm:$0xf]
      %v3878 = vld [vmem:[#allocation11 + $0x4] sm:$0xf]
      %v3879 = vld [vmem:[#allocation11 + $0x8] sm:$0xf]
      %v3880 = vld [vmem:[#allocation11 + $0xc] sm:$0xf]
      %v3881 = vld [vmem:[#allocation11 + $0x10] sm:$0xf]
      %v3882 = vld [vmem:[#allocation11 + $0x14] sm:$0xf]
      %v3883 = vld [vmem:[#allocation11 + $0x18] sm:$0xf]
      %v3884 = vld [vmem:[#allocation11 + $0x1c] sm:$0xf]
      %v3885 = vld [vmem:[#allocation11 + $0x20] sm:$0xf]
      %v3886 = vld [vmem:[#allocation11 + $0x24] sm:$0xf]
      %v3887 = vld [vmem:[#allocation11 + $0x28] sm:$0xf]
      %v3888 = vld [vmem:[#allocation11 + $0x2c] sm:$0xf]
      %v3889 = vld [vmem:[#allocation11 + $0x30] sm:$0xf]
      %v3890 = vld [vmem:[#allocation11 + $0x34] sm:$0xf]
      %v3891 = vld [vmem:[#allocation11 + $0x38] sm:$0xf]
      %v3892 = vld [vmem:[#allocation11 + $0x3c] sm:$0xf]
      %v3893 = vld [vmem:[#allocation13] sm:$0xf]
      %v3894 = vld [vmem:[#allocation13 + $0x4] sm:$0xf]
      %v3895 = vld [vmem:[#allocation13 + $0x8] sm:$0xf]
      %v3896 = vld [vmem:[#allocation13 + $0xc] sm:$0xf]
      %v3897 = vld [vmem:[#allocation13 + $0x10] sm:$0xf]
      %v3898 = vld [vmem:[#allocation13 + $0x14] sm:$0xf]
      %v3899 = vld [vmem:[#allocation13 + $0x18] sm:$0xf]
      %v3900 = vld [vmem:[#allocation13 + $0x1c] sm:$0xf]
      %v3901 = vld [vmem:[#allocation13 + $0x20] sm:$0xf]
      %v3902 = vld [vmem:[#allocation13 + $0x24] sm:$0xf]
      %v3903 = vld [vmem:[#allocation13 + $0x28] sm:$0xf]
      %v3904 = vld [vmem:[#allocation13 + $0x2c] sm:$0xf]
      %v3905 = vld [vmem:[#allocation13 + $0x30] sm:$0xf]
      %v3906 = vld [vmem:[#allocation13 + $0x34] sm:$0xf]
      %v3907 = vld [vmem:[#allocation13 + $0x38] sm:$0xf]
      %v3908 = vld [vmem:[#allocation13 + $0x3c] sm:$0xf]
      %v3925 = vunpack.c.l.b16 %v3893
      %v3926 = vunpack.c.l.b16 %v3894
      %v3927 = vunpack.c.l.b16 %v3895
      %v3928 = vunpack.c.l.b16 %v3896
      %v3929 = vunpack.c.l.b16 %v3897
      %v3930 = vunpack.c.l.b16 %v3898
      %v3931 = vunpack.c.l.b16 %v3899
      %v3932 = vunpack.c.l.b16 %v3900
      %v3933 = vunpack.c.l.b16 %v3901
      %v3934 = vunpack.c.l.b16 %v3902
      %v3935 = vunpack.c.l.b16 %v3903
      %v3936 = vunpack.c.l.b16 %v3904
      %v3937 = vunpack.c.l.b16 %v3905
      %v3938 = vunpack.c.l.b16 %v3906
      %v3939 = vunpack.c.l.b16 %v3907
      %v3940 = vunpack.c.l.b16 %v3908
      %v3941 = vpack.c.b16 %v3926, %v3925
      %v3942 = vpack.c.b16 %v3928, %v3927
      %v3943 = vpack.c.b16 %v3930, %v3929
      %v3944 = vpack.c.b16 %v3932, %v3931
      %v3945 = vpack.c.b16 %v3934, %v3933
      %v3946 = vpack.c.b16 %v3936, %v3935
      %v3947 = vpack.c.b16 %v3938, %v3937
      %v3948 = vpack.c.b16 %v3940, %v3939
      %3957 = vmatpush.bf16.msra.mxu0 %v3948
      %3958 = vmatpush.bf16.msra.mxu0 %v3947
      %3959 = vmatpush.bf16.msra.mxu0 %v3946
      %3960 = vmatpush.bf16.msra.mxu0 %v3945
      %3961 = vmatpush.bf16.msra.mxu0 %v3944
      %3962 = vmatpush.bf16.msra.mxu0 %v3943
      %3963 = vmatpush.bf16.msra.mxu0 %v3942
      %3964 = vmatpush.bf16.msra.mxu0 %v3941
      %3965 = vmatmul.bf16.gmra.mxu0 %v210
      %v3966 = vpop.f32.mrf.mxu0
      %v3967 = vadd.f32 0.0, %v3966
      %v3968 = vpop.f32.mrf.mxu0
      %v3969 = vadd.f32 0.0, %v3968
      %3970 = vmatmul.bf16.gmra.mxu0 %v211
      %v3971 = vpop.f32.mrf.mxu0
      %v3972 = vadd.f32 0.0, %v3971
      %v3973 = vpop.f32.mrf.mxu0
      %v3974 = vadd.f32 0.0, %v3973
      %3975 = vmatmul.bf16.gmra.mxu0 %v212
      %v3976 = vpop.f32.mrf.mxu0
      %v3977 = vadd.f32 0.0, %v3976
      %v3978 = vpop.f32.mrf.mxu0
      %v3979 = vadd.f32 0.0, %v3978
      %3980 = vmatmul.bf16.gmra.mxu0 %v213
      %v3981 = vpop.f32.mrf.mxu0
      %v3982 = vadd.f32 0.0, %v3981
      %v3983 = vpop.f32.mrf.mxu0
      %v3984 = vadd.f32 0.0, %v3983
      %3985 = vmatmul.bf16.gmra.mxu0 %v214
      %v3986 = vpop.f32.mrf.mxu0
      %v3987 = vadd.f32 0.0, %v3986
      %v3988 = vpop.f32.mrf.mxu0
      %v3989 = vadd.f32 0.0, %v3988
      %3990 = vmatmul.bf16.gmra.mxu0 %v215
      %v3991 = vpop.f32.mrf.mxu0
      %v3992 = vadd.f32 0.0, %v3991
      %v3993 = vpop.f32.mrf.mxu0
      %v3994 = vadd.f32 0.0, %v3993
      %3995 = vmatmul.bf16.gmra.mxu0 %v216
      %v3996 = vpop.f32.mrf.mxu0
      %v3997 = vadd.f32 0.0, %v3996
      %v3998 = vpop.f32.mrf.mxu0
      %v3999 = vadd.f32 0.0, %v3998
      %4000 = vmatmul.bf16.gmra.mxu0 %v217
      %v4001 = vpop.f32.mrf.mxu0
      %v4002 = vadd.f32 0.0, %v4001
      %v4003 = vpop.f32.mrf.mxu0
      %v4004 = vadd.f32 0.0, %v4003
      %4005 = vmatmul.bf16.gmra.mxu0 %v218
      %v4006 = vpop.f32.mrf.mxu0
      %v4007 = vadd.f32 0.0, %v4006
      %v4008 = vpop.f32.mrf.mxu0
      %v4009 = vadd.f32 0.0, %v4008
      %4010 = vmatmul.bf16.gmra.mxu0 %v219
      %v4011 = vpop.f32.mrf.mxu0
      %v4012 = vadd.f32 0.0, %v4011
      %v4013 = vpop.f32.mrf.mxu0
      %v4014 = vadd.f32 0.0, %v4013
      %4015 = vmatmul.bf16.gmra.mxu0 %v220
      %v4016 = vpop.f32.mrf.mxu0
      %v4017 = vadd.f32 0.0, %v4016
      %v4018 = vpop.f32.mrf.mxu0
      %v4019 = vadd.f32 0.0, %v4018
      %4020 = vmatmul.bf16.gmra.mxu0 %v221
      %v4021 = vpop.f32.mrf.mxu0
      %v4022 = vadd.f32 0.0, %v4021
      %v4023 = vpop.f32.mrf.mxu0
      %v4024 = vadd.f32 0.0, %v4023
      %4025 = vmatmul.bf16.gmra.mxu0 %v222
      %v4026 = vpop.f32.mrf.mxu0
      %v4027 = vadd.f32 0.0, %v4026
      %v4028 = vpop.f32.mrf.mxu0
      %v4029 = vadd.f32 0.0, %v4028
      %4030 = vmatmul.bf16.gmra.mxu0 %v223
      %v4031 = vpop.f32.mrf.mxu0
      %v4032 = vadd.f32 0.0, %v4031
      %v4033 = vpop.f32.mrf.mxu0
      %v4034 = vadd.f32 0.0, %v4033
      %4035 = vmatmul.bf16.gmra.mxu0 %v224
      %v4036 = vpop.f32.mrf.mxu0
      %v4037 = vadd.f32 0.0, %v4036
      %v4038 = vpop.f32.mrf.mxu0
      %v4039 = vadd.f32 0.0, %v4038
      %4040 = vmatmul.bf16.gmra.mxu0 %v225
      %v4041 = vpop.f32.mrf.mxu0
      %v4042 = vadd.f32 0.0, %v4041
      %v4043 = vpop.f32.mrf.mxu0
      %v4044 = vadd.f32 0.0, %v4043
      %4045 = vdwg.mxu0
      %v4062 = vunpack.c.l.b16 %v3877
      %v4063 = vunpack.c.l.b16 %v3878
      %v4064 = vunpack.c.l.b16 %v3879
      %v4065 = vunpack.c.l.b16 %v3880
      %v4066 = vunpack.c.l.b16 %v3881
      %v4067 = vunpack.c.l.b16 %v3882
      %v4068 = vunpack.c.l.b16 %v3883
      %v4069 = vunpack.c.l.b16 %v3884
      %v4070 = vunpack.c.l.b16 %v3885
      %v4071 = vunpack.c.l.b16 %v3886
      %v4072 = vunpack.c.l.b16 %v3887
      %v4073 = vunpack.c.l.b16 %v3888
      %v4074 = vunpack.c.l.b16 %v3889
      %v4075 = vunpack.c.l.b16 %v3890
      %v4076 = vunpack.c.l.b16 %v3891
      %v4077 = vunpack.c.l.b16 %v3892
      %v4078 = vpack.c.b16 %v4063, %v4062
      %v4079 = vpack.c.b16 %v4065, %v4064
      %v4080 = vpack.c.b16 %v4067, %v4066
      %v4081 = vpack.c.b16 %v4069, %v4068
      %v4082 = vpack.c.b16 %v4071, %v4070
      %v4083 = vpack.c.b16 %v4073, %v4072
      %v4084 = vpack.c.b16 %v4075, %v4074
      %v4085 = vpack.c.b16 %v4077, %v4076
      %4094 = vmatpush.bf16.msra.mxu0 %v4085
      %4095 = vmatpush.bf16.msra.mxu0 %v4084
      %4096 = vmatpush.bf16.msra.mxu0 %v4083
      %4097 = vmatpush.bf16.msra.mxu0 %v4082
      %4098 = vmatpush.bf16.msra.mxu0 %v4081
      %4099 = vmatpush.bf16.msra.mxu0 %v4080
      %4100 = vmatpush.bf16.msra.mxu0 %v4079
      %4101 = vmatpush.bf16.msra.mxu0 %v4078
      %4102 = vmatmul.bf16.gmra.mxu0 %v3861
      %v4103 = vpop.f32.mrf.mxu0
      %v4104 = vadd.f32 %v3967, %v4103
      %v4105 = vpop.f32.mrf.mxu0
      %v4106 = vadd.f32 %v3969, %v4105
      %4107 = vmatmul.bf16.gmra.mxu0 %v3862
      %v4108 = vpop.f32.mrf.mxu0
      %v4109 = vadd.f32 %v3972, %v4108
      %v4110 = vpop.f32.mrf.mxu0
      %v4111 = vadd.f32 %v3974, %v4110
      %4112 = vmatmul.bf16.gmra.mxu0 %v3863
      %v4113 = vpop.f32.mrf.mxu0
      %v4114 = vadd.f32 %v3977, %v4113
      %v4115 = vpop.f32.mrf.mxu0
      %v4116 = vadd.f32 %v3979, %v4115
      %4117 = vmatmul.bf16.gmra.mxu0 %v3864
      %v4118 = vpop.f32.mrf.mxu0
      %v4119 = vadd.f32 %v3982, %v4118
      %v4120 = vpop.f32.mrf.mxu0
      %v4121 = vadd.f32 %v3984, %v4120
      %4122 = vmatmul.bf16.gmra.mxu0 %v3865
      %v4123 = vpop.f32.mrf.mxu0
      %v4124 = vadd.f32 %v3987, %v4123
      %v4125 = vpop.f32.mrf.mxu0
      %v4126 = vadd.f32 %v3989, %v4125
      %4127 = vmatmul.bf16.gmra.mxu0 %v3866
      %v4128 = vpop.f32.mrf.mxu0
      %v4129 = vadd.f32 %v3992, %v4128
      %v4130 = vpop.f32.mrf.mxu0
      %v4131 = vadd.f32 %v3994, %v4130
      %4132 = vmatmul.bf16.gmra.mxu0 %v3867
      %v4133 = vpop.f32.mrf.mxu0
      %v4134 = vadd.f32 %v3997, %v4133
      %v4135 = vpop.f32.mrf.mxu0
      %v4136 = vadd.f32 %v3999, %v4135
      %4137 = vmatmul.bf16.gmra.mxu0 %v3868
      %v4138 = vpop.f32.mrf.mxu0
      %v4139 = vadd.f32 %v4002, %v4138
      %v4140 = vpop.f32.mrf.mxu0
      %v4141 = vadd.f32 %v4004, %v4140
      %4142 = vmatmul.bf16.gmra.mxu0 %v3869
      %v4143 = vpop.f32.mrf.mxu0
      %v4144 = vadd.f32 %v4007, %v4143
      %v4145 = vpop.f32.mrf.mxu0
      %v4146 = vadd.f32 %v4009, %v4145
      %4147 = vmatmul.bf16.gmra.mxu0 %v3870
      %v4148 = vpop.f32.mrf.mxu0
      %v4149 = vadd.f32 %v4012, %v4148
      %v4150 = vpop.f32.mrf.mxu0
      %v4151 = vadd.f32 %v4014, %v4150
      %4152 = vmatmul.bf16.gmra.mxu0 %v3871
      %v4153 = vpop.f32.mrf.mxu0
      %v4154 = vadd.f32 %v4017, %v4153
      %v4155 = vpop.f32.mrf.mxu0
      %v4156 = vadd.f32 %v4019, %v4155
      %4157 = vmatmul.bf16.gmra.mxu0 %v3872
      %v4158 = vpop.f32.mrf.mxu0
      %v4159 = vadd.f32 %v4022, %v4158
      %v4160 = vpop.f32.mrf.mxu0
      %v4161 = vadd.f32 %v4024, %v4160
      %4162 = vmatmul.bf16.gmra.mxu0 %v3873
      %v4163 = vpop.f32.mrf.mxu0
      %v4164 = vadd.f32 %v4027, %v4163
      %v4165 = vpop.f32.mrf.mxu0
      %v4166 = vadd.f32 %v4029, %v4165
      %4167 = vmatmul.bf16.gmra.mxu0 %v3874
      %v4168 = vpop.f32.mrf.mxu0
      %v4169 = vadd.f32 %v4032, %v4168
      %v4170 = vpop.f32.mrf.mxu0
      %v4171 = vadd.f32 %v4034, %v4170
      %4172 = vmatmul.bf16.gmra.mxu0 %v3875
      %v4173 = vpop.f32.mrf.mxu0
      %v4174 = vadd.f32 %v4037, %v4173
      %v4175 = vpop.f32.mrf.mxu0
      %v4176 = vadd.f32 %v4039, %v4175
      %4177 = vmatmul.bf16.gmra.mxu0 %v3876
      %v4178 = vpop.f32.mrf.mxu0
      %v4179 = vadd.f32 %v4042, %v4178
      %v4180 = vpop.f32.mrf.mxu0
      %v4181 = vadd.f32 %v4044, %v4180
      %4182 = vdwg.mxu0
      %v4183 = vld [vmem:[%s17] sm:$0x1]
      %v4185 = vperm.slane %v4183, 0
      %v4187 = vadd.f32 %v4104, %v4185
      %v4188 = vadd.f32 %v4106, %v4185
      %v4189 = vadd.f32 %v4109, %v4185
      %v4190 = vadd.f32 %v4111, %v4185
      %v4191 = vadd.f32 %v4114, %v4185
      %v4192 = vadd.f32 %v4116, %v4185
      %v4193 = vadd.f32 %v4119, %v4185
      %v4194 = vadd.f32 %v4121, %v4185
      %v4195 = vadd.f32 %v4124, %v4185
      %v4196 = vadd.f32 %v4126, %v4185
      %v4197 = vadd.f32 %v4129, %v4185
      %v4198 = vadd.f32 %v4131, %v4185
      %v4199 = vadd.f32 %v4134, %v4185
      %v4200 = vadd.f32 %v4136, %v4185
      %v4201 = vadd.f32 %v4139, %v4185
      %v4202 = vadd.f32 %v4141, %v4185
      %v4203 = vadd.f32 %v4144, %v4185
      %v4204 = vadd.f32 %v4146, %v4185
      %v4205 = vadd.f32 %v4149, %v4185
      %v4206 = vadd.f32 %v4151, %v4185
      %v4207 = vadd.f32 %v4154, %v4185
      %v4208 = vadd.f32 %v4156, %v4185
      %v4209 = vadd.f32 %v4159, %v4185
      %v4210 = vadd.f32 %v4161, %v4185
      %v4211 = vadd.f32 %v4164, %v4185
      %v4212 = vadd.f32 %v4166, %v4185
      %v4213 = vadd.f32 %v4169, %v4185
      %v4214 = vadd.f32 %v4171, %v4185
      %v4215 = vadd.f32 %v4174, %v4185
      %v4216 = vadd.f32 %v4176, %v4185
      %v4217 = vadd.f32 %v4179, %v4185
      %v4218 = vadd.f32 %v4181, %v4185
      %v4219 = vsub.f32 0.0, %v4187
      %v4220 = vsub.f32 0.0, %v4188
      %v4221 = vsub.f32 0.0, %v4189
      %v4222 = vsub.f32 0.0, %v4190
      %v4223 = vsub.f32 0.0, %v4191
      %v4224 = vsub.f32 0.0, %v4192
      %v4225 = vsub.f32 0.0, %v4193
      %v4226 = vsub.f32 0.0, %v4194
      %v4227 = vsub.f32 0.0, %v4195
      %v4228 = vsub.f32 0.0, %v4196
      %v4229 = vsub.f32 0.0, %v4197
      %v4230 = vsub.f32 0.0, %v4198
      %v4231 = vsub.f32 0.0, %v4199
      %v4232 = vsub.f32 0.0, %v4200
      %v4233 = vsub.f32 0.0, %v4201
      %v4234 = vsub.f32 0.0, %v4202
      %v4235 = vsub.f32 0.0, %v4203
      %v4236 = vsub.f32 0.0, %v4204
      %v4237 = vsub.f32 0.0, %v4205
      %v4238 = vsub.f32 0.0, %v4206
      %v4239 = vsub.f32 0.0, %v4207
      %v4240 = vsub.f32 0.0, %v4208
      %v4241 = vsub.f32 0.0, %v4209
      %v4242 = vsub.f32 0.0, %v4210
      %v4243 = vsub.f32 0.0, %v4211
      %v4244 = vsub.f32 0.0, %v4212
      %v4245 = vsub.f32 0.0, %v4213
      %v4246 = vsub.f32 0.0, %v4214
      %v4247 = vsub.f32 0.0, %v4215
      %v4248 = vsub.f32 0.0, %v4216
      %v4249 = vsub.f32 0.0, %v4217
      %v4250 = vsub.f32 0.0, %v4218
      %v4251 = vmul.f32 %v4219, 1.442695
      %v4252 = vpow.pop %v4251
      %v4253 = vmul.f32 %v4220, 1.442695
      %v4254 = vpow.pop %v4253
      %v4255 = vmul.f32 %v4221, 1.442695
      %v4256 = vpow.pop %v4255
      %v4257 = vmul.f32 %v4222, 1.442695
      %v4258 = vpow.pop %v4257
      %v4259 = vmul.f32 %v4223, 1.442695
      %v4260 = vpow.pop %v4259
      %v4261 = vmul.f32 %v4224, 1.442695
      %v4262 = vpow.pop %v4261
      %v4263 = vmul.f32 %v4225, 1.442695
      %v4264 = vpow.pop %v4263
      %v4265 = vmul.f32 %v4226, 1.442695
      %v4266 = vpow.pop %v4265
      %v4267 = vmul.f32 %v4227, 1.442695
      %v4268 = vpow.pop %v4267
      %v4269 = vmul.f32 %v4228, 1.442695
      %v4270 = vpow.pop %v4269
      %v4271 = vmul.f32 %v4229, 1.442695
      %v4272 = vpow.pop %v4271
      %v4273 = vmul.f32 %v4230, 1.442695
      %v4274 = vpow.pop %v4273
      %v4275 = vmul.f32 %v4231, 1.442695
      %v4276 = vpow.pop %v4275
      %v4277 = vmul.f32 %v4232, 1.442695
      %v4278 = vpow.pop %v4277
      %v4279 = vmul.f32 %v4233, 1.442695
      %v4280 = vpow.pop %v4279
      %v4281 = vmul.f32 %v4234, 1.442695
      %v4282 = vpow.pop %v4281
      %v4283 = vmul.f32 %v4235, 1.442695
      %v4284 = vpow.pop %v4283
      %v4285 = vmul.f32 %v4236, 1.442695
      %v4286 = vpow.pop %v4285
      %v4287 = vmul.f32 %v4237, 1.442695
      %v4288 = vpow.pop %v4287
      %v4289 = vmul.f32 %v4238, 1.442695
      %v4290 = vpow.pop %v4289
      %v4291 = vmul.f32 %v4239, 1.442695
      %v4292 = vpow.pop %v4291
      %v4293 = vmul.f32 %v4240, 1.442695
      %v4294 = vpow.pop %v4293
      %v4295 = vmul.f32 %v4241, 1.442695
      %v4296 = vpow.pop %v4295
      %v4297 = vmul.f32 %v4242, 1.442695
      %v4298 = vpow.pop %v4297
      %v4299 = vmul.f32 %v4243, 1.442695
      %v4300 = vpow.pop %v4299
      %v4301 = vmul.f32 %v4244, 1.442695
      %v4302 = vpow.pop %v4301
      %v4303 = vmul.f32 %v4245, 1.442695
      %v4304 = vpow.pop %v4303
      %v4305 = vmul.f32 %v4246, 1.442695
      %v4306 = vpow.pop %v4305
      %v4307 = vmul.f32 %v4247, 1.442695
      %v4308 = vpow.pop %v4307
      %v4309 = vmul.f32 %v4248, 1.442695
      %v4310 = vpow.pop %v4309
      %v4311 = vmul.f32 %v4249, 1.442695
      %v4312 = vpow.pop %v4311
      %v4313 = vmul.f32 %v4250, 1.442695
      %v4314 = vpow.pop %v4313
      %v4315 = vadd.f32 %v4252, 1.0
      %v4316 = vadd.f32 %v4254, 1.0
      %v4317 = vadd.f32 %v4256, 1.0
      %v4318 = vadd.f32 %v4258, 1.0
      %v4319 = vadd.f32 %v4260, 1.0
      %v4320 = vadd.f32 %v4262, 1.0
      %v4321 = vadd.f32 %v4264, 1.0
      %v4322 = vadd.f32 %v4266, 1.0
      %v4323 = vadd.f32 %v4268, 1.0
      %v4324 = vadd.f32 %v4270, 1.0
      %v4325 = vadd.f32 %v4272, 1.0
      %v4326 = vadd.f32 %v4274, 1.0
      %v4327 = vadd.f32 %v4276, 1.0
      %v4328 = vadd.f32 %v4278, 1.0
      %v4329 = vadd.f32 %v4280, 1.0
      %v4330 = vadd.f32 %v4282, 1.0
      %v4331 = vadd.f32 %v4284, 1.0
      %v4332 = vadd.f32 %v4286, 1.0
      %v4333 = vadd.f32 %v4288, 1.0
      %v4334 = vadd.f32 %v4290, 1.0
      %v4335 = vadd.f32 %v4292, 1.0
      %v4336 = vadd.f32 %v4294, 1.0
      %v4337 = vadd.f32 %v4296, 1.0
      %v4338 = vadd.f32 %v4298, 1.0
      %v4339 = vadd.f32 %v4300, 1.0
      %v4340 = vadd.f32 %v4302, 1.0
      %v4341 = vadd.f32 %v4304, 1.0
      %v4342 = vadd.f32 %v4306, 1.0
      %v4343 = vadd.f32 %v4308, 1.0
      %v4344 = vadd.f32 %v4310, 1.0
      %v4345 = vadd.f32 %v4312, 1.0
      %v4346 = vadd.f32 %v4314, 1.0
      %v4347 = vrcp.pop %v4315
      %v4348 = vmul.f32 %v4315, %v4347
      %v4349 = vsub.f32 1.0, %v4348
      %v4350 = vmul.f32 %v4347, %v4349
      %v4351 = vadd.f32 %v4347, %v4350
      %vm4352 = vweird.f32 %v4315
      %vm4353 = vweird.f32 %v4347
      %vm4354 = vmor %vm4352, %vm4353
      %v4355 = vsel %vm4354, %v4347, %v4351
      %v4356 = vand.u32 2147483647, %v4315
      %vm4357 = vcmp.eq.f32.partialorder %v4356, 8.507059e+37
      %v4358 = vand.u32 %v4315, 2147483648
      %v4359 = vor.u32 1.1754944e-38, %v4358
      %v4360 = vsel %vm4357, %v4359, %v4355
      %v4361 = vmul.f32 1.0, %v4360
      %v4362 = vrcp.pop %v4316
      %v4363 = vmul.f32 %v4316, %v4362
      %v4364 = vsub.f32 1.0, %v4363
      %v4365 = vmul.f32 %v4362, %v4364
      %v4366 = vadd.f32 %v4362, %v4365
      %vm4367 = vweird.f32 %v4316
      %vm4368 = vweird.f32 %v4362
      %vm4369 = vmor %vm4367, %vm4368
      %v4370 = vsel %vm4369, %v4362, %v4366
      %v4371 = vand.u32 2147483647, %v4316
      %vm4372 = vcmp.eq.f32.partialorder %v4371, 8.507059e+37
      %v4373 = vand.u32 %v4316, 2147483648
      %v4374 = vor.u32 1.1754944e-38, %v4373
      %v4375 = vsel %vm4372, %v4374, %v4370
      %v4376 = vmul.f32 1.0, %v4375
      %v4377 = vrcp.pop %v4317
      %v4378 = vmul.f32 %v4317, %v4377
      %v4379 = vsub.f32 1.0, %v4378
      %v4380 = vmul.f32 %v4377, %v4379
      %v4381 = vadd.f32 %v4377, %v4380
      %vm4382 = vweird.f32 %v4317
      %vm4383 = vweird.f32 %v4377
      %vm4384 = vmor %vm4382, %vm4383
      %v4385 = vsel %vm4384, %v4377, %v4381
      %v4386 = vand.u32 2147483647, %v4317
      %vm4387 = vcmp.eq.f32.partialorder %v4386, 8.507059e+37
      %v4388 = vand.u32 %v4317, 2147483648
      %v4389 = vor.u32 1.1754944e-38, %v4388
      %v4390 = vsel %vm4387, %v4389, %v4385
      %v4391 = vmul.f32 1.0, %v4390
      %v4392 = vrcp.pop %v4318
      %v4393 = vmul.f32 %v4318, %v4392
      %v4394 = vsub.f32 1.0, %v4393
      %v4395 = vmul.f32 %v4392, %v4394
      %v4396 = vadd.f32 %v4392, %v4395
      %vm4397 = vweird.f32 %v4318
      %vm4398 = vweird.f32 %v4392
      %vm4399 = vmor %vm4397, %vm4398
      %v4400 = vsel %vm4399, %v4392, %v4396
      %v4401 = vand.u32 2147483647, %v4318
      %vm4402 = vcmp.eq.f32.partialorder %v4401, 8.507059e+37
      %v4403 = vand.u32 %v4318, 2147483648
      %v4404 = vor.u32 1.1754944e-38, %v4403
      %v4405 = vsel %vm4402, %v4404, %v4400
      %v4406 = vmul.f32 1.0, %v4405
      %v4407 = vrcp.pop %v4319
      %v4408 = vmul.f32 %v4319, %v4407
      %v4409 = vsub.f32 1.0, %v4408
      %v4410 = vmul.f32 %v4407, %v4409
      %v4411 = vadd.f32 %v4407, %v4410
      %vm4412 = vweird.f32 %v4319
      %vm4413 = vweird.f32 %v4407
      %vm4414 = vmor %vm4412, %vm4413
      %v4415 = vsel %vm4414, %v4407, %v4411
      %v4416 = vand.u32 2147483647, %v4319
      %vm4417 = vcmp.eq.f32.partialorder %v4416, 8.507059e+37
      %v4418 = vand.u32 %v4319, 2147483648
      %v4419 = vor.u32 1.1754944e-38, %v4418
      %v4420 = vsel %vm4417, %v4419, %v4415
      %v4421 = vmul.f32 1.0, %v4420
      %v4422 = vrcp.pop %v4320
      %v4423 = vmul.f32 %v4320, %v4422
      %v4424 = vsub.f32 1.0, %v4423
      %v4425 = vmul.f32 %v4422, %v4424
      %v4426 = vadd.f32 %v4422, %v4425
      %vm4427 = vweird.f32 %v4320
      %vm4428 = vweird.f32 %v4422
      %vm4429 = vmor %vm4427, %vm4428
      %v4430 = vsel %vm4429, %v4422, %v4426
      %v4431 = vand.u32 2147483647, %v4320
      %vm4432 = vcmp.eq.f32.partialorder %v4431, 8.507059e+37
      %v4433 = vand.u32 %v4320, 2147483648
      %v4434 = vor.u32 1.1754944e-38, %v4433
      %v4435 = vsel %vm4432, %v4434, %v4430
      %v4436 = vmul.f32 1.0, %v4435
      %v4437 = vrcp.pop %v4321
      %v4438 = vmul.f32 %v4321, %v4437
      %v4439 = vsub.f32 1.0, %v4438
      %v4440 = vmul.f32 %v4437, %v4439
      %v4441 = vadd.f32 %v4437, %v4440
      %vm4442 = vweird.f32 %v4321
      %vm4443 = vweird.f32 %v4437
      %vm4444 = vmor %vm4442, %vm4443
      %v4445 = vsel %vm4444, %v4437, %v4441
      %v4446 = vand.u32 2147483647, %v4321
      %vm4447 = vcmp.eq.f32.partialorder %v4446, 8.507059e+37
      %v4448 = vand.u32 %v4321, 2147483648
      %v4449 = vor.u32 1.1754944e-38, %v4448
      %v4450 = vsel %vm4447, %v4449, %v4445
      %v4451 = vmul.f32 1.0, %v4450
      %v4452 = vrcp.pop %v4322
      %v4453 = vmul.f32 %v4322, %v4452
      %v4454 = vsub.f32 1.0, %v4453
      %v4455 = vmul.f32 %v4452, %v4454
      %v4456 = vadd.f32 %v4452, %v4455
      %vm4457 = vweird.f32 %v4322
      %vm4458 = vweird.f32 %v4452
      %vm4459 = vmor %vm4457, %vm4458
      %v4460 = vsel %vm4459, %v4452, %v4456
      %v4461 = vand.u32 2147483647, %v4322
      %vm4462 = vcmp.eq.f32.partialorder %v4461, 8.507059e+37
      %v4463 = vand.u32 %v4322, 2147483648
      %v4464 = vor.u32 1.1754944e-38, %v4463
      %v4465 = vsel %vm4462, %v4464, %v4460
      %v4466 = vmul.f32 1.0, %v4465
      %v4467 = vrcp.pop %v4323
      %v4468 = vmul.f32 %v4323, %v4467
      %v4469 = vsub.f32 1.0, %v4468
      %v4470 = vmul.f32 %v4467, %v4469
      %v4471 = vadd.f32 %v4467, %v4470
      %vm4472 = vweird.f32 %v4323
      %vm4473 = vweird.f32 %v4467
      %vm4474 = vmor %vm4472, %vm4473
      %v4475 = vsel %vm4474, %v4467, %v4471
      %v4476 = vand.u32 2147483647, %v4323
      %vm4477 = vcmp.eq.f32.partialorder %v4476, 8.507059e+37
      %v4478 = vand.u32 %v4323, 2147483648
      %v4479 = vor.u32 1.1754944e-38, %v4478
      %v4480 = vsel %vm4477, %v4479, %v4475
      %v4481 = vmul.f32 1.0, %v4480
      %v4482 = vrcp.pop %v4324
      %v4483 = vmul.f32 %v4324, %v4482
      %v4484 = vsub.f32 1.0, %v4483
      %v4485 = vmul.f32 %v4482, %v4484
      %v4486 = vadd.f32 %v4482, %v4485
      %vm4487 = vweird.f32 %v4324
      %vm4488 = vweird.f32 %v4482
      %vm4489 = vmor %vm4487, %vm4488
      %v4490 = vsel %vm4489, %v4482, %v4486
      %v4491 = vand.u32 2147483647, %v4324
      %vm4492 = vcmp.eq.f32.partialorder %v4491, 8.507059e+37
      %v4493 = vand.u32 %v4324, 2147483648
      %v4494 = vor.u32 1.1754944e-38, %v4493
      %v4495 = vsel %vm4492, %v4494, %v4490
      %v4496 = vmul.f32 1.0, %v4495
      %v4497 = vrcp.pop %v4325
      %v4498 = vmul.f32 %v4325, %v4497
      %v4499 = vsub.f32 1.0, %v4498
      %v4500 = vmul.f32 %v4497, %v4499
      %v4501 = vadd.f32 %v4497, %v4500
      %vm4502 = vweird.f32 %v4325
      %vm4503 = vweird.f32 %v4497
      %vm4504 = vmor %vm4502, %vm4503
      %v4505 = vsel %vm4504, %v4497, %v4501
      %v4506 = vand.u32 2147483647, %v4325
      %vm4507 = vcmp.eq.f32.partialorder %v4506, 8.507059e+37
      %v4508 = vand.u32 %v4325, 2147483648
      %v4509 = vor.u32 1.1754944e-38, %v4508
      %v4510 = vsel %vm4507, %v4509, %v4505
      %v4511 = vmul.f32 1.0, %v4510
      %v4512 = vrcp.pop %v4326
      %v4513 = vmul.f32 %v4326, %v4512
      %v4514 = vsub.f32 1.0, %v4513
      %v4515 = vmul.f32 %v4512, %v4514
      %v4516 = vadd.f32 %v4512, %v4515
      %vm4517 = vweird.f32 %v4326
      %vm4518 = vweird.f32 %v4512
      %vm4519 = vmor %vm4517, %vm4518
      %v4520 = vsel %vm4519, %v4512, %v4516
      %v4521 = vand.u32 2147483647, %v4326
      %vm4522 = vcmp.eq.f32.partialorder %v4521, 8.507059e+37
      %v4523 = vand.u32 %v4326, 2147483648
      %v4524 = vor.u32 1.1754944e-38, %v4523
      %v4525 = vsel %vm4522, %v4524, %v4520
      %v4526 = vmul.f32 1.0, %v4525
      %v4527 = vrcp.pop %v4327
      %v4528 = vmul.f32 %v4327, %v4527
      %v4529 = vsub.f32 1.0, %v4528
      %v4530 = vmul.f32 %v4527, %v4529
      %v4531 = vadd.f32 %v4527, %v4530
      %vm4532 = vweird.f32 %v4327
      %vm4533 = vweird.f32 %v4527
      %vm4534 = vmor %vm4532, %vm4533
      %v4535 = vsel %vm4534, %v4527, %v4531
      %v4536 = vand.u32 2147483647, %v4327
      %vm4537 = vcmp.eq.f32.partialorder %v4536, 8.507059e+37
      %v4538 = vand.u32 %v4327, 2147483648
      %v4539 = vor.u32 1.1754944e-38, %v4538
      %v4540 = vsel %vm4537, %v4539, %v4535
      %v4541 = vmul.f32 1.0, %v4540
      %v4542 = vrcp.pop %v4328
      %v4543 = vmul.f32 %v4328, %v4542
      %v4544 = vsub.f32 1.0, %v4543
      %v4545 = vmul.f32 %v4542, %v4544
      %v4546 = vadd.f32 %v4542, %v4545
      %vm4547 = vweird.f32 %v4328
      %vm4548 = vweird.f32 %v4542
      %vm4549 = vmor %vm4547, %vm4548
      %v4550 = vsel %vm4549, %v4542, %v4546
      %v4551 = vand.u32 2147483647, %v4328
      %vm4552 = vcmp.eq.f32.partialorder %v4551, 8.507059e+37
      %v4553 = vand.u32 %v4328, 2147483648
      %v4554 = vor.u32 1.1754944e-38, %v4553
      %v4555 = vsel %vm4552, %v4554, %v4550
      %v4556 = vmul.f32 1.0, %v4555
      %v4557 = vrcp.pop %v4329
      %v4558 = vmul.f32 %v4329, %v4557
      %v4559 = vsub.f32 1.0, %v4558
      %v4560 = vmul.f32 %v4557, %v4559
      %v4561 = vadd.f32 %v4557, %v4560
      %vm4562 = vweird.f32 %v4329
      %vm4563 = vweird.f32 %v4557
      %vm4564 = vmor %vm4562, %vm4563
      %v4565 = vsel %vm4564, %v4557, %v4561
      %v4566 = vand.u32 2147483647, %v4329
      %vm4567 = vcmp.eq.f32.partialorder %v4566, 8.507059e+37
      %v4568 = vand.u32 %v4329, 2147483648
      %v4569 = vor.u32 1.1754944e-38, %v4568
      %v4570 = vsel %vm4567, %v4569, %v4565
      %v4571 = vmul.f32 1.0, %v4570
      %v4572 = vrcp.pop %v4330
      %v4573 = vmul.f32 %v4330, %v4572
      %v4574 = vsub.f32 1.0, %v4573
      %v4575 = vmul.f32 %v4572, %v4574
      %v4576 = vadd.f32 %v4572, %v4575
      %vm4577 = vweird.f32 %v4330
      %vm4578 = vweird.f32 %v4572
      %vm4579 = vmor %vm4577, %vm4578
      %v4580 = vsel %vm4579, %v4572, %v4576
      %v4581 = vand.u32 2147483647, %v4330
      %vm4582 = vcmp.eq.f32.partialorder %v4581, 8.507059e+37
      %v4583 = vand.u32 %v4330, 2147483648
      %v4584 = vor.u32 1.1754944e-38, %v4583
      %v4585 = vsel %vm4582, %v4584, %v4580
      %v4586 = vmul.f32 1.0, %v4585
      %v4587 = vrcp.pop %v4331
      %v4588 = vmul.f32 %v4331, %v4587
      %v4589 = vsub.f32 1.0, %v4588
      %v4590 = vmul.f32 %v4587, %v4589
      %v4591 = vadd.f32 %v4587, %v4590
      %vm4592 = vweird.f32 %v4331
      %vm4593 = vweird.f32 %v4587
      %vm4594 = vmor %vm4592, %vm4593
      %v4595 = vsel %vm4594, %v4587, %v4591
      %v4596 = vand.u32 2147483647, %v4331
      %vm4597 = vcmp.eq.f32.partialorder %v4596, 8.507059e+37
      %v4598 = vand.u32 %v4331, 2147483648
      %v4599 = vor.u32 1.1754944e-38, %v4598
      %v4600 = vsel %vm4597, %v4599, %v4595
      %v4601 = vmul.f32 1.0, %v4600
      %v4602 = vrcp.pop %v4332
      %v4603 = vmul.f32 %v4332, %v4602
      %v4604 = vsub.f32 1.0, %v4603
      %v4605 = vmul.f32 %v4602, %v4604
      %v4606 = vadd.f32 %v4602, %v4605
      %vm4607 = vweird.f32 %v4332
      %vm4608 = vweird.f32 %v4602
      %vm4609 = vmor %vm4607, %vm4608
      %v4610 = vsel %vm4609, %v4602, %v4606
      %v4611 = vand.u32 2147483647, %v4332
      %vm4612 = vcmp.eq.f32.partialorder %v4611, 8.507059e+37
      %v4613 = vand.u32 %v4332, 2147483648
      %v4614 = vor.u32 1.1754944e-38, %v4613
      %v4615 = vsel %vm4612, %v4614, %v4610
      %v4616 = vmul.f32 1.0, %v4615
      %v4617 = vrcp.pop %v4333
      %v4618 = vmul.f32 %v4333, %v4617
      %v4619 = vsub.f32 1.0, %v4618
      %v4620 = vmul.f32 %v4617, %v4619
      %v4621 = vadd.f32 %v4617, %v4620
      %vm4622 = vweird.f32 %v4333
      %vm4623 = vweird.f32 %v4617
      %vm4624 = vmor %vm4622, %vm4623
      %v4625 = vsel %vm4624, %v4617, %v4621
      %v4626 = vand.u32 2147483647, %v4333
      %vm4627 = vcmp.eq.f32.partialorder %v4626, 8.507059e+37
      %v4628 = vand.u32 %v4333, 2147483648
      %v4629 = vor.u32 1.1754944e-38, %v4628
      %v4630 = vsel %vm4627, %v4629, %v4625
      %v4631 = vmul.f32 1.0, %v4630
      %v4632 = vrcp.pop %v4334
      %v4633 = vmul.f32 %v4334, %v4632
      %v4634 = vsub.f32 1.0, %v4633
      %v4635 = vmul.f32 %v4632, %v4634
      %v4636 = vadd.f32 %v4632, %v4635
      %vm4637 = vweird.f32 %v4334
      %vm4638 = vweird.f32 %v4632
      %vm4639 = vmor %vm4637, %vm4638
      %v4640 = vsel %vm4639, %v4632, %v4636
      %v4641 = vand.u32 2147483647, %v4334
      %vm4642 = vcmp.eq.f32.partialorder %v4641, 8.507059e+37
      %v4643 = vand.u32 %v4334, 2147483648
      %v4644 = vor.u32 1.1754944e-38, %v4643
      %v4645 = vsel %vm4642, %v4644, %v4640
      %v4646 = vmul.f32 1.0, %v4645
      %v4647 = vrcp.pop %v4335
      %v4648 = vmul.f32 %v4335, %v4647
      %v4649 = vsub.f32 1.0, %v4648
      %v4650 = vmul.f32 %v4647, %v4649
      %v4651 = vadd.f32 %v4647, %v4650
      %vm4652 = vweird.f32 %v4335
      %vm4653 = vweird.f32 %v4647
      %vm4654 = vmor %vm4652, %vm4653
      %v4655 = vsel %vm4654, %v4647, %v4651
      %v4656 = vand.u32 2147483647, %v4335
      %vm4657 = vcmp.eq.f32.partialorder %v4656, 8.507059e+37
      %v4658 = vand.u32 %v4335, 2147483648
      %v4659 = vor.u32 1.1754944e-38, %v4658
      %v4660 = vsel %vm4657, %v4659, %v4655
      %v4661 = vmul.f32 1.0, %v4660
      %v4662 = vrcp.pop %v4336
      %v4663 = vmul.f32 %v4336, %v4662
      %v4664 = vsub.f32 1.0, %v4663
      %v4665 = vmul.f32 %v4662, %v4664
      %v4666 = vadd.f32 %v4662, %v4665
      %vm4667 = vweird.f32 %v4336
      %vm4668 = vweird.f32 %v4662
      %vm4669 = vmor %vm4667, %vm4668
      %v4670 = vsel %vm4669, %v4662, %v4666
      %v4671 = vand.u32 2147483647, %v4336
      %vm4672 = vcmp.eq.f32.partialorder %v4671, 8.507059e+37
      %v4673 = vand.u32 %v4336, 2147483648
      %v4674 = vor.u32 1.1754944e-38, %v4673
      %v4675 = vsel %vm4672, %v4674, %v4670
      %v4676 = vmul.f32 1.0, %v4675
      %v4677 = vrcp.pop %v4337
      %v4678 = vmul.f32 %v4337, %v4677
      %v4679 = vsub.f32 1.0, %v4678
      %v4680 = vmul.f32 %v4677, %v4679
      %v4681 = vadd.f32 %v4677, %v4680
      %vm4682 = vweird.f32 %v4337
      %vm4683 = vweird.f32 %v4677
      %vm4684 = vmor %vm4682, %vm4683
      %v4685 = vsel %vm4684, %v4677, %v4681
      %v4686 = vand.u32 2147483647, %v4337
      %vm4687 = vcmp.eq.f32.partialorder %v4686, 8.507059e+37
      %v4688 = vand.u32 %v4337, 2147483648
      %v4689 = vor.u32 1.1754944e-38, %v4688
      %v4690 = vsel %vm4687, %v4689, %v4685
      %v4691 = vmul.f32 1.0, %v4690
      %v4692 = vrcp.pop %v4338
      %v4693 = vmul.f32 %v4338, %v4692
      %v4694 = vsub.f32 1.0, %v4693
      %v4695 = vmul.f32 %v4692, %v4694
      %v4696 = vadd.f32 %v4692, %v4695
      %vm4697 = vweird.f32 %v4338
      %vm4698 = vweird.f32 %v4692
      %vm4699 = vmor %vm4697, %vm4698
      %v4700 = vsel %vm4699, %v4692, %v4696
      %v4701 = vand.u32 2147483647, %v4338
      %vm4702 = vcmp.eq.f32.partialorder %v4701, 8.507059e+37
      %v4703 = vand.u32 %v4338, 2147483648
      %v4704 = vor.u32 1.1754944e-38, %v4703
      %v4705 = vsel %vm4702, %v4704, %v4700
      %v4706 = vmul.f32 1.0, %v4705
      %v4707 = vrcp.pop %v4339
      %v4708 = vmul.f32 %v4339, %v4707
      %v4709 = vsub.f32 1.0, %v4708
      %v4710 = vmul.f32 %v4707, %v4709
      %v4711 = vadd.f32 %v4707, %v4710
      %vm4712 = vweird.f32 %v4339
      %vm4713 = vweird.f32 %v4707
      %vm4714 = vmor %vm4712, %vm4713
      %v4715 = vsel %vm4714, %v4707, %v4711
      %v4716 = vand.u32 2147483647, %v4339
      %vm4717 = vcmp.eq.f32.partialorder %v4716, 8.507059e+37
      %v4718 = vand.u32 %v4339, 2147483648
      %v4719 = vor.u32 1.1754944e-38, %v4718
      %v4720 = vsel %vm4717, %v4719, %v4715
      %v4721 = vmul.f32 1.0, %v4720
      %v4722 = vrcp.pop %v4340
      %v4723 = vmul.f32 %v4340, %v4722
      %v4724 = vsub.f32 1.0, %v4723
      %v4725 = vmul.f32 %v4722, %v4724
      %v4726 = vadd.f32 %v4722, %v4725
      %vm4727 = vweird.f32 %v4340
      %vm4728 = vweird.f32 %v4722
      %vm4729 = vmor %vm4727, %vm4728
      %v4730 = vsel %vm4729, %v4722, %v4726
      %v4731 = vand.u32 2147483647, %v4340
      %vm4732 = vcmp.eq.f32.partialorder %v4731, 8.507059e+37
      %v4733 = vand.u32 %v4340, 2147483648
      %v4734 = vor.u32 1.1754944e-38, %v4733
      %v4735 = vsel %vm4732, %v4734, %v4730
      %v4736 = vmul.f32 1.0, %v4735
      %v4737 = vrcp.pop %v4341
      %v4738 = vmul.f32 %v4341, %v4737
      %v4739 = vsub.f32 1.0, %v4738
      %v4740 = vmul.f32 %v4737, %v4739
      %v4741 = vadd.f32 %v4737, %v4740
      %vm4742 = vweird.f32 %v4341
      %vm4743 = vweird.f32 %v4737
      %vm4744 = vmor %vm4742, %vm4743
      %v4745 = vsel %vm4744, %v4737, %v4741
      %v4746 = vand.u32 2147483647, %v4341
      %vm4747 = vcmp.eq.f32.partialorder %v4746, 8.507059e+37
      %v4748 = vand.u32 %v4341, 2147483648
      %v4749 = vor.u32 1.1754944e-38, %v4748
      %v4750 = vsel %vm4747, %v4749, %v4745
      %v4751 = vmul.f32 1.0, %v4750
      %v4752 = vrcp.pop %v4342
      %v4753 = vmul.f32 %v4342, %v4752
      %v4754 = vsub.f32 1.0, %v4753
      %v4755 = vmul.f32 %v4752, %v4754
      %v4756 = vadd.f32 %v4752, %v4755
      %vm4757 = vweird.f32 %v4342
      %vm4758 = vweird.f32 %v4752
      %vm4759 = vmor %vm4757, %vm4758
      %v4760 = vsel %vm4759, %v4752, %v4756
      %v4761 = vand.u32 2147483647, %v4342
      %vm4762 = vcmp.eq.f32.partialorder %v4761, 8.507059e+37
      %v4763 = vand.u32 %v4342, 2147483648
      %v4764 = vor.u32 1.1754944e-38, %v4763
      %v4765 = vsel %vm4762, %v4764, %v4760
      %v4766 = vmul.f32 1.0, %v4765
      %v4767 = vrcp.pop %v4343
      %v4768 = vmul.f32 %v4343, %v4767
      %v4769 = vsub.f32 1.0, %v4768
      %v4770 = vmul.f32 %v4767, %v4769
      %v4771 = vadd.f32 %v4767, %v4770
      %vm4772 = vweird.f32 %v4343
      %vm4773 = vweird.f32 %v4767
      %vm4774 = vmor %vm4772, %vm4773
      %v4775 = vsel %vm4774, %v4767, %v4771
      %v4776 = vand.u32 2147483647, %v4343
      %vm4777 = vcmp.eq.f32.partialorder %v4776, 8.507059e+37
      %v4778 = vand.u32 %v4343, 2147483648
      %v4779 = vor.u32 1.1754944e-38, %v4778
      %v4780 = vsel %vm4777, %v4779, %v4775
      %v4781 = vmul.f32 1.0, %v4780
      %v4782 = vrcp.pop %v4344
      %v4783 = vmul.f32 %v4344, %v4782
      %v4784 = vsub.f32 1.0, %v4783
      %v4785 = vmul.f32 %v4782, %v4784
      %v4786 = vadd.f32 %v4782, %v4785
      %vm4787 = vweird.f32 %v4344
      %vm4788 = vweird.f32 %v4782
      %vm4789 = vmor %vm4787, %vm4788
      %v4790 = vsel %vm4789, %v4782, %v4786
      %v4791 = vand.u32 2147483647, %v4344
      %vm4792 = vcmp.eq.f32.partialorder %v4791, 8.507059e+37
      %v4793 = vand.u32 %v4344, 2147483648
      %v4794 = vor.u32 1.1754944e-38, %v4793
      %v4795 = vsel %vm4792, %v4794, %v4790
      %v4796 = vmul.f32 1.0, %v4795
      %v4797 = vrcp.pop %v4345
      %v4798 = vmul.f32 %v4345, %v4797
      %v4799 = vsub.f32 1.0, %v4798
      %v4800 = vmul.f32 %v4797, %v4799
      %v4801 = vadd.f32 %v4797, %v4800
      %vm4802 = vweird.f32 %v4345
      %vm4803 = vweird.f32 %v4797
      %vm4804 = vmor %vm4802, %vm4803
      %v4805 = vsel %vm4804, %v4797, %v4801
      %v4806 = vand.u32 2147483647, %v4345
      %vm4807 = vcmp.eq.f32.partialorder %v4806, 8.507059e+37
      %v4808 = vand.u32 %v4345, 2147483648
      %v4809 = vor.u32 1.1754944e-38, %v4808
      %v4810 = vsel %vm4807, %v4809, %v4805
      %v4811 = vmul.f32 1.0, %v4810
      %v4812 = vrcp.pop %v4346
      %v4813 = vmul.f32 %v4346, %v4812
      %v4814 = vsub.f32 1.0, %v4813
      %v4815 = vmul.f32 %v4812, %v4814
      %v4816 = vadd.f32 %v4812, %v4815
      %vm4817 = vweird.f32 %v4346
      %vm4818 = vweird.f32 %v4812
      %vm4819 = vmor %vm4817, %vm4818
      %v4820 = vsel %vm4819, %v4812, %v4816
      %v4821 = vand.u32 2147483647, %v4346
      %vm4822 = vcmp.eq.f32.partialorder %v4821, 8.507059e+37
      %v4823 = vand.u32 %v4346, 2147483648
      %v4824 = vor.u32 1.1754944e-38, %v4823
      %v4825 = vsel %vm4822, %v4824, %v4820
      %v4826 = vmul.f32 1.0, %v4825
      %v4827 = vmul.f32 %v4187, %v4361
      %v4828 = vmul.f32 %v4188, %v4376
      %v4829 = vmul.f32 %v4189, %v4391
      %v4830 = vmul.f32 %v4190, %v4406
      %v4831 = vmul.f32 %v4191, %v4421
      %v4832 = vmul.f32 %v4192, %v4436
      %v4833 = vmul.f32 %v4193, %v4451
      %v4834 = vmul.f32 %v4194, %v4466
      %v4835 = vmul.f32 %v4195, %v4481
      %v4836 = vmul.f32 %v4196, %v4496
      %v4837 = vmul.f32 %v4197, %v4511
      %v4838 = vmul.f32 %v4198, %v4526
      %v4839 = vmul.f32 %v4199, %v4541
      %v4840 = vmul.f32 %v4200, %v4556
      %v4841 = vmul.f32 %v4201, %v4571
      %v4842 = vmul.f32 %v4202, %v4586
      %v4843 = vmul.f32 %v4203, %v4601
      %v4844 = vmul.f32 %v4204, %v4616
      %v4845 = vmul.f32 %v4205, %v4631
      %v4846 = vmul.f32 %v4206, %v4646
      %v4847 = vmul.f32 %v4207, %v4661
      %v4848 = vmul.f32 %v4208, %v4676
      %v4849 = vmul.f32 %v4209, %v4691
      %v4850 = vmul.f32 %v4210, %v4706
      %v4851 = vmul.f32 %v4211, %v4721
      %v4852 = vmul.f32 %v4212, %v4736
      %v4853 = vmul.f32 %v4213, %v4751
      %v4854 = vmul.f32 %v4214, %v4766
      %v4855 = vmul.f32 %v4215, %v4781
      %v4856 = vmul.f32 %v4216, %v4796
      %v4857 = vmul.f32 %v4217, %v4811
      %v4858 = vmul.f32 %v4218, %v4826
      %v4859 = vpack.c.bf16 %v4828, %v4827
      %v4860 = vpack.c.bf16 %v4830, %v4829
      %v4861 = vpack.c.bf16 %v4832, %v4831
      %v4862 = vpack.c.bf16 %v4834, %v4833
      %v4863 = vpack.c.bf16 %v4836, %v4835
      %v4864 = vpack.c.bf16 %v4838, %v4837
      %v4865 = vpack.c.bf16 %v4840, %v4839
      %v4866 = vpack.c.bf16 %v4842, %v4841
      %v4867 = vpack.c.bf16 %v4844, %v4843
      %v4868 = vpack.c.bf16 %v4846, %v4845
      %v4869 = vpack.c.bf16 %v4848, %v4847
      %v4870 = vpack.c.bf16 %v4850, %v4849
      %v4871 = vpack.c.bf16 %v4852, %v4851
      %v4872 = vpack.c.bf16 %v4854, %v4853
      %v4873 = vpack.c.bf16 %v4856, %v4855
      %v4874 = vpack.c.bf16 %v4858, %v4857
      %v4875 = vld [vmem:[#allocation14] sm:$0xf]
      %v4876 = vld [vmem:[#allocation14 + $0x4] sm:$0xf]
      %v4877 = vld [vmem:[#allocation14 + $0x8] sm:$0xf]
      %v4878 = vld [vmem:[#allocation14 + $0xc] sm:$0xf]
      %v4879 = vld [vmem:[#allocation14 + $0x10] sm:$0xf]
      %v4880 = vld [vmem:[#allocation14 + $0x14] sm:$0xf]
      %v4881 = vld [vmem:[#allocation14 + $0x18] sm:$0xf]
      %v4882 = vld [vmem:[#allocation14 + $0x1c] sm:$0xf]
      %v4883 = vld [vmem:[#allocation14 + $0x20] sm:$0xf]
      %v4884 = vld [vmem:[#allocation14 + $0x24] sm:$0xf]
      %v4885 = vld [vmem:[#allocation14 + $0x28] sm:$0xf]
      %v4886 = vld [vmem:[#allocation14 + $0x2c] sm:$0xf]
      %v4887 = vld [vmem:[#allocation14 + $0x30] sm:$0xf]
      %v4888 = vld [vmem:[#allocation14 + $0x34] sm:$0xf]
      %v4889 = vld [vmem:[#allocation14 + $0x38] sm:$0xf]
      %v4890 = vld [vmem:[#allocation14 + $0x3c] sm:$0xf]
      %v4891 = vld [vmem:[%s19] sm:$0x1]
      %v4893 = vperm.slane %v4891, 0
      %v4911 = vunpack.c.l.b16 %v4875
      %v4912 = vunpack.c.l.b16 %v4876
      %v4913 = vunpack.c.l.b16 %v4877
      %v4914 = vunpack.c.l.b16 %v4878
      %v4915 = vunpack.c.l.b16 %v4879
      %v4916 = vunpack.c.l.b16 %v4880
      %v4917 = vunpack.c.l.b16 %v4881
      %v4918 = vunpack.c.l.b16 %v4882
      %v4919 = vunpack.c.l.b16 %v4883
      %v4920 = vunpack.c.l.b16 %v4884
      %v4921 = vunpack.c.l.b16 %v4885
      %v4922 = vunpack.c.l.b16 %v4886
      %v4923 = vunpack.c.l.b16 %v4887
      %v4924 = vunpack.c.l.b16 %v4888
      %v4925 = vunpack.c.l.b16 %v4889
      %v4926 = vunpack.c.l.b16 %v4890
      %v4927 = vpack.c.b16 %v4912, %v4911
      %v4928 = vpack.c.b16 %v4914, %v4913
      %v4929 = vpack.c.b16 %v4916, %v4915
      %v4930 = vpack.c.b16 %v4918, %v4917
      %v4931 = vpack.c.b16 %v4920, %v4919
      %v4932 = vpack.c.b16 %v4922, %v4921
      %v4933 = vpack.c.b16 %v4924, %v4923
      %v4934 = vpack.c.b16 %v4926, %v4925
      %4943 = vmatpush.bf16.msra.mxu0 %v4934
      %4944 = vmatpush.bf16.msra.mxu0 %v4933
      %4945 = vmatpush.bf16.msra.mxu0 %v4932
      %4946 = vmatpush.bf16.msra.mxu0 %v4931
      %4947 = vmatpush.bf16.msra.mxu0 %v4930
      %4948 = vmatpush.bf16.msra.mxu0 %v4929
      %4949 = vmatpush.bf16.msra.mxu0 %v4928
      %4950 = vmatpush.bf16.msra.mxu0 %v4927
      %4951 = vmatmul.bf16.gmra.mxu0 %v4859
      %v4952 = vpop.f32.mrf.mxu0
      %v4953 = vadd.f32 %v4893, %v4952
      %v4954 = vpop.f32.mrf.mxu0
      %v4955 = vadd.f32 %v4893, %v4954
      %4956 = vmatmul.bf16.gmra.mxu0 %v4860
      %v4957 = vpop.f32.mrf.mxu0
      %v4958 = vadd.f32 %v4893, %v4957
      %v4959 = vpop.f32.mrf.mxu0
      %v4960 = vadd.f32 %v4893, %v4959
      %4961 = vmatmul.bf16.gmra.mxu0 %v4861
      %v4962 = vpop.f32.mrf.mxu0
      %v4963 = vadd.f32 %v4893, %v4962
      %v4964 = vpop.f32.mrf.mxu0
      %v4965 = vadd.f32 %v4893, %v4964
      %4966 = vmatmul.bf16.gmra.mxu0 %v4862
      %v4967 = vpop.f32.mrf.mxu0
      %v4968 = vadd.f32 %v4893, %v4967
      %v4969 = vpop.f32.mrf.mxu0
      %v4970 = vadd.f32 %v4893, %v4969
      %4971 = vmatmul.bf16.gmra.mxu0 %v4863
      %v4972 = vpop.f32.mrf.mxu0
      %v4973 = vadd.f32 %v4893, %v4972
      %v4974 = vpop.f32.mrf.mxu0
      %v4975 = vadd.f32 %v4893, %v4974
      %4976 = vmatmul.bf16.gmra.mxu0 %v4864
      %v4977 = vpop.f32.mrf.mxu0
      %v4978 = vadd.f32 %v4893, %v4977
      %v4979 = vpop.f32.mrf.mxu0
      %v4980 = vadd.f32 %v4893, %v4979
      %4981 = vmatmul.bf16.gmra.mxu0 %v4865
      %v4982 = vpop.f32.mrf.mxu0
      %v4983 = vadd.f32 %v4893, %v4982
      %v4984 = vpop.f32.mrf.mxu0
      %v4985 = vadd.f32 %v4893, %v4984
      %4986 = vmatmul.bf16.gmra.mxu0 %v4866
      %v4987 = vpop.f32.mrf.mxu0
      %v4988 = vadd.f32 %v4893, %v4987
      %v4989 = vpop.f32.mrf.mxu0
      %v4990 = vadd.f32 %v4893, %v4989
      %4991 = vmatmul.bf16.gmra.mxu0 %v4867
      %v4992 = vpop.f32.mrf.mxu0
      %v4993 = vadd.f32 %v4893, %v4992
      %v4994 = vpop.f32.mrf.mxu0
      %v4995 = vadd.f32 %v4893, %v4994
      %4996 = vmatmul.bf16.gmra.mxu0 %v4868
      %v4997 = vpop.f32.mrf.mxu0
      %v4998 = vadd.f32 %v4893, %v4997
      %v4999 = vpop.f32.mrf.mxu0
      %v5000 = vadd.f32 %v4893, %v4999
      %5001 = vmatmul.bf16.gmra.mxu0 %v4869
      %v5002 = vpop.f32.mrf.mxu0
      %v5003 = vadd.f32 %v4893, %v5002
      %v5004 = vpop.f32.mrf.mxu0
      %v5005 = vadd.f32 %v4893, %v5004
      %5006 = vmatmul.bf16.gmra.mxu0 %v4870
      %v5007 = vpop.f32.mrf.mxu0
      %v5008 = vadd.f32 %v4893, %v5007
      %v5009 = vpop.f32.mrf.mxu0
      %v5010 = vadd.f32 %v4893, %v5009
      %5011 = vmatmul.bf16.gmra.mxu0 %v4871
      %v5012 = vpop.f32.mrf.mxu0
      %v5013 = vadd.f32 %v4893, %v5012
      %v5014 = vpop.f32.mrf.mxu0
      %v5015 = vadd.f32 %v4893, %v5014
      %5016 = vmatmul.bf16.gmra.mxu0 %v4872
      %v5017 = vpop.f32.mrf.mxu0
      %v5018 = vadd.f32 %v4893, %v5017
      %v5019 = vpop.f32.mrf.mxu0
      %v5020 = vadd.f32 %v4893, %v5019
      %5021 = vmatmul.bf16.gmra.mxu0 %v4873
      %v5022 = vpop.f32.mrf.mxu0
      %v5023 = vadd.f32 %v4893, %v5022
      %v5024 = vpop.f32.mrf.mxu0
      %v5025 = vadd.f32 %v4893, %v5024
      %5026 = vmatmul.bf16.gmra.mxu0 %v4874
      %v5027 = vpop.f32.mrf.mxu0
      %v5028 = vadd.f32 %v4893, %v5027
      %v5029 = vpop.f32.mrf.mxu0
      %v5030 = vadd.f32 %v4893, %v5029
      %5031 = vdwg.mxu0
      %v5032 = vld [vmem:[%s20] sm:$0x1]
      %v5033 = vld [vmem:[%s21] sm:$0x1]
      %v5034 = vmul.f32 %v4953, %v2535
      %v5035 = vmul.f32 %v4955, %v2535
      %v5036 = vmul.f32 %v4958, %v2535
      %v5037 = vmul.f32 %v4960, %v2535
      %v5038 = vmul.f32 %v4963, %v2535
      %v5039 = vmul.f32 %v4965, %v2535
      %v5040 = vmul.f32 %v4968, %v2535
      %v5041 = vmul.f32 %v4970, %v2535
      %v5042 = vmul.f32 %v4973, %v2535
      %v5043 = vmul.f32 %v4975, %v2535
      %v5044 = vmul.f32 %v4978, %v2535
      %v5045 = vmul.f32 %v4980, %v2535
      %v5046 = vmul.f32 %v4983, %v2535
      %v5047 = vmul.f32 %v4985, %v2535
      %v5048 = vmul.f32 %v4988, %v2535
      %v5049 = vmul.f32 %v4990, %v2535
      %v5050 = vmul.f32 %v4993, %v2535
      %v5051 = vmul.f32 %v4995, %v2535
      %v5052 = vmul.f32 %v4998, %v2535
      %v5053 = vmul.f32 %v5000, %v2535
      %v5054 = vmul.f32 %v5003, %v2535
      %v5055 = vmul.f32 %v5005, %v2535
      %v5056 = vmul.f32 %v5008, %v2535
      %v5057 = vmul.f32 %v5010, %v2535
      %v5058 = vmul.f32 %v5013, %v2535
      %v5059 = vmul.f32 %v5015, %v2535
      %v5060 = vmul.f32 %v5018, %v2535
      %v5061 = vmul.f32 %v5020, %v2535
      %v5062 = vmul.f32 %v5023, %v2535
      %v5063 = vmul.f32 %v5025, %v2535
      %v5064 = vmul.f32 %v5028, %v2535
      %v5065 = vmul.f32 %v5030, %v2535
      %5066 = vadd.xlane.f32.xlu0 %v5034
      %v5067 = vpop.xlane.xlu0 %5066
      %5068 = vadd.xlane.f32.xlu0 %v5035
      %v5069 = vpop.xlane.xlu0 %5068
      %5070 = vadd.xlane.f32.xlu0 %v5036
      %v5071 = vpop.xlane.xlu0 %5070
      %5072 = vadd.xlane.f32.xlu0 %v5037
      %v5073 = vpop.xlane.xlu0 %5072
      %5074 = vadd.xlane.f32.xlu0 %v5038
      %v5075 = vpop.xlane.xlu0 %5074
      %5076 = vadd.xlane.f32.xlu0 %v5039
      %v5077 = vpop.xlane.xlu0 %5076
      %5078 = vadd.xlane.f32.xlu0 %v5040
      %v5079 = vpop.xlane.xlu0 %5078
      %5080 = vadd.xlane.f32.xlu0 %v5041
      %v5081 = vpop.xlane.xlu0 %5080
      %5082 = vadd.xlane.f32.xlu0 %v5042
      %v5083 = vpop.xlane.xlu0 %5082
      %5084 = vadd.xlane.f32.xlu0 %v5043
      %v5085 = vpop.xlane.xlu0 %5084
      %5086 = vadd.xlane.f32.xlu0 %v5044
      %v5087 = vpop.xlane.xlu0 %5086
      %5088 = vadd.xlane.f32.xlu0 %v5045
      %v5089 = vpop.xlane.xlu0 %5088
      %5090 = vadd.xlane.f32.xlu0 %v5046
      %v5091 = vpop.xlane.xlu0 %5090
      %5092 = vadd.xlane.f32.xlu0 %v5047
      %v5093 = vpop.xlane.xlu0 %5092
      %5094 = vadd.xlane.f32.xlu0 %v5048
      %v5095 = vpop.xlane.xlu0 %5094
      %5096 = vadd.xlane.f32.xlu0 %v5049
      %v5097 = vpop.xlane.xlu0 %5096
      %5098 = vadd.xlane.f32.xlu0 %v5050
      %v5099 = vpop.xlane.xlu0 %5098
      %5100 = vadd.xlane.f32.xlu0 %v5051
      %v5101 = vpop.xlane.xlu0 %5100
      %5102 = vadd.xlane.f32.xlu0 %v5052
      %v5103 = vpop.xlane.xlu0 %5102
      %5104 = vadd.xlane.f32.xlu0 %v5053
      %v5105 = vpop.xlane.xlu0 %5104
      %5106 = vadd.xlane.f32.xlu0 %v5054
      %v5107 = vpop.xlane.xlu0 %5106
      %5108 = vadd.xlane.f32.xlu0 %v5055
      %v5109 = vpop.xlane.xlu0 %5108
      %5110 = vadd.xlane.f32.xlu0 %v5056
      %v5111 = vpop.xlane.xlu0 %5110
      %5112 = vadd.xlane.f32.xlu0 %v5057
      %v5113 = vpop.xlane.xlu0 %5112
      %5114 = vadd.xlane.f32.xlu0 %v5058
      %v5115 = vpop.xlane.xlu0 %5114
      %5116 = vadd.xlane.f32.xlu0 %v5059
      %v5117 = vpop.xlane.xlu0 %5116
      %5118 = vadd.xlane.f32.xlu0 %v5060
      %v5119 = vpop.xlane.xlu0 %5118
      %5120 = vadd.xlane.f32.xlu0 %v5061
      %v5121 = vpop.xlane.xlu0 %5120
      %5122 = vadd.xlane.f32.xlu0 %v5062
      %v5123 = vpop.xlane.xlu0 %5122
      %5124 = vadd.xlane.f32.xlu0 %v5063
      %v5125 = vpop.xlane.xlu0 %5124
      %5126 = vadd.xlane.f32.xlu0 %v5064
      %v5127 = vpop.xlane.xlu0 %5126
      %5128 = vadd.xlane.f32.xlu0 %v5065
      %v5129 = vpop.xlane.xlu0 %5128
      %v5130 = vmul.f32 %v5067, 0.03125
      %v5131 = vmul.f32 %v5069, 0.03125
      %v5132 = vmul.f32 %v5071, 0.03125
      %v5133 = vmul.f32 %v5073, 0.03125
      %v5134 = vmul.f32 %v5075, 0.03125
      %v5135 = vmul.f32 %v5077, 0.03125
      %v5136 = vmul.f32 %v5079, 0.03125
      %v5137 = vmul.f32 %v5081, 0.03125
      %v5138 = vmul.f32 %v5083, 0.03125
      %v5139 = vmul.f32 %v5085, 0.03125
      %v5140 = vmul.f32 %v5087, 0.03125
      %v5141 = vmul.f32 %v5089, 0.03125
      %v5142 = vmul.f32 %v5091, 0.03125
      %v5143 = vmul.f32 %v5093, 0.03125
      %v5144 = vmul.f32 %v5095, 0.03125
      %v5145 = vmul.f32 %v5097, 0.03125
      %v5146 = vmul.f32 %v5099, 0.03125
      %v5147 = vmul.f32 %v5101, 0.03125
      %v5148 = vmul.f32 %v5103, 0.03125
      %v5149 = vmul.f32 %v5105, 0.03125
      %v5150 = vmul.f32 %v5107, 0.03125
      %v5151 = vmul.f32 %v5109, 0.03125
      %v5152 = vmul.f32 %v5111, 0.03125
      %v5153 = vmul.f32 %v5113, 0.03125
      %v5154 = vmul.f32 %v5115, 0.03125
      %v5155 = vmul.f32 %v5117, 0.03125
      %v5156 = vmul.f32 %v5119, 0.03125
      %v5157 = vmul.f32 %v5121, 0.03125
      %v5158 = vmul.f32 %v5123, 0.03125
      %v5159 = vmul.f32 %v5125, 0.03125
      %v5160 = vmul.f32 %v5127, 0.03125
      %v5161 = vmul.f32 %v5129, 0.03125
      %v5162 = vsub.f32 %v5034, %v5130
      %v5163 = vsub.f32 %v5035, %v5131
      %v5164 = vsub.f32 %v5036, %v5132
      %v5165 = vsub.f32 %v5037, %v5133
      %v5166 = vsub.f32 %v5038, %v5134
      %v5167 = vsub.f32 %v5039, %v5135
      %v5168 = vsub.f32 %v5040, %v5136
      %v5169 = vsub.f32 %v5041, %v5137
      %v5170 = vsub.f32 %v5042, %v5138
      %v5171 = vsub.f32 %v5043, %v5139
      %v5172 = vsub.f32 %v5044, %v5140
      %v5173 = vsub.f32 %v5045, %v5141
      %v5174 = vsub.f32 %v5046, %v5142
      %v5175 = vsub.f32 %v5047, %v5143
      %v5176 = vsub.f32 %v5048, %v5144
      %v5177 = vsub.f32 %v5049, %v5145
      %v5178 = vsub.f32 %v5050, %v5146
      %v5179 = vsub.f32 %v5051, %v5147
      %v5180 = vsub.f32 %v5052, %v5148
      %v5181 = vsub.f32 %v5053, %v5149
      %v5182 = vsub.f32 %v5054, %v5150
      %v5183 = vsub.f32 %v5055, %v5151
      %v5184 = vsub.f32 %v5056, %v5152
      %v5185 = vsub.f32 %v5057, %v5153
      %v5186 = vsub.f32 %v5058, %v5154
      %v5187 = vsub.f32 %v5059, %v5155
      %v5188 = vsub.f32 %v5060, %v5156
      %v5189 = vsub.f32 %v5061, %v5157
      %v5190 = vsub.f32 %v5062, %v5158
      %v5191 = vsub.f32 %v5063, %v5159
      %v5192 = vsub.f32 %v5064, %v5160
      %v5193 = vsub.f32 %v5065, %v5161
      %v5194 = vmul.f32 %v5162, %v2535
      %v5195 = vmul.f32 %v5163, %v2535
      %v5196 = vmul.f32 %v5164, %v2535
      %v5197 = vmul.f32 %v5165, %v2535
      %v5198 = vmul.f32 %v5166, %v2535
      %v5199 = vmul.f32 %v5167, %v2535
      %v5200 = vmul.f32 %v5168, %v2535
      %v5201 = vmul.f32 %v5169, %v2535
      %v5202 = vmul.f32 %v5170, %v2535
      %v5203 = vmul.f32 %v5171, %v2535
      %v5204 = vmul.f32 %v5172, %v2535
      %v5205 = vmul.f32 %v5173, %v2535
      %v5206 = vmul.f32 %v5174, %v2535
      %v5207 = vmul.f32 %v5175, %v2535
      %v5208 = vmul.f32 %v5176, %v2535
      %v5209 = vmul.f32 %v5177, %v2535
      %v5210 = vmul.f32 %v5178, %v2535
      %v5211 = vmul.f32 %v5179, %v2535
      %v5212 = vmul.f32 %v5180, %v2535
      %v5213 = vmul.f32 %v5181, %v2535
      %v5214 = vmul.f32 %v5182, %v2535
      %v5215 = vmul.f32 %v5183, %v2535
      %v5216 = vmul.f32 %v5184, %v2535
      %v5217 = vmul.f32 %v5185, %v2535
      %v5218 = vmul.f32 %v5186, %v2535
      %v5219 = vmul.f32 %v5187, %v2535
      %v5220 = vmul.f32 %v5188, %v2535
      %v5221 = vmul.f32 %v5189, %v2535
      %v5222 = vmul.f32 %v5190, %v2535
      %v5223 = vmul.f32 %v5191, %v2535
      %v5224 = vmul.f32 %v5192, %v2535
      %v5225 = vmul.f32 %v5193, %v2535
      %v5226 = vmul.f32 %v5194, %v5194
      %v5227 = vmul.f32 %v5195, %v5195
      %v5228 = vmul.f32 %v5196, %v5196
      %v5229 = vmul.f32 %v5197, %v5197
      %v5230 = vmul.f32 %v5198, %v5198
      %v5231 = vmul.f32 %v5199, %v5199
      %v5232 = vmul.f32 %v5200, %v5200
      %v5233 = vmul.f32 %v5201, %v5201
      %v5234 = vmul.f32 %v5202, %v5202
      %v5235 = vmul.f32 %v5203, %v5203
      %v5236 = vmul.f32 %v5204, %v5204
      %v5237 = vmul.f32 %v5205, %v5205
      %v5238 = vmul.f32 %v5206, %v5206
      %v5239 = vmul.f32 %v5207, %v5207
      %v5240 = vmul.f32 %v5208, %v5208
      %v5241 = vmul.f32 %v5209, %v5209
      %v5242 = vmul.f32 %v5210, %v5210
      %v5243 = vmul.f32 %v5211, %v5211
      %v5244 = vmul.f32 %v5212, %v5212
      %v5245 = vmul.f32 %v5213, %v5213
      %v5246 = vmul.f32 %v5214, %v5214
      %v5247 = vmul.f32 %v5215, %v5215
      %v5248 = vmul.f32 %v5216, %v5216
      %v5249 = vmul.f32 %v5217, %v5217
      %v5250 = vmul.f32 %v5218, %v5218
      %v5251 = vmul.f32 %v5219, %v5219
      %v5252 = vmul.f32 %v5220, %v5220
      %v5253 = vmul.f32 %v5221, %v5221
      %v5254 = vmul.f32 %v5222, %v5222
      %v5255 = vmul.f32 %v5223, %v5223
      %v5256 = vmul.f32 %v5224, %v5224
      %v5257 = vmul.f32 %v5225, %v5225
      %5258 = vadd.xlane.f32.xlu0 %v5226
      %v5259 = vpop.xlane.xlu0 %5258
      %5260 = vadd.xlane.f32.xlu0 %v5227
      %v5261 = vpop.xlane.xlu0 %5260
      %5262 = vadd.xlane.f32.xlu0 %v5228
      %v5263 = vpop.xlane.xlu0 %5262
      %5264 = vadd.xlane.f32.xlu0 %v5229
      %v5265 = vpop.xlane.xlu0 %5264
      %5266 = vadd.xlane.f32.xlu0 %v5230
      %v5267 = vpop.xlane.xlu0 %5266
      %5268 = vadd.xlane.f32.xlu0 %v5231
      %v5269 = vpop.xlane.xlu0 %5268
      %5270 = vadd.xlane.f32.xlu0 %v5232
      %v5271 = vpop.xlane.xlu0 %5270
      %5272 = vadd.xlane.f32.xlu0 %v5233
      %v5273 = vpop.xlane.xlu0 %5272
      %5274 = vadd.xlane.f32.xlu0 %v5234
      %v5275 = vpop.xlane.xlu0 %5274
      %5276 = vadd.xlane.f32.xlu0 %v5235
      %v5277 = vpop.xlane.xlu0 %5276
      %5278 = vadd.xlane.f32.xlu0 %v5236
      %v5279 = vpop.xlane.xlu0 %5278
      %5280 = vadd.xlane.f32.xlu0 %v5237
      %v5281 = vpop.xlane.xlu0 %5280
      %5282 = vadd.xlane.f32.xlu0 %v5238
      %v5283 = vpop.xlane.xlu0 %5282
      %5284 = vadd.xlane.f32.xlu0 %v5239
      %v5285 = vpop.xlane.xlu0 %5284
      %5286 = vadd.xlane.f32.xlu0 %v5240
      %v5287 = vpop.xlane.xlu0 %5286
      %5288 = vadd.xlane.f32.xlu0 %v5241
      %v5289 = vpop.xlane.xlu0 %5288
      %5290 = vadd.xlane.f32.xlu0 %v5242
      %v5291 = vpop.xlane.xlu0 %5290
      %5292 = vadd.xlane.f32.xlu0 %v5243
      %v5293 = vpop.xlane.xlu0 %5292
      %5294 = vadd.xlane.f32.xlu0 %v5244
      %v5295 = vpop.xlane.xlu0 %5294
      %5296 = vadd.xlane.f32.xlu0 %v5245
      %v5297 = vpop.xlane.xlu0 %5296
      %5298 = vadd.xlane.f32.xlu0 %v5246
      %v5299 = vpop.xlane.xlu0 %5298
      %5300 = vadd.xlane.f32.xlu0 %v5247
      %v5301 = vpop.xlane.xlu0 %5300
      %5302 = vadd.xlane.f32.xlu0 %v5248
      %v5303 = vpop.xlane.xlu0 %5302
      %5304 = vadd.xlane.f32.xlu0 %v5249
      %v5305 = vpop.xlane.xlu0 %5304
      %5306 = vadd.xlane.f32.xlu0 %v5250
      %v5307 = vpop.xlane.xlu0 %5306
      %5308 = vadd.xlane.f32.xlu0 %v5251
      %v5309 = vpop.xlane.xlu0 %5308
      %5310 = vadd.xlane.f32.xlu0 %v5252
      %v5311 = vpop.xlane.xlu0 %5310
      %5312 = vadd.xlane.f32.xlu0 %v5253
      %v5313 = vpop.xlane.xlu0 %5312
      %5314 = vadd.xlane.f32.xlu0 %v5254
      %v5315 = vpop.xlane.xlu0 %5314
      %5316 = vadd.xlane.f32.xlu0 %v5255
      %v5317 = vpop.xlane.xlu0 %5316
      %5318 = vadd.xlane.f32.xlu0 %v5256
      %v5319 = vpop.xlane.xlu0 %5318
      %5320 = vadd.xlane.f32.xlu0 %v5257
      %v5321 = vpop.xlane.xlu0 %5320
      %v5322 = vmul.f32 %v5259, 0.03125
      %v5323 = vmul.f32 %v5261, 0.03125
      %v5324 = vmul.f32 %v5263, 0.03125
      %v5325 = vmul.f32 %v5265, 0.03125
      %v5326 = vmul.f32 %v5267, 0.03125
      %v5327 = vmul.f32 %v5269, 0.03125
      %v5328 = vmul.f32 %v5271, 0.03125
      %v5329 = vmul.f32 %v5273, 0.03125
      %v5330 = vmul.f32 %v5275, 0.03125
      %v5331 = vmul.f32 %v5277, 0.03125
      %v5332 = vmul.f32 %v5279, 0.03125
      %v5333 = vmul.f32 %v5281, 0.03125
      %v5334 = vmul.f32 %v5283, 0.03125
      %v5335 = vmul.f32 %v5285, 0.03125
      %v5336 = vmul.f32 %v5287, 0.03125
      %v5337 = vmul.f32 %v5289, 0.03125
      %v5338 = vmul.f32 %v5291, 0.03125
      %v5339 = vmul.f32 %v5293, 0.03125
      %v5340 = vmul.f32 %v5295, 0.03125
      %v5341 = vmul.f32 %v5297, 0.03125
      %v5342 = vmul.f32 %v5299, 0.03125
      %v5343 = vmul.f32 %v5301, 0.03125
      %v5344 = vmul.f32 %v5303, 0.03125
      %v5345 = vmul.f32 %v5305, 0.03125
      %v5346 = vmul.f32 %v5307, 0.03125
      %v5347 = vmul.f32 %v5309, 0.03125
      %v5348 = vmul.f32 %v5311, 0.03125
      %v5349 = vmul.f32 %v5313, 0.03125
      %v5350 = vmul.f32 %v5315, 0.03125
      %v5351 = vmul.f32 %v5317, 0.03125
      %v5352 = vmul.f32 %v5319, 0.03125
      %v5353 = vmul.f32 %v5321, 0.03125
      %v5354 = vadd.f32 %v5322, 1e-05
      %v5355 = vadd.f32 %v5323, 1e-05
      %v5356 = vadd.f32 %v5324, 1e-05
      %v5357 = vadd.f32 %v5325, 1e-05
      %v5358 = vadd.f32 %v5326, 1e-05
      %v5359 = vadd.f32 %v5327, 1e-05
      %v5360 = vadd.f32 %v5328, 1e-05
      %v5361 = vadd.f32 %v5329, 1e-05
      %v5362 = vadd.f32 %v5330, 1e-05
      %v5363 = vadd.f32 %v5331, 1e-05
      %v5364 = vadd.f32 %v5332, 1e-05
      %v5365 = vadd.f32 %v5333, 1e-05
      %v5366 = vadd.f32 %v5334, 1e-05
      %v5367 = vadd.f32 %v5335, 1e-05
      %v5368 = vadd.f32 %v5336, 1e-05
      %v5369 = vadd.f32 %v5337, 1e-05
      %v5370 = vadd.f32 %v5338, 1e-05
      %v5371 = vadd.f32 %v5339, 1e-05
      %v5372 = vadd.f32 %v5340, 1e-05
      %v5373 = vadd.f32 %v5341, 1e-05
      %v5374 = vadd.f32 %v5342, 1e-05
      %v5375 = vadd.f32 %v5343, 1e-05
      %v5376 = vadd.f32 %v5344, 1e-05
      %v5377 = vadd.f32 %v5345, 1e-05
      %v5378 = vadd.f32 %v5346, 1e-05
      %v5379 = vadd.f32 %v5347, 1e-05
      %v5380 = vadd.f32 %v5348, 1e-05
      %v5381 = vadd.f32 %v5349, 1e-05
      %v5382 = vadd.f32 %v5350, 1e-05
      %v5383 = vadd.f32 %v5351, 1e-05
      %v5384 = vadd.f32 %v5352, 1e-05
      %v5385 = vadd.f32 %v5353, 1e-05
      %v5386 = vrsqrt.pop %v5354
      %v5387 = vmul.f32 %v5386, %v5354
      %v5388 = vmul.f32 %v5387, %v5386
      %v5389 = vmul.f32 0.5, %v5388
      %v5390 = vsub.f32 1.5, %v5389
      %v5391 = vmul.f32 %v5386, %v5390
      %vm5392 = vweird.f32 %v5354
      %vm5393 = vweird.f32 %v5386
      %vm5394 = vmor %vm5392, %vm5393
      %v5395 = vsel %vm5394, %v5386, %v5391
      %v5396 = vrsqrt.pop %v5355
      %v5397 = vmul.f32 %v5396, %v5355
      %v5398 = vmul.f32 %v5397, %v5396
      %v5399 = vmul.f32 0.5, %v5398
      %v5400 = vsub.f32 1.5, %v5399
      %v5401 = vmul.f32 %v5396, %v5400
      %vm5402 = vweird.f32 %v5355
      %vm5403 = vweird.f32 %v5396
      %vm5404 = vmor %vm5402, %vm5403
      %v5405 = vsel %vm5404, %v5396, %v5401
      %v5406 = vrsqrt.pop %v5356
      %v5407 = vmul.f32 %v5406, %v5356
      %v5408 = vmul.f32 %v5407, %v5406
      %v5409 = vmul.f32 0.5, %v5408
      %v5410 = vsub.f32 1.5, %v5409
      %v5411 = vmul.f32 %v5406, %v5410
      %vm5412 = vweird.f32 %v5356
      %vm5413 = vweird.f32 %v5406
      %vm5414 = vmor %vm5412, %vm5413
      %v5415 = vsel %vm5414, %v5406, %v5411
      %v5416 = vrsqrt.pop %v5357
      %v5417 = vmul.f32 %v5416, %v5357
      %v5418 = vmul.f32 %v5417, %v5416
      %v5419 = vmul.f32 0.5, %v5418
      %v5420 = vsub.f32 1.5, %v5419
      %v5421 = vmul.f32 %v5416, %v5420
      %vm5422 = vweird.f32 %v5357
      %vm5423 = vweird.f32 %v5416
      %vm5424 = vmor %vm5422, %vm5423
      %v5425 = vsel %vm5424, %v5416, %v5421
      %v5426 = vrsqrt.pop %v5358
      %v5427 = vmul.f32 %v5426, %v5358
      %v5428 = vmul.f32 %v5427, %v5426
      %v5429 = vmul.f32 0.5, %v5428
      %v5430 = vsub.f32 1.5, %v5429
      %v5431 = vmul.f32 %v5426, %v5430
      %vm5432 = vweird.f32 %v5358
      %vm5433 = vweird.f32 %v5426
      %vm5434 = vmor %vm5432, %vm5433
      %v5435 = vsel %vm5434, %v5426, %v5431
      %v5436 = vrsqrt.pop %v5359
      %v5437 = vmul.f32 %v5436, %v5359
      %v5438 = vmul.f32 %v5437, %v5436
      %v5439 = vmul.f32 0.5, %v5438
      %v5440 = vsub.f32 1.5, %v5439
      %v5441 = vmul.f32 %v5436, %v5440
      %vm5442 = vweird.f32 %v5359
      %vm5443 = vweird.f32 %v5436
      %vm5444 = vmor %vm5442, %vm5443
      %v5445 = vsel %vm5444, %v5436, %v5441
      %v5446 = vrsqrt.pop %v5360
      %v5447 = vmul.f32 %v5446, %v5360
      %v5448 = vmul.f32 %v5447, %v5446
      %v5449 = vmul.f32 0.5, %v5448
      %v5450 = vsub.f32 1.5, %v5449
      %v5451 = vmul.f32 %v5446, %v5450
      %vm5452 = vweird.f32 %v5360
      %vm5453 = vweird.f32 %v5446
      %vm5454 = vmor %vm5452, %vm5453
      %v5455 = vsel %vm5454, %v5446, %v5451
      %v5456 = vrsqrt.pop %v5361
      %v5457 = vmul.f32 %v5456, %v5361
      %v5458 = vmul.f32 %v5457, %v5456
      %v5459 = vmul.f32 0.5, %v5458
      %v5460 = vsub.f32 1.5, %v5459
      %v5461 = vmul.f32 %v5456, %v5460
      %vm5462 = vweird.f32 %v5361
      %vm5463 = vweird.f32 %v5456
      %vm5464 = vmor %vm5462, %vm5463
      %v5465 = vsel %vm5464, %v5456, %v5461
      %v5466 = vrsqrt.pop %v5362
      %v5467 = vmul.f32 %v5466, %v5362
      %v5468 = vmul.f32 %v5467, %v5466
      %v5469 = vmul.f32 0.5, %v5468
      %v5470 = vsub.f32 1.5, %v5469
      %v5471 = vmul.f32 %v5466, %v5470
      %vm5472 = vweird.f32 %v5362
      %vm5473 = vweird.f32 %v5466
      %vm5474 = vmor %vm5472, %vm5473
      %v5475 = vsel %vm5474, %v5466, %v5471
      %v5476 = vrsqrt.pop %v5363
      %v5477 = vmul.f32 %v5476, %v5363
      %v5478 = vmul.f32 %v5477, %v5476
      %v5479 = vmul.f32 0.5, %v5478
      %v5480 = vsub.f32 1.5, %v5479
      %v5481 = vmul.f32 %v5476, %v5480
      %vm5482 = vweird.f32 %v5363
      %vm5483 = vweird.f32 %v5476
      %vm5484 = vmor %vm5482, %vm5483
      %v5485 = vsel %vm5484, %v5476, %v5481
      %v5486 = vrsqrt.pop %v5364
      %v5487 = vmul.f32 %v5486, %v5364
      %v5488 = vmul.f32 %v5487, %v5486
      %v5489 = vmul.f32 0.5, %v5488
      %v5490 = vsub.f32 1.5, %v5489
      %v5491 = vmul.f32 %v5486, %v5490
      %vm5492 = vweird.f32 %v5364
      %vm5493 = vweird.f32 %v5486
      %vm5494 = vmor %vm5492, %vm5493
      %v5495 = vsel %vm5494, %v5486, %v5491
      %v5496 = vrsqrt.pop %v5365
      %v5497 = vmul.f32 %v5496, %v5365
      %v5498 = vmul.f32 %v5497, %v5496
      %v5499 = vmul.f32 0.5, %v5498
      %v5500 = vsub.f32 1.5, %v5499
      %v5501 = vmul.f32 %v5496, %v5500
      %vm5502 = vweird.f32 %v5365
      %vm5503 = vweird.f32 %v5496
      %vm5504 = vmor %vm5502, %vm5503
      %v5505 = vsel %vm5504, %v5496, %v5501
      %v5506 = vrsqrt.pop %v5366
      %v5507 = vmul.f32 %v5506, %v5366
      %v5508 = vmul.f32 %v5507, %v5506
      %v5509 = vmul.f32 0.5, %v5508
      %v5510 = vsub.f32 1.5, %v5509
      %v5511 = vmul.f32 %v5506, %v5510
      %vm5512 = vweird.f32 %v5366
      %vm5513 = vweird.f32 %v5506
      %vm5514 = vmor %vm5512, %vm5513
      %v5515 = vsel %vm5514, %v5506, %v5511
      %v5516 = vrsqrt.pop %v5367
      %v5517 = vmul.f32 %v5516, %v5367
      %v5518 = vmul.f32 %v5517, %v5516
      %v5519 = vmul.f32 0.5, %v5518
      %v5520 = vsub.f32 1.5, %v5519
      %v5521 = vmul.f32 %v5516, %v5520
      %vm5522 = vweird.f32 %v5367
      %vm5523 = vweird.f32 %v5516
      %vm5524 = vmor %vm5522, %vm5523
      %v5525 = vsel %vm5524, %v5516, %v5521
      %v5526 = vrsqrt.pop %v5368
      %v5527 = vmul.f32 %v5526, %v5368
      %v5528 = vmul.f32 %v5527, %v5526
      %v5529 = vmul.f32 0.5, %v5528
      %v5530 = vsub.f32 1.5, %v5529
      %v5531 = vmul.f32 %v5526, %v5530
      %vm5532 = vweird.f32 %v5368
      %vm5533 = vweird.f32 %v5526
      %vm5534 = vmor %vm5532, %vm5533
      %v5535 = vsel %vm5534, %v5526, %v5531
      %v5536 = vrsqrt.pop %v5369
      %v5537 = vmul.f32 %v5536, %v5369
      %v5538 = vmul.f32 %v5537, %v5536
      %v5539 = vmul.f32 0.5, %v5538
      %v5540 = vsub.f32 1.5, %v5539
      %v5541 = vmul.f32 %v5536, %v5540
      %vm5542 = vweird.f32 %v5369
      %vm5543 = vweird.f32 %v5536
      %vm5544 = vmor %vm5542, %vm5543
      %v5545 = vsel %vm5544, %v5536, %v5541
      %v5546 = vrsqrt.pop %v5370
      %v5547 = vmul.f32 %v5546, %v5370
      %v5548 = vmul.f32 %v5547, %v5546
      %v5549 = vmul.f32 0.5, %v5548
      %v5550 = vsub.f32 1.5, %v5549
      %v5551 = vmul.f32 %v5546, %v5550
      %vm5552 = vweird.f32 %v5370
      %vm5553 = vweird.f32 %v5546
      %vm5554 = vmor %vm5552, %vm5553
      %v5555 = vsel %vm5554, %v5546, %v5551
      %v5556 = vrsqrt.pop %v5371
      %v5557 = vmul.f32 %v5556, %v5371
      %v5558 = vmul.f32 %v5557, %v5556
      %v5559 = vmul.f32 0.5, %v5558
      %v5560 = vsub.f32 1.5, %v5559
      %v5561 = vmul.f32 %v5556, %v5560
      %vm5562 = vweird.f32 %v5371
      %vm5563 = vweird.f32 %v5556
      %vm5564 = vmor %vm5562, %vm5563
      %v5565 = vsel %vm5564, %v5556, %v5561
      %v5566 = vrsqrt.pop %v5372
      %v5567 = vmul.f32 %v5566, %v5372
      %v5568 = vmul.f32 %v5567, %v5566
      %v5569 = vmul.f32 0.5, %v5568
      %v5570 = vsub.f32 1.5, %v5569
      %v5571 = vmul.f32 %v5566, %v5570
      %vm5572 = vweird.f32 %v5372
      %vm5573 = vweird.f32 %v5566
      %vm5574 = vmor %vm5572, %vm5573
      %v5575 = vsel %vm5574, %v5566, %v5571
      %v5576 = vrsqrt.pop %v5373
      %v5577 = vmul.f32 %v5576, %v5373
      %v5578 = vmul.f32 %v5577, %v5576
      %v5579 = vmul.f32 0.5, %v5578
      %v5580 = vsub.f32 1.5, %v5579
      %v5581 = vmul.f32 %v5576, %v5580
      %vm5582 = vweird.f32 %v5373
      %vm5583 = vweird.f32 %v5576
      %vm5584 = vmor %vm5582, %vm5583
      %v5585 = vsel %vm5584, %v5576, %v5581
      %v5586 = vrsqrt.pop %v5374
      %v5587 = vmul.f32 %v5586, %v5374
      %v5588 = vmul.f32 %v5587, %v5586
      %v5589 = vmul.f32 0.5, %v5588
      %v5590 = vsub.f32 1.5, %v5589
      %v5591 = vmul.f32 %v5586, %v5590
      %vm5592 = vweird.f32 %v5374
      %vm5593 = vweird.f32 %v5586
      %vm5594 = vmor %vm5592, %vm5593
      %v5595 = vsel %vm5594, %v5586, %v5591
      %v5596 = vrsqrt.pop %v5375
      %v5597 = vmul.f32 %v5596, %v5375
      %v5598 = vmul.f32 %v5597, %v5596
      %v5599 = vmul.f32 0.5, %v5598
      %v5600 = vsub.f32 1.5, %v5599
      %v5601 = vmul.f32 %v5596, %v5600
      %vm5602 = vweird.f32 %v5375
      %vm5603 = vweird.f32 %v5596
      %vm5604 = vmor %vm5602, %vm5603
      %v5605 = vsel %vm5604, %v5596, %v5601
      %v5606 = vrsqrt.pop %v5376
      %v5607 = vmul.f32 %v5606, %v5376
      %v5608 = vmul.f32 %v5607, %v5606
      %v5609 = vmul.f32 0.5, %v5608
      %v5610 = vsub.f32 1.5, %v5609
      %v5611 = vmul.f32 %v5606, %v5610
      %vm5612 = vweird.f32 %v5376
      %vm5613 = vweird.f32 %v5606
      %vm5614 = vmor %vm5612, %vm5613
      %v5615 = vsel %vm5614, %v5606, %v5611
      %v5616 = vrsqrt.pop %v5377
      %v5617 = vmul.f32 %v5616, %v5377
      %v5618 = vmul.f32 %v5617, %v5616
      %v5619 = vmul.f32 0.5, %v5618
      %v5620 = vsub.f32 1.5, %v5619
      %v5621 = vmul.f32 %v5616, %v5620
      %vm5622 = vweird.f32 %v5377
      %vm5623 = vweird.f32 %v5616
      %vm5624 = vmor %vm5622, %vm5623
      %v5625 = vsel %vm5624, %v5616, %v5621
      %v5626 = vrsqrt.pop %v5378
      %v5627 = vmul.f32 %v5626, %v5378
      %v5628 = vmul.f32 %v5627, %v5626
      %v5629 = vmul.f32 0.5, %v5628
      %v5630 = vsub.f32 1.5, %v5629
      %v5631 = vmul.f32 %v5626, %v5630
      %vm5632 = vweird.f32 %v5378
      %vm5633 = vweird.f32 %v5626
      %vm5634 = vmor %vm5632, %vm5633
      %v5635 = vsel %vm5634, %v5626, %v5631
      %v5636 = vrsqrt.pop %v5379
      %v5637 = vmul.f32 %v5636, %v5379
      %v5638 = vmul.f32 %v5637, %v5636
      %v5639 = vmul.f32 0.5, %v5638
      %v5640 = vsub.f32 1.5, %v5639
      %v5641 = vmul.f32 %v5636, %v5640
      %vm5642 = vweird.f32 %v5379
      %vm5643 = vweird.f32 %v5636
      %vm5644 = vmor %vm5642, %vm5643
      %v5645 = vsel %vm5644, %v5636, %v5641
      %v5646 = vrsqrt.pop %v5380
      %v5647 = vmul.f32 %v5646, %v5380
      %v5648 = vmul.f32 %v5647, %v5646
      %v5649 = vmul.f32 0.5, %v5648
      %v5650 = vsub.f32 1.5, %v5649
      %v5651 = vmul.f32 %v5646, %v5650
      %vm5652 = vweird.f32 %v5380
      %vm5653 = vweird.f32 %v5646
      %vm5654 = vmor %vm5652, %vm5653
      %v5655 = vsel %vm5654, %v5646, %v5651
      %v5656 = vrsqrt.pop %v5381
      %v5657 = vmul.f32 %v5656, %v5381
      %v5658 = vmul.f32 %v5657, %v5656
      %v5659 = vmul.f32 0.5, %v5658
      %v5660 = vsub.f32 1.5, %v5659
      %v5661 = vmul.f32 %v5656, %v5660
      %vm5662 = vweird.f32 %v5381
      %vm5663 = vweird.f32 %v5656
      %vm5664 = vmor %vm5662, %vm5663
      %v5665 = vsel %vm5664, %v5656, %v5661
      %v5666 = vrsqrt.pop %v5382
      %v5667 = vmul.f32 %v5666, %v5382
      %v5668 = vmul.f32 %v5667, %v5666
      %v5669 = vmul.f32 0.5, %v5668
      %v5670 = vsub.f32 1.5, %v5669
      %v5671 = vmul.f32 %v5666, %v5670
      %vm5672 = vweird.f32 %v5382
      %vm5673 = vweird.f32 %v5666
      %vm5674 = vmor %vm5672, %vm5673
      %v5675 = vsel %vm5674, %v5666, %v5671
      %v5676 = vrsqrt.pop %v5383
      %v5677 = vmul.f32 %v5676, %v5383
      %v5678 = vmul.f32 %v5677, %v5676
      %v5679 = vmul.f32 0.5, %v5678
      %v5680 = vsub.f32 1.5, %v5679
      %v5681 = vmul.f32 %v5676, %v5680
      %vm5682 = vweird.f32 %v5383
      %vm5683 = vweird.f32 %v5676
      %vm5684 = vmor %vm5682, %vm5683
      %v5685 = vsel %vm5684, %v5676, %v5681
      %v5686 = vrsqrt.pop %v5384
      %v5687 = vmul.f32 %v5686, %v5384
      %v5688 = vmul.f32 %v5687, %v5686
      %v5689 = vmul.f32 0.5, %v5688
      %v5690 = vsub.f32 1.5, %v5689
      %v5691 = vmul.f32 %v5686, %v5690
      %vm5692 = vweird.f32 %v5384
      %vm5693 = vweird.f32 %v5686
      %vm5694 = vmor %vm5692, %vm5693
      %v5695 = vsel %vm5694, %v5686, %v5691
      %v5696 = vrsqrt.pop %v5385
      %v5697 = vmul.f32 %v5696, %v5385
      %v5698 = vmul.f32 %v5697, %v5696
      %v5699 = vmul.f32 0.5, %v5698
      %v5700 = vsub.f32 1.5, %v5699
      %v5701 = vmul.f32 %v5696, %v5700
      %vm5702 = vweird.f32 %v5385
      %vm5703 = vweird.f32 %v5696
      %vm5704 = vmor %vm5702, %vm5703
      %v5705 = vsel %vm5704, %v5696, %v5701
      %v5706 = vmul.f32 %v5194, %v5395
      %v5707 = vmul.f32 %v5195, %v5405
      %v5708 = vmul.f32 %v5196, %v5415
      %v5709 = vmul.f32 %v5197, %v5425
      %v5710 = vmul.f32 %v5198, %v5435
      %v5711 = vmul.f32 %v5199, %v5445
      %v5712 = vmul.f32 %v5200, %v5455
      %v5713 = vmul.f32 %v5201, %v5465
      %v5714 = vmul.f32 %v5202, %v5475
      %v5715 = vmul.f32 %v5203, %v5485
      %v5716 = vmul.f32 %v5204, %v5495
      %v5717 = vmul.f32 %v5205, %v5505
      %v5718 = vmul.f32 %v5206, %v5515
      %v5719 = vmul.f32 %v5207, %v5525
      %v5720 = vmul.f32 %v5208, %v5535
      %v5721 = vmul.f32 %v5209, %v5545
      %v5722 = vmul.f32 %v5210, %v5555
      %v5723 = vmul.f32 %v5211, %v5565
      %v5724 = vmul.f32 %v5212, %v5575
      %v5725 = vmul.f32 %v5213, %v5585
      %v5726 = vmul.f32 %v5214, %v5595
      %v5727 = vmul.f32 %v5215, %v5605
      %v5728 = vmul.f32 %v5216, %v5615
      %v5729 = vmul.f32 %v5217, %v5625
      %v5730 = vmul.f32 %v5218, %v5635
      %v5731 = vmul.f32 %v5219, %v5645
      %v5732 = vmul.f32 %v5220, %v5655
      %v5733 = vmul.f32 %v5221, %v5665
      %v5734 = vmul.f32 %v5222, %v5675
      %v5735 = vmul.f32 %v5223, %v5685
      %v5736 = vmul.f32 %v5224, %v5695
      %v5737 = vmul.f32 %v5225, %v5705
      %v5739 = vperm.slane %v5032, 0
      %v5741 = vmul.f32 %v5706, %v5739
      %v5742 = vmul.f32 %v5707, %v5739
      %v5743 = vmul.f32 %v5708, %v5739
      %v5744 = vmul.f32 %v5709, %v5739
      %v5745 = vmul.f32 %v5710, %v5739
      %v5746 = vmul.f32 %v5711, %v5739
      %v5747 = vmul.f32 %v5712, %v5739
      %v5748 = vmul.f32 %v5713, %v5739
      %v5749 = vmul.f32 %v5714, %v5739
      %v5750 = vmul.f32 %v5715, %v5739
      %v5751 = vmul.f32 %v5716, %v5739
      %v5752 = vmul.f32 %v5717, %v5739
      %v5753 = vmul.f32 %v5718, %v5739
      %v5754 = vmul.f32 %v5719, %v5739
      %v5755 = vmul.f32 %v5720, %v5739
      %v5756 = vmul.f32 %v5721, %v5739
      %v5757 = vmul.f32 %v5722, %v5739
      %v5758 = vmul.f32 %v5723, %v5739
      %v5759 = vmul.f32 %v5724, %v5739
      %v5760 = vmul.f32 %v5725, %v5739
      %v5761 = vmul.f32 %v5726, %v5739
      %v5762 = vmul.f32 %v5727, %v5739
      %v5763 = vmul.f32 %v5728, %v5739
      %v5764 = vmul.f32 %v5729, %v5739
      %v5765 = vmul.f32 %v5730, %v5739
      %v5766 = vmul.f32 %v5731, %v5739
      %v5767 = vmul.f32 %v5732, %v5739
      %v5768 = vmul.f32 %v5733, %v5739
      %v5769 = vmul.f32 %v5734, %v5739
      %v5770 = vmul.f32 %v5735, %v5739
      %v5771 = vmul.f32 %v5736, %v5739
      %v5772 = vmul.f32 %v5737, %v5739
      %v5774 = vperm.slane %v5033, 0
      %v5776 = vadd.f32 %v5741, %v5774
      %v5777 = vadd.f32 %v5742, %v5774
      %v5778 = vadd.f32 %v5743, %v5774
      %v5779 = vadd.f32 %v5744, %v5774
      %v5780 = vadd.f32 %v5745, %v5774
      %v5781 = vadd.f32 %v5746, %v5774
      %v5782 = vadd.f32 %v5747, %v5774
      %v5783 = vadd.f32 %v5748, %v5774
      %v5784 = vadd.f32 %v5749, %v5774
      %v5785 = vadd.f32 %v5750, %v5774
      %v5786 = vadd.f32 %v5751, %v5774
      %v5787 = vadd.f32 %v5752, %v5774
      %v5788 = vadd.f32 %v5753, %v5774
      %v5789 = vadd.f32 %v5754, %v5774
      %v5790 = vadd.f32 %v5755, %v5774
      %v5791 = vadd.f32 %v5756, %v5774
      %v5792 = vadd.f32 %v5757, %v5774
      %v5793 = vadd.f32 %v5758, %v5774
      %v5794 = vadd.f32 %v5759, %v5774
      %v5795 = vadd.f32 %v5760, %v5774
      %v5796 = vadd.f32 %v5761, %v5774
      %v5797 = vadd.f32 %v5762, %v5774
      %v5798 = vadd.f32 %v5763, %v5774
      %v5799 = vadd.f32 %v5764, %v5774
      %v5800 = vadd.f32 %v5765, %v5774
      %v5801 = vadd.f32 %v5766, %v5774
      %v5802 = vadd.f32 %v5767, %v5774
      %v5803 = vadd.f32 %v5768, %v5774
      %v5804 = vadd.f32 %v5769, %v5774
      %v5805 = vadd.f32 %v5770, %v5774
      %v5806 = vadd.f32 %v5771, %v5774
      %v5807 = vadd.f32 %v5772, %v5774
      %v5808 = vadd.f32 %v178, %v5776
      %v5809 = vadd.f32 %v179, %v5777
      %v5810 = vadd.f32 %v180, %v5778
      %v5811 = vadd.f32 %v181, %v5779
      %v5812 = vadd.f32 %v182, %v5780
      %v5813 = vadd.f32 %v183, %v5781
      %v5814 = vadd.f32 %v184, %v5782
      %v5815 = vadd.f32 %v185, %v5783
      %v5816 = vadd.f32 %v186, %v5784
      %v5817 = vadd.f32 %v187, %v5785
      %v5818 = vadd.f32 %v188, %v5786
      %v5819 = vadd.f32 %v189, %v5787
      %v5820 = vadd.f32 %v190, %v5788
      %v5821 = vadd.f32 %v191, %v5789
      %v5822 = vadd.f32 %v192, %v5790
      %v5823 = vadd.f32 %v193, %v5791
      %v5824 = vadd.f32 %v194, %v5792
      %v5825 = vadd.f32 %v195, %v5793
      %v5826 = vadd.f32 %v196, %v5794
      %v5827 = vadd.f32 %v197, %v5795
      %v5828 = vadd.f32 %v198, %v5796
      %v5829 = vadd.f32 %v199, %v5797
      %v5830 = vadd.f32 %v200, %v5798
      %v5831 = vadd.f32 %v201, %v5799
      %v5832 = vadd.f32 %v202, %v5800
      %v5833 = vadd.f32 %v203, %v5801
      %v5834 = vadd.f32 %v204, %v5802
      %v5835 = vadd.f32 %v205, %v5803
      %v5836 = vadd.f32 %v206, %v5804
      %v5837 = vadd.f32 %v207, %v5805
      %v5838 = vadd.f32 %v208, %v5806
      %v5839 = vadd.f32 %v209, %v5807
      %5840 = vst [vmem:[#allocation16] sm:$0xff] %v5808
      %5841 = vst [vmem:[#allocation16 + $0x8] sm:$0xff] %v5809
      %5842 = vst [vmem:[#allocation16 + $0x10] sm:$0xff] %v5810
      %5843 = vst [vmem:[#allocation16 + $0x18] sm:$0xff] %v5811
      %5844 = vst [vmem:[#allocation16 + $0x20] sm:$0xff] %v5812
      %5845 = vst [vmem:[#allocation16 + $0x28] sm:$0xff] %v5813
      %5846 = vst [vmem:[#allocation16 + $0x30] sm:$0xff] %v5814
      %5847 = vst [vmem:[#allocation16 + $0x38] sm:$0xff] %v5815
      %5848 = vst [vmem:[#allocation16 + $0x40] sm:$0xff] %v5816
      %5849 = vst [vmem:[#allocation16 + $0x48] sm:$0xff] %v5817
      %5850 = vst [vmem:[#allocation16 + $0x50] sm:$0xff] %v5818
      %5851 = vst [vmem:[#allocation16 + $0x58] sm:$0xff] %v5819
      %5852 = vst [vmem:[#allocation16 + $0x60] sm:$0xff] %v5820
      %5853 = vst [vmem:[#allocation16 + $0x68] sm:$0xff] %v5821
      %5854 = vst [vmem:[#allocation16 + $0x70] sm:$0xff] %v5822
      %5855 = vst [vmem:[#allocation16 + $0x78] sm:$0xff] %v5823
      %5856 = vst [vmem:[#allocation16 + $0x80] sm:$0xff] %v5824
      %5857 = vst [vmem:[#allocation16 + $0x88] sm:$0xff] %v5825
      %5858 = vst [vmem:[#allocation16 + $0x90] sm:$0xff] %v5826
      %5859 = vst [vmem:[#allocation16 + $0x98] sm:$0xff] %v5827
      %5860 = vst [vmem:[#allocation16 + $0xa0] sm:$0xff] %v5828
      %5861 = vst [vmem:[#allocation16 + $0xa8] sm:$0xff] %v5829
      %5862 = vst [vmem:[#allocation16 + $0xb0] sm:$0xff] %v5830
      %5863 = vst [vmem:[#allocation16 + $0xb8] sm:$0xff] %v5831
      %5864 = vst [vmem:[#allocation16 + $0xc0] sm:$0xff] %v5832
      %5865 = vst [vmem:[#allocation16 + $0xc8] sm:$0xff] %v5833
      %5866 = vst [vmem:[#allocation16 + $0xd0] sm:$0xff] %v5834
      %5867 = vst [vmem:[#allocation16 + $0xd8] sm:$0xff] %v5835
      %5868 = vst [vmem:[#allocation16 + $0xe0] sm:$0xff] %v5836
      %5869 = vst [vmem:[#allocation16 + $0xe8] sm:$0xff] %v5837
      %5870 = vst [vmem:[#allocation16 + $0xf0] sm:$0xff] %v5838
      %5871 = vst [vmem:[#allocation16 + $0xf8] sm:$0xff] %v5839
    $region101: #{tpu_custom_call.1} parent=1 // pred_fallthru
      _
    // Predicated region
    $region102: #{tpu_custom_call.1} parent=1 // pred_check
      _
    $region103: #{tpu_custom_call.1} parent=1 // pred_check_branch
      %5873 = sbr.rel (0) target = $region105
    $region104: #{tpu_custom_call.1} parent=1 // pred_region
      %s5874 = sld [smem:[#allocation5]]
      %s5875 = smul.u32 32, %s5874
      %5877 = vsyncadd [#allocation10], 0
      %s5878 = smul.addr %s5875, 8
      %s5879 = scalar_lea.hbm %s22, %s5878
      %s5880 = sshll.u32 [#allocation16], 4
      %s5881 = int_to_ptr.vmem [resolvable:$true] %s5880
      %s5882 = sshll.u32 %s5879, 4
      %s5883 = int_to_ptr.hbm [resolvable:$true] %s5882
      %5888 = dma.vmem_to_hbm [thread:$0]  %s5881, 4096, %s5883, [#allocation10], 128, 128, 8
    $region105: #{tpu_custom_call.1} parent=1 // pred_fallthru
      _
    // Predicated region
    $region106: #{tpu_custom_call.1} parent=1 // pred_check
      _
    $region107: #{tpu_custom_call.1} parent=1 // pred_check_branch
      %5890 = sbr.rel (0) target = $region109
    $region108: #{tpu_custom_call.1} parent=1 // pred_region
      %5892 = dma.done [#allocation10], 4096
    $region109: #{tpu_custom_call.1} parent=1 // pred_fallthru
      _
    %5893 = vsyncpa [#allocation9], 1
    %5894 = vsyncpa [#allocation12], 1
    %5895 = vsyncpa [#allocation15], 1
    %5896 = vsyncpa [#allocation10], 1

</llo_original>
